<compile_context>
chip_gen: v5e
topology: v5e:2x2
jax: 0.10.0
libtpu: 0.0.40
codegen_flags: <defaults>
</compile_context>

<pallas_src>
import numpy as np
import jax
import jax.numpy as jnp
from jax import lax
from jax.experimental import pallas as pl
from jax.experimental.pallas import tpu as pltpu

N = 2                          # batch
H, W = 10, 20                  # input spatial (5 * 10 = 50 = fc1 fan-in)
HP, WP = H + 4, W + 4          # conv2 padding=2 ring baked into the layout
P1 = HP * WP                   # 336 flattened padded pixels (stage 1)
H2, W2 = H // 2, W // 2        # 5, 10 after the 2x2 stride-2 max-pool
HP3, WP3 = H2 + 2, W2 + 2      # conv3 padding=1 ring -> 7, 12
P2 = HP3 * WP3                 # 84 flattened padded pixels (stage 2)
FLAT = H2 * W2                 # 50 features into fc1
C = 30                         # conv1 / conv2 channel count
CPAD = 32                      # channels padded to whole sublane tiles
SW1 = 384                      # per-sample lane width, stage 1 (3 lane tiles)
SW2 = 128                      # per-sample lane width, stage 2 (1 lane tile)
FLATPAD = 128                  # lane-dense flatten width (50 real + zeros)
HID = 128                      # lane-dense fc hidden width (100 real + zeros)
OUT = 128                      # lane-dense fc3 output width (10 real + zeros)
TAPS_PER_CHUNK = 8             # 8 taps x 32 ch = K=256 per MXU chunk (use 4 on v5e)

# Static safety checks: the largest tap offset must stay inside the per-sample
# lane window, so a rotated tap never pulls wrapped data at any position that
# is observed downstream (interior positions selected by the 0/1 matrices).
_OFF1 = 2 * WP + 2                             # 50  = max |conv2 tap offset|
_OFF2 = WP3 + 1                                # 13  = max |conv3 tap offset|
_MAXQ1 = (2 + H - 1) * WP + (2 + W - 1)        # 285 = last observed stage-1 pos
_MINQ1 = 2 * WP + 2                            # 50  = first observed stage-1 pos
_MAXQ2 = (1 + H2 - 1) * WP3 + (1 + W2 - 1)     # 70  = last observed stage-2 pos
_MINQ2 = WP3 + 1                               # 13
assert P1 <= SW1 and P2 <= SW2
assert _MAXQ1 + _OFF1 < SW1 and _MINQ1 - _OFF1 >= 0
assert _MAXQ2 + _OFF2 < SW2 and _MINQ2 - _OFF2 >= 0


# ----------------------------------------------------------------------------
# Pallas kernel: full forward pass for ONE sample (grid axis 0 = batch).
# ----------------------------------------------------------------------------
def cnn2l_kernel(x_ref, mask_ref, w1_ref, b1_ref, w2_ref, b2_ref, s23_ref,
                 w3_ref, b3_ref, s3f_ref,
                 wf1_ref, bf1_ref, wf2_ref, bf2_ref, wf3_ref, bf3_ref,
                 out_ref):
    f32 = jnp.float32

    def shifted(a, off):
        # out[:, p] == a[:, (p + off) % L].  Static rotate via two lane slices
        # + concat (portable); wrapped lanes are never observed downstream.
        lanes = a.shape[-1]
        s = off % lanes
        if s == 0:
            return a
        return jnp.concatenate([a[:, s:], a[:, :s]], axis=1)

    def conv_grouped(act, offs, w_ref):
        # Grouped stacked-K conv: TAPS_PER_CHUNK rotated copies of `act` are
        # stacked along sublanes (K = 8*32 = 256 per chunk) and accumulated in
        # f32; the full (n_taps*32, L) patch buffer is never materialised.
        lanes = act.shape[-1]
        acc = jnp.zeros((w_ref.shape[0], lanes), f32)
        for g0 in range(0, len(offs), TAPS_PER_CHUNK):
            chunk = offs[g0:g0 + TAPS_PER_CHUNK]
            if len(chunk) == 1:
                patches = shifted(act, chunk[0])
            else:
                patches = jnp.concatenate([shifted(act, o) for o in chunk],
                                          axis=0)
            wc = w_ref[:, g0 * CPAD:(g0 + len(chunk)) * CPAD]
            acc = acc + jnp.dot(wc, patches, preferred_element_type=f32)
        return acc

    # conv1: 1x1, 1 -> 30 (padded to 32 sublanes), + ReLU.  pool1 (k=1, s=1)
    # is the identity.  The mask re-zeros the pad ring / tail lanes so conv2
    # sees correct zero padding.
    x = x_ref[...]                                                 # (1, SW1)
    y1 = jnp.maximum(w1_ref[...] * x + b1_ref[...], 0.0) * mask_ref[...]

    # conv2: 5x5 "same", 30 -> 30, grouped stacked-K MXU accumulation.
    offs2 = [(dy - 2) * WP + (dx - 2) for dy in range(5) for dx in range(5)]
    y2 = jnp.maximum(conv_grouped(y1, offs2, w2_ref) + b2_ref[...], 0.0)

    # pool2: 2x2 stride-2 max pool.  Two rotate+max passes build the 4-tap
    # window max; a per-sample 0/1 selection matmul keeps the stride-2
    # positions and re-embeds them into the zero-padded stage-2 grid.
    t = jnp.maximum(y2, shifted(y2, 1))
    m = jnp.maximum(t, shifted(t, WP))
    p2 = jnp.dot(m, s23_ref[...], preferred_element_type=f32)      # (32, SW2)

    # conv3: 3x3 "same", 30 -> 1, grouped stacked-K MXU accumulation.
    offs3 = [(dy - 1) * WP3 + (dx - 1) for dy in range(3) for dx in range(3)]
    y3 = jnp.maximum(conv_grouped(p2, offs3, w3_ref) + b3_ref[...], 0.0)

    # flatten == X.view(-1, 50): 0/1 selection matmul into a lane-dense row
    # (features 50..127 are zero).
    flat = jnp.dot(y3, s3f_ref[...], preferred_element_type=f32)   # (1, 128)

    # MLP head (lane-dense, zero-padded to 128 columns everywhere).
    h1 = jnp.maximum(
        jnp.dot(flat, wf1_ref[...], preferred_element_type=f32) + bf1_ref[...],
        0.0)
    h2 = jnp.dot(h1, wf2_ref[...], preferred_element_type=f32) + bf2_ref[...]
    out_ref[...] = (jnp.dot(h2, wf3_ref[...], preferred_element_type=f32)
                    + bf3_ref[...])                                # (1, 128)


# ----------------------------------------------------------------------------
# Host-side glue: layout conversion, per-sample constants, pallas_call.
# ----------------------------------------------------------------------------
def _build_constants():
    f32 = np.float32
    mask = np.zeros((1, SW1), f32)        # interior HxW positions of stage 1
    s23 = np.zeros((SW1, SW2), f32)       # stride-2 select + re-embed
    s3f = np.zeros((SW2, FLATPAD), f32)   # stage-2 interior -> flat index
    for h in range(H):
        for w in range(W):
            mask[0, (2 + h) * WP + (2 + w)] = 1.0
    for hh in range(H2):
        for ww in range(W2):
            pin = (2 + 2 * hh) * WP + (2 + 2 * ww)
            pout = (1 + hh) * WP3 + (1 + ww)
            s23[pin, pout] = 1.0
            s3f[pout, hh * W2 + ww] = 1.0
    return jnp.asarray(mask), jnp.asarray(s23), jnp.asarray(s3f)


def _prep_weights(params):
    f32 = np.float32
    w1 = np.zeros((CPAD, 1), f32)
    w1[:C, 0] = np.asarray(params["conv1_w"], f32).reshape(C)
    b1 = np.zeros((CPAD, 1), f32)
    b1[:C, 0] = np.asarray(params["conv1_b"], f32)

    w2 = np.asarray(params["conv2_w"], f32)                 # (30, 30, 5, 5)
    w2s = np.zeros((CPAD, 25 * CPAD), f32)                  # tap-stacked
    for dy in range(5):
        for dx in range(5):
            t = dy * 5 + dx
            w2s[:C, t * CPAD:t * CPAD + C] = w2[:, :, dy, dx]
    b2 = np.zeros((CPAD, 1), f32)
    b2[:C, 0] = np.asarray(params["conv2_b"], f32)

    w3 = np.asarray(params["conv3_w"], f32)                 # (1, 30, 3, 3)
    w3s = np.zeros((1, 9 * CPAD), f32)
    for dy in range(3):
        for dx in range(3):
            t = dy * 3 + dx
            w3s[0, t * CPAD:t * CPAD + C] = w3[0, :, dy, dx]
    b3 = np.asarray(params["conv3_b"], f32).reshape(1, 1)

    # MLP head, transposed and zero-padded to lane-dense 128-wide blocks so
    # every head matmul / the final store is a full-lane (unmasked) access.
    wf1 = np.zeros((FLATPAD, HID), f32)
    wf1[:FLAT, :100] = np.asarray(params["fc1_w"], f32).T
    bf1 = np.zeros((1, HID), f32)
    bf1[0, :100] = np.asarray(params["fc1_b"], f32)
    wf2 = np.zeros((HID, HID), f32)
    wf2[:100, :100] = np.asarray(params["fc2_w"], f32).T
    bf2 = np.zeros((1, HID), f32)
    bf2[0, :100] = np.asarray(params["fc2_b"], f32)
    wf3 = np.zeros((HID, OUT), f32)
    wf3[:100, :10] = np.asarray(params["fc3_w"], f32).T
    bf3 = np.zeros((1, OUT), f32)
    bf3[0, :10] = np.asarray(params["fc3_b"], f32)
    return tuple(jnp.asarray(a) for a in
                 (w1, b1, w2s, b2, w3s, b3, wf1, bf1, wf2, bf2, wf3, bf3))


def cnn2l_forward(x_nchw, params):
    n = x_nchw.shape[0]
    # Per-sample layout: embed each (1, H, W) sample into its zero-padded
    # HP x WP grid and flatten onto a 128-aligned lane window (SW1 lanes).
    xp = jnp.zeros((n, HP, WP), jnp.float32)
    xp = xp.at[:, 2:2 + H, 2:2 + W].set(x_nchw[:, 0].astype(jnp.float32))
    x_in = jnp.zeros((n, 1, SW1), jnp.float32).at[:, 0, :P1].set(
        xp.reshape(n, P1))

    mask, s23, s3f = _build_constants()
    (w1, b1, w2s, b2, w3s, b3,
     wf1, bf1, wf2, bf2, wf3, bf3) = _prep_weights(params)

    def full(shape):
        # Whole-array block, constant index -> stays resident across the grid.
        return pl.BlockSpec(shape, lambda s: (0,) * len(shape))

    out = pl.pallas_call(
        cnn2l_kernel,
        out_shape=jax.ShapeDtypeStruct((n, 1, OUT), jnp.float32),
        grid_spec=pltpu.PrefetchScalarGridSpec(
            num_scalar_prefetch=0,
            grid=(n,),                                            # one sample / step
            in_specs=[
                pl.BlockSpec((None, 1, SW1), lambda s: (s, 0, 0)),  # x (streamed)
                full((1, SW1)),                                      # mask
                full((CPAD, 1)),                                     # conv1 w
                full((CPAD, 1)),                                     # conv1 b
                full((CPAD, 25 * CPAD)),                             # conv2 w (stacked)
                full((CPAD, 1)),                                     # conv2 b
                full((SW1, SW2)),                                    # pool select
                full((1, 9 * CPAD)),                                 # conv3 w (stacked)
                full((1, 1)),                                        # conv3 b
                full((SW2, FLATPAD)),                                # flatten select
                full((FLATPAD, HID)),                                # fc1 w
                full((1, HID)),                                      # fc1 b
                full((HID, HID)),                                    # fc2 w
                full((1, HID)),                                      # fc2 b
                full((HID, OUT)),                                    # fc3 w
                full((1, OUT)),                                      # fc3 b
            ],
            out_specs=pl.BlockSpec((None, 1, OUT), lambda s: (s, 0, 0)),
        ),
        compiler_params=pltpu.CompilerParams(
            dimension_semantics=("parallel",)),     # megacore-shardable on v7x
    )(x_in, mask, w1, b1, w2s, b2, s23, w3s, b3, s3f,
      wf1, bf1, wf2, bf2, wf3, bf3)
    return out.reshape(n, OUT)[:, :10]


# ----------------------------------------------------------------------------
# Deterministic parameter init (PyTorch-style U(-1/sqrt(fan_in), 1/sqrt(fan_in)))
# ----------------------------------------------------------------------------
def init_params(key):
    def uni(k, shape, fan_in):
        bound = 1.0 / float(np.sqrt(fan_in))
        return jax.random.uniform(k, shape, jnp.float32, -bound, bound)

    ks = jax.random.split(key, 12)
    return {
        "conv1_w": uni(ks[0], (30, 1, 1, 1), 1),
        "conv1_b": uni(ks[1], (30,), 1),
        "conv2_w": uni(ks[2], (30, 30, 5, 5), 30 * 25),
        "conv2_b": uni(ks[3], (30,), 30 * 25),
        "conv3_w": uni(ks[4], (1, 30, 3, 3), 30 * 9),
        "conv3_b": uni(ks[5], (1,), 30 * 9),
        "fc1_w": uni(ks[6], (100, 50), 50),
        "fc1_b": uni(ks[7], (100,), 50),
        "fc2_w": uni(ks[8], (100, 100), 100),
        "fc2_b": uni(ks[9], (100,), 100),
        "fc3_w": uni(ks[10], (10, 100), 100),
        "fc3_b": uni(ks[11], (10,), 100),
    }


# ----------------------------------------------------------------------------
# Pure-JAX (XLA) reference with PyTorch NCHW semantics, for validation.
# ----------------------------------------------------------------------------
def cnn2l_reference(x, p):
    dn = ("NCHW", "OIHW", "NCHW")
    hi = lax.Precision.HIGHEST
    y = lax.conv_general_dilated(x, p["conv1_w"], (1, 1), "VALID",
                                 dimension_numbers=dn, precision=hi)
    y = jax.nn.relu(y + p["conv1_b"].reshape(1, -1, 1, 1))
    # pool1 (k=1, s=1) is the identity
    y = lax.conv_general_dilated(y, p["conv2_w"], (1, 1), [(2, 2), (2, 2)],
                                 dimension_numbers=dn, precision=hi)
    y = jax.nn.relu(y + p["conv2_b"].reshape(1, -1, 1, 1))
    y = lax.reduce_window(y, -jnp.inf, lax.max,
                          (1, 1, 2, 2), (1, 1, 2, 2), "VALID")
    y = lax.conv_general_dilated(y, p["conv3_w"], (1, 1), [(1, 1), (1, 1)],
                                 dimension_numbers=dn, precision=hi)
    y = jax.nn.relu(y + p["conv3_b"].reshape(1, -1, 1, 1))
    y = y.reshape(y.shape[0], -1)                       # X.view(-1, 50)
    y = jax.nn.relu(y @ p["fc1_w"].T + p["fc1_b"])
    y = y @ p["fc2_w"].T + p["fc2_b"]
    y = y @ p["fc3_w"].T + p["fc3_b"]
    return y


if __name__ == "__main__":
    key = jax.random.PRNGKey(0)
    pkey, xkey = jax.random.split(key)
    params = init_params(pkey)
    x = jax.random.normal(xkey, (N, 1, H, W), jnp.float32)

    out = jax.block_until_ready(cnn2l_forward(x, params))
    ref = jax.block_until_ready(cnn2l_reference(x, params))

    assert out.shape == (N, 10), out.shape
    # f32 path throughout; tolerance leaves headroom for MXU multi-pass f32
    # rounding over the 5-matmul chain while still catching layout/index bugs.
    np.testing.assert_allclose(np.asarray(out), np.asarray(ref),
                               rtol=5e-3, atol=5e-3)
    print("KERNEL_OK")
</pallas_src>

<mosaic_0001>
module attributes {stable_mosaic.version = 11 : i64} {
  func.func @cnn2l_kernel(%arg0: i32, %arg1: memref<1x1x384xf32, #tpu.memory_space<vmem>>, %arg2: memref<1x384xf32, #tpu.memory_space<vmem>>, %arg3: memref<32x1xf32, #tpu.memory_space<vmem>>, %arg4: memref<32x1xf32, #tpu.memory_space<vmem>>, %arg5: memref<32x800xf32, #tpu.memory_space<vmem>>, %arg6: memref<32x1xf32, #tpu.memory_space<vmem>>, %arg7: memref<384x128xf32, #tpu.memory_space<vmem>>, %arg8: memref<1x288xf32, #tpu.memory_space<vmem>>, %arg9: memref<1x1xf32, #tpu.memory_space<vmem>>, %arg10: memref<128x128xf32, #tpu.memory_space<vmem>>, %arg11: memref<128x128xf32, #tpu.memory_space<vmem>>, %arg12: memref<1x128xf32, #tpu.memory_space<vmem>>, %arg13: memref<128x128xf32, #tpu.memory_space<vmem>>, %arg14: memref<1x128xf32, #tpu.memory_space<vmem>>, %arg15: memref<128x128xf32, #tpu.memory_space<vmem>>, %arg16: memref<1x128xf32, #tpu.memory_space<vmem>>, %arg17: memref<1x1x128xf32, #tpu.memory_space<vmem>>) attributes {dimension_semantics = [#tpu.dimension_semantics<parallel>], iteration_bounds = array<i64: 2>, scalar_prefetch = 0 : i64, scratch_operands = 0 : i64, tpu.core_type = #tpu.core_type<tc>, window_params = [{transform_indices = @transform_0, window_bounds = array<i64: 1, 1, 384>}, {pipeline_mode = #tpu.pipeline_mode<synchronous>, transform_indices = @transform_1, window_bounds = array<i64: 1, 384>}, {pipeline_mode = #tpu.pipeline_mode<synchronous>, transform_indices = @transform_2, window_bounds = array<i64: 32, 1>}, {pipeline_mode = #tpu.pipeline_mode<synchronous>, transform_indices = @transform_3, window_bounds = array<i64: 32, 1>}, {pipeline_mode = #tpu.pipeline_mode<synchronous>, transform_indices = @transform_4, window_bounds = array<i64: 32, 800>}, {pipeline_mode = #tpu.pipeline_mode<synchronous>, transform_indices = @transform_5, window_bounds = array<i64: 32, 1>}, {pipeline_mode = #tpu.pipeline_mode<synchronous>, transform_indices = @transform_6, window_bounds = array<i64: 384, 128>}, {pipeline_mode = #tpu.pipeline_mode<synchronous>, transform_indices = @transform_7, window_bounds = array<i64: 1, 288>}, {pipeline_mode = #tpu.pipeline_mode<synchronous>, transform_indices = @transform_8, window_bounds = array<i64: 1, 1>}, {pipeline_mode = #tpu.pipeline_mode<synchronous>, transform_indices = @transform_9, window_bounds = array<i64: 128, 128>}, {pipeline_mode = #tpu.pipeline_mode<synchronous>, transform_indices = @transform_10, window_bounds = array<i64: 128, 128>}, {pipeline_mode = #tpu.pipeline_mode<synchronous>, transform_indices = @transform_11, window_bounds = array<i64: 1, 128>}, {pipeline_mode = #tpu.pipeline_mode<synchronous>, transform_indices = @transform_12, window_bounds = array<i64: 128, 128>}, {pipeline_mode = #tpu.pipeline_mode<synchronous>, transform_indices = @transform_13, window_bounds = array<i64: 1, 128>}, {pipeline_mode = #tpu.pipeline_mode<synchronous>, transform_indices = @transform_14, window_bounds = array<i64: 128, 128>}, {pipeline_mode = #tpu.pipeline_mode<synchronous>, transform_indices = @transform_15, window_bounds = array<i64: 1, 128>}, {transform_indices = @transform_16, window_bounds = array<i64: 1, 1, 128>}]} {
    %c0 = arith.constant 0 : index
    %c0_0 = arith.constant 0 : index
    %c0_1 = arith.constant 0 : index
    %0 = vector.load %arg1[%c0, %c0_0, %c0_1] : memref<1x1x384xf32, #tpu.memory_space<vmem>>, vector<1x1x384xf32>
    %1 = vector.shape_cast %0 : vector<1x1x384xf32> to vector<1x384xf32>
    %c0_2 = arith.constant 0 : index
    %c0_3 = arith.constant 0 : index
    %2 = vector.load %arg3[%c0_2, %c0_3] : memref<32x1xf32, #tpu.memory_space<vmem>>, vector<32x1xf32>
    %3 = vector.broadcast %2 : vector<32x1xf32> to vector<32x384xf32>
    %4 = vector.broadcast %1 : vector<1x384xf32> to vector<32x384xf32>
    %5 = arith.mulf %3, %4 : vector<32x384xf32>
    %c0_4 = arith.constant 0 : index
    %c0_5 = arith.constant 0 : index
    %6 = vector.load %arg4[%c0_4, %c0_5] : memref<32x1xf32, #tpu.memory_space<vmem>>, vector<32x1xf32>
    %7 = vector.broadcast %6 : vector<32x1xf32> to vector<32x384xf32>
    %8 = arith.addf %5, %7 : vector<32x384xf32>
    %cst = arith.constant 0.000000e+00 : f32
    %9 = vector.broadcast %cst : f32 to vector<32x384xf32>
    %10 = arith.maximumf %8, %9 : vector<32x384xf32>
    %c0_6 = arith.constant 0 : index
    %c0_7 = arith.constant 0 : index
    %11 = vector.load %arg2[%c0_6, %c0_7] : memref<1x384xf32, #tpu.memory_space<vmem>>, vector<1x384xf32>
    %12 = vector.broadcast %11 : vector<1x384xf32> to vector<32x384xf32>
    %13 = arith.mulf %10, %12 : vector<32x384xf32>
    %cst_8 = arith.constant 0.000000e+00 : f32
    %14 = vector.broadcast %cst_8 : f32 to vector<32x384xf32>
    %15 = vector.extract_strided_slice %13 {offsets = [0, 334], sizes = [32, 50], strides = [1, 1]} : vector<32x384xf32> to vector<32x50xf32>
    %16 = vector.extract_strided_slice %13 {offsets = [0, 0], sizes = [32, 334], strides = [1, 1]} : vector<32x384xf32> to vector<32x334xf32>
    %17 = tpu.concatenate %15, %16 in 1 : vector<32x50xf32>, vector<32x334xf32> -> vector<32x384xf32>
    %18 = vector.extract_strided_slice %13 {offsets = [0, 335], sizes = [32, 49], strides = [1, 1]} : vector<32x384xf32> to vector<32x49xf32>
    %19 = vector.extract_strided_slice %13 {offsets = [0, 0], sizes = [32, 335], strides = [1, 1]} : vector<32x384xf32> to vector<32x335xf32>
    %20 = tpu.concatenate %18, %19 in 1 : vector<32x49xf32>, vector<32x335xf32> -> vector<32x384xf32>
    %21 = vector.extract_strided_slice %13 {offsets = [0, 336], sizes = [32, 48], strides = [1, 1]} : vector<32x384xf32> to vector<32x48xf32>
    %22 = vector.extract_strided_slice %13 {offsets = [0, 0], sizes = [32, 336], strides = [1, 1]} : vector<32x384xf32> to vector<32x336xf32>
    %23 = tpu.concatenate %21, %22 in 1 : vector<32x48xf32>, vector<32x336xf32> -> vector<32x384xf32>
    %24 = vector.extract_strided_slice %13 {offsets = [0, 337], sizes = [32, 47], strides = [1, 1]} : vector<32x384xf32> to vector<32x47xf32>
    %25 = vector.extract_strided_slice %13 {offsets = [0, 0], sizes = [32, 337], strides = [1, 1]} : vector<32x384xf32> to vector<32x337xf32>
    %26 = tpu.concatenate %24, %25 in 1 : vector<32x47xf32>, vector<32x337xf32> -> vector<32x384xf32>
    %27 = vector.extract_strided_slice %13 {offsets = [0, 338], sizes = [32, 46], strides = [1, 1]} : vector<32x384xf32> to vector<32x46xf32>
    %28 = vector.extract_strided_slice %13 {offsets = [0, 0], sizes = [32, 338], strides = [1, 1]} : vector<32x384xf32> to vector<32x338xf32>
    %29 = tpu.concatenate %27, %28 in 1 : vector<32x46xf32>, vector<32x338xf32> -> vector<32x384xf32>
    %30 = vector.extract_strided_slice %13 {offsets = [0, 358], sizes = [32, 26], strides = [1, 1]} : vector<32x384xf32> to vector<32x26xf32>
    %31 = vector.extract_strided_slice %13 {offsets = [0, 0], sizes = [32, 358], strides = [1, 1]} : vector<32x384xf32> to vector<32x358xf32>
    %32 = tpu.concatenate %30, %31 in 1 : vector<32x26xf32>, vector<32x358xf32> -> vector<32x384xf32>
    %33 = vector.extract_strided_slice %13 {offsets = [0, 359], sizes = [32, 25], strides = [1, 1]} : vector<32x384xf32> to vector<32x25xf32>
    %34 = vector.extract_strided_slice %13 {offsets = [0, 0], sizes = [32, 359], strides = [1, 1]} : vector<32x384xf32> to vector<32x359xf32>
    %35 = tpu.concatenate %33, %34 in 1 : vector<32x25xf32>, vector<32x359xf32> -> vector<32x384xf32>
    %36 = vector.extract_strided_slice %13 {offsets = [0, 360], sizes = [32, 24], strides = [1, 1]} : vector<32x384xf32> to vector<32x24xf32>
    %37 = vector.extract_strided_slice %13 {offsets = [0, 0], sizes = [32, 360], strides = [1, 1]} : vector<32x384xf32> to vector<32x360xf32>
    %38 = tpu.concatenate %36, %37 in 1 : vector<32x24xf32>, vector<32x360xf32> -> vector<32x384xf32>
    %39 = tpu.concatenate %17, %20, %23, %26, %29, %32, %35, %38 in 0 : vector<32x384xf32>, vector<32x384xf32>, vector<32x384xf32>, vector<32x384xf32>, vector<32x384xf32>, vector<32x384xf32>, vector<32x384xf32>, vector<32x384xf32> -> vector<256x384xf32>
    %c0_9 = arith.constant 0 : index
    %c0_10 = arith.constant 0 : index
    %40 = vector.load %arg5[%c0_9, %c0_10] : memref<32x800xf32, #tpu.memory_space<vmem>>, vector<32x256xf32>
    %cst_11 = arith.constant dense<0.000000e+00> : vector<32x384xf32>
    %41 = tpu.matmul %40, %39, %cst_11 {dimension_numbers = #tpu.dot_dimension_numbers<[1], [0], [0], [1], [0, 0, 1, 1], [], []>} : vector<32x256xf32>, vector<256x384xf32>, vector<32x384xf32> -> vector<32x384xf32>
    %42 = arith.addf %14, %41 : vector<32x384xf32>
    %43 = vector.extract_strided_slice %13 {offsets = [0, 361], sizes = [32, 23], strides = [1, 1]} : vector<32x384xf32> to vector<32x23xf32>
    %44 = vector.extract_strided_slice %13 {offsets = [0, 0], sizes = [32, 361], strides = [1, 1]} : vector<32x384xf32> to vector<32x361xf32>
    %45 = tpu.concatenate %43, %44 in 1 : vector<32x23xf32>, vector<32x361xf32> -> vector<32x384xf32>
    %46 = vector.extract_strided_slice %13 {offsets = [0, 362], sizes = [32, 22], strides = [1, 1]} : vector<32x384xf32> to vector<32x22xf32>
    %47 = vector.extract_strided_slice %13 {offsets = [0, 0], sizes = [32, 362], strides = [1, 1]} : vector<32x384xf32> to vector<32x362xf32>
    %48 = tpu.concatenate %46, %47 in 1 : vector<32x22xf32>, vector<32x362xf32> -> vector<32x384xf32>
    %49 = vector.extract_strided_slice %13 {offsets = [0, 382], sizes = [32, 2], strides = [1, 1]} : vector<32x384xf32> to vector<32x2xf32>
    %50 = vector.extract_strided_slice %13 {offsets = [0, 0], sizes = [32, 382], strides = [1, 1]} : vector<32x384xf32> to vector<32x382xf32>
    %51 = tpu.concatenate %49, %50 in 1 : vector<32x2xf32>, vector<32x382xf32> -> vector<32x384xf32>
    %52 = vector.extract_strided_slice %13 {offsets = [0, 383], sizes = [32, 1], strides = [1, 1]} : vector<32x384xf32> to vector<32x1xf32>
    %53 = vector.extract_strided_slice %13 {offsets = [0, 0], sizes = [32, 383], strides = [1, 1]} : vector<32x384xf32> to vector<32x383xf32>
    %54 = tpu.concatenate %52, %53 in 1 : vector<32x1xf32>, vector<32x383xf32> -> vector<32x384xf32>
    %55 = vector.extract_strided_slice %13 {offsets = [0, 1], sizes = [32, 383], strides = [1, 1]} : vector<32x384xf32> to vector<32x383xf32>
    %56 = vector.extract_strided_slice %13 {offsets = [0, 0], sizes = [32, 1], strides = [1, 1]} : vector<32x384xf32> to vector<32x1xf32>
    %57 = tpu.concatenate %55, %56 in 1 : vector<32x383xf32>, vector<32x1xf32> -> vector<32x384xf32>
    %58 = vector.extract_strided_slice %13 {offsets = [0, 2], sizes = [32, 382], strides = [1, 1]} : vector<32x384xf32> to vector<32x382xf32>
    %59 = vector.extract_strided_slice %13 {offsets = [0, 0], sizes = [32, 2], strides = [1, 1]} : vector<32x384xf32> to vector<32x2xf32>
    %60 = tpu.concatenate %58, %59 in 1 : vector<32x382xf32>, vector<32x2xf32> -> vector<32x384xf32>
    %61 = vector.extract_strided_slice %13 {offsets = [0, 22], sizes = [32, 362], strides = [1, 1]} : vector<32x384xf32> to vector<32x362xf32>
    %62 = vector.extract_strided_slice %13 {offsets = [0, 0], sizes = [32, 22], strides = [1, 1]} : vector<32x384xf32> to vector<32x22xf32>
    %63 = tpu.concatenate %61, %62 in 1 : vector<32x362xf32>, vector<32x22xf32> -> vector<32x384xf32>
    %64 = tpu.concatenate %45, %48, %51, %54, %13, %57, %60, %63 in 0 : vector<32x384xf32>, vector<32x384xf32>, vector<32x384xf32>, vector<32x384xf32>, vector<32x384xf32>, vector<32x384xf32>, vector<32x384xf32>, vector<32x384xf32> -> vector<256x384xf32>
    %c0_12 = arith.constant 0 : index
    %c256 = arith.constant 256 : index
    %65 = vector.load %arg5[%c0_12, %c256] : memref<32x800xf32, #tpu.memory_space<vmem>>, vector<32x256xf32>
    %cst_13 = arith.constant dense<0.000000e+00> : vector<32x384xf32>
    %66 = tpu.matmul %65, %64, %cst_13 {dimension_numbers = #tpu.dot_dimension_numbers<[1], [0], [0], [1], [0, 0, 1, 1], [], []>} : vector<32x256xf32>, vector<256x384xf32>, vector<32x384xf32> -> vector<32x384xf32>
    %67 = arith.addf %42, %66 : vector<32x384xf32>
    %68 = vector.extract_strided_slice %13 {offsets = [0, 23], sizes = [32, 361], strides = [1, 1]} : vector<32x384xf32> to vector<32x361xf32>
    %69 = vector.extract_strided_slice %13 {offsets = [0, 0], sizes = [32, 23], strides = [1, 1]} : vector<32x384xf32> to vector<32x23xf32>
    %70 = tpu.concatenate %68, %69 in 1 : vector<32x361xf32>, vector<32x23xf32> -> vector<32x384xf32>
    %71 = vector.extract_strided_slice %13 {offsets = [0, 24], sizes = [32, 360], strides = [1, 1]} : vector<32x384xf32> to vector<32x360xf32>
    %72 = vector.extract_strided_slice %13 {offsets = [0, 0], sizes = [32, 24], strides = [1, 1]} : vector<32x384xf32> to vector<32x24xf32>
    %73 = tpu.concatenate %71, %72 in 1 : vector<32x360xf32>, vector<32x24xf32> -> vector<32x384xf32>
    %74 = vector.extract_strided_slice %13 {offsets = [0, 25], sizes = [32, 359], strides = [1, 1]} : vector<32x384xf32> to vector<32x359xf32>
    %75 = vector.extract_strided_slice %13 {offsets = [0, 0], sizes = [32, 25], strides = [1, 1]} : vector<32x384xf32> to vector<32x25xf32>
    %76 = tpu.concatenate %74, %75 in 1 : vector<32x359xf32>, vector<32x25xf32> -> vector<32x384xf32>
    %77 = vector.extract_strided_slice %13 {offsets = [0, 26], sizes = [32, 358], strides = [1, 1]} : vector<32x384xf32> to vector<32x358xf32>
    %78 = vector.extract_strided_slice %13 {offsets = [0, 0], sizes = [32, 26], strides = [1, 1]} : vector<32x384xf32> to vector<32x26xf32>
    %79 = tpu.concatenate %77, %78 in 1 : vector<32x358xf32>, vector<32x26xf32> -> vector<32x384xf32>
    %80 = vector.extract_strided_slice %13 {offsets = [0, 46], sizes = [32, 338], strides = [1, 1]} : vector<32x384xf32> to vector<32x338xf32>
    %81 = vector.extract_strided_slice %13 {offsets = [0, 0], sizes = [32, 46], strides = [1, 1]} : vector<32x384xf32> to vector<32x46xf32>
    %82 = tpu.concatenate %80, %81 in 1 : vector<32x338xf32>, vector<32x46xf32> -> vector<32x384xf32>
    %83 = vector.extract_strided_slice %13 {offsets = [0, 47], sizes = [32, 337], strides = [1, 1]} : vector<32x384xf32> to vector<32x337xf32>
    %84 = vector.extract_strided_slice %13 {offsets = [0, 0], sizes = [32, 47], strides = [1, 1]} : vector<32x384xf32> to vector<32x47xf32>
    %85 = tpu.concatenate %83, %84 in 1 : vector<32x337xf32>, vector<32x47xf32> -> vector<32x384xf32>
    %86 = vector.extract_strided_slice %13 {offsets = [0, 48], sizes = [32, 336], strides = [1, 1]} : vector<32x384xf32> to vector<32x336xf32>
    %87 = vector.extract_strided_slice %13 {offsets = [0, 0], sizes = [32, 48], strides = [1, 1]} : vector<32x384xf32> to vector<32x48xf32>
    %88 = tpu.concatenate %86, %87 in 1 : vector<32x336xf32>, vector<32x48xf32> -> vector<32x384xf32>
    %89 = vector.extract_strided_slice %13 {offsets = [0, 49], sizes = [32, 335], strides = [1, 1]} : vector<32x384xf32> to vector<32x335xf32>
    %90 = vector.extract_strided_slice %13 {offsets = [0, 0], sizes = [32, 49], strides = [1, 1]} : vector<32x384xf32> to vector<32x49xf32>
    %91 = tpu.concatenate %89, %90 in 1 : vector<32x335xf32>, vector<32x49xf32> -> vector<32x384xf32>
    %92 = tpu.concatenate %70, %73, %76, %79, %82, %85, %88, %91 in 0 : vector<32x384xf32>, vector<32x384xf32>, vector<32x384xf32>, vector<32x384xf32>, vector<32x384xf32>, vector<32x384xf32>, vector<32x384xf32>, vector<32x384xf32> -> vector<256x384xf32>
    %c0_14 = arith.constant 0 : index
    %c512 = arith.constant 512 : index
    %93 = vector.load %arg5[%c0_14, %c512] : memref<32x800xf32, #tpu.memory_space<vmem>>, vector<32x256xf32>
    %cst_15 = arith.constant dense<0.000000e+00> : vector<32x384xf32>
    %94 = tpu.matmul %93, %92, %cst_15 {dimension_numbers = #tpu.dot_dimension_numbers<[1], [0], [0], [1], [0, 0, 1, 1], [], []>} : vector<32x256xf32>, vector<256x384xf32>, vector<32x384xf32> -> vector<32x384xf32>
    %95 = arith.addf %67, %94 : vector<32x384xf32>
    %96 = vector.extract_strided_slice %13 {offsets = [0, 50], sizes = [32, 334], strides = [1, 1]} : vector<32x384xf32> to vector<32x334xf32>
    %97 = vector.extract_strided_slice %13 {offsets = [0, 0], sizes = [32, 50], strides = [1, 1]} : vector<32x384xf32> to vector<32x50xf32>
    %98 = tpu.concatenate %96, %97 in 1 : vector<32x334xf32>, vector<32x50xf32> -> vector<32x384xf32>
    %c0_16 = arith.constant 0 : index
    %c768 = arith.constant 768 : index
    %99 = vector.load %arg5[%c0_16, %c768] : memref<32x800xf32, #tpu.memory_space<vmem>>, vector<32x32xf32>
    %cst_17 = arith.constant dense<0.000000e+00> : vector<32x384xf32>
    %100 = tpu.matmul %99, %98, %cst_17 {dimension_numbers = #tpu.dot_dimension_numbers<[1], [0], [0], [1], [0, 0, 1, 1], [], []>} : vector<32x32xf32>, vector<32x384xf32>, vector<32x384xf32> -> vector<32x384xf32>
    %101 = arith.addf %95, %100 : vector<32x384xf32>
    %c0_18 = arith.constant 0 : index
    %c0_19 = arith.constant 0 : index
    %102 = vector.load %arg6[%c0_18, %c0_19] : memref<32x1xf32, #tpu.memory_space<vmem>>, vector<32x1xf32>
    %103 = vector.broadcast %102 : vector<32x1xf32> to vector<32x384xf32>
    %104 = arith.addf %101, %103 : vector<32x384xf32>
    %cst_20 = arith.constant 0.000000e+00 : f32
    %105 = vector.broadcast %cst_20 : f32 to vector<32x384xf32>
    %106 = arith.maximumf %104, %105 : vector<32x384xf32>
    %107 = vector.extract_strided_slice %106 {offsets = [0, 1], sizes = [32, 383], strides = [1, 1]} : vector<32x384xf32> to vector<32x383xf32>
    %108 = vector.extract_strided_slice %106 {offsets = [0, 0], sizes = [32, 1], strides = [1, 1]} : vector<32x384xf32> to vector<32x1xf32>
    %109 = tpu.concatenate %107, %108 in 1 : vector<32x383xf32>, vector<32x1xf32> -> vector<32x384xf32>
    %110 = arith.maximumf %106, %109 : vector<32x384xf32>
    %111 = vector.extract_strided_slice %110 {offsets = [0, 24], sizes = [32, 360], strides = [1, 1]} : vector<32x384xf32> to vector<32x360xf32>
    %112 = vector.extract_strided_slice %110 {offsets = [0, 0], sizes = [32, 24], strides = [1, 1]} : vector<32x384xf32> to vector<32x24xf32>
    %113 = tpu.concatenate %111, %112 in 1 : vector<32x360xf32>, vector<32x24xf32> -> vector<32x384xf32>
    %114 = arith.maximumf %110, %113 : vector<32x384xf32>
    %c0_21 = arith.constant 0 : index
    %c0_22 = arith.constant 0 : index
    %115 = vector.load %arg7[%c0_21, %c0_22] : memref<384x128xf32, #tpu.memory_space<vmem>>, vector<384x128xf32>
    %cst_23 = arith.constant dense<0.000000e+00> : vector<32x128xf32>
    %116 = tpu.matmul %114, %115, %cst_23 {dimension_numbers = #tpu.dot_dimension_numbers<[1], [0], [0], [1], [0, 0, 1, 1], [], []>} : vector<32x384xf32>, vector<384x128xf32>, vector<32x128xf32> -> vector<32x128xf32>
    %cst_24 = arith.constant 0.000000e+00 : f32
    %117 = vector.broadcast %cst_24 : f32 to vector<1x128xf32>
    %118 = vector.extract_strided_slice %116 {offsets = [0, 115], sizes = [32, 13], strides = [1, 1]} : vector<32x128xf32> to vector<32x13xf32>
    %119 = vector.extract_strided_slice %116 {offsets = [0, 0], sizes = [32, 115], strides = [1, 1]} : vector<32x128xf32> to vector<32x115xf32>
    %120 = tpu.concatenate %118, %119 in 1 : vector<32x13xf32>, vector<32x115xf32> -> vector<32x128xf32>
    %121 = vector.extract_strided_slice %116 {offsets = [0, 116], sizes = [32, 12], strides = [1, 1]} : vector<32x128xf32> to vector<32x12xf32>
    %122 = vector.extract_strided_slice %116 {offsets = [0, 0], sizes = [32, 116], strides = [1, 1]} : vector<32x128xf32> to vector<32x116xf32>
    %123 = tpu.concatenate %121, %122 in 1 : vector<32x12xf32>, vector<32x116xf32> -> vector<32x128xf32>
    %124 = vector.extract_strided_slice %116 {offsets = [0, 117], sizes = [32, 11], strides = [1, 1]} : vector<32x128xf32> to vector<32x11xf32>
    %125 = vector.extract_strided_slice %116 {offsets = [0, 0], sizes = [32, 117], strides = [1, 1]} : vector<32x128xf32> to vector<32x117xf32>
    %126 = tpu.concatenate %124, %125 in 1 : vector<32x11xf32>, vector<32x117xf32> -> vector<32x128xf32>
    %127 = vector.extract_strided_slice %116 {offsets = [0, 127], sizes = [32, 1], strides = [1, 1]} : vector<32x128xf32> to vector<32x1xf32>
    %128 = vector.extract_strided_slice %116 {offsets = [0, 0], sizes = [32, 127], strides = [1, 1]} : vector<32x128xf32> to vector<32x127xf32>
    %129 = tpu.concatenate %127, %128 in 1 : vector<32x1xf32>, vector<32x127xf32> -> vector<32x128xf32>
    %130 = vector.extract_strided_slice %116 {offsets = [0, 1], sizes = [32, 127], strides = [1, 1]} : vector<32x128xf32> to vector<32x127xf32>
    %131 = vector.extract_strided_slice %116 {offsets = [0, 0], sizes = [32, 1], strides = [1, 1]} : vector<32x128xf32> to vector<32x1xf32>
    %132 = tpu.concatenate %130, %131 in 1 : vector<32x127xf32>, vector<32x1xf32> -> vector<32x128xf32>
    %133 = vector.extract_strided_slice %116 {offsets = [0, 11], sizes = [32, 117], strides = [1, 1]} : vector<32x128xf32> to vector<32x117xf32>
    %134 = vector.extract_strided_slice %116 {offsets = [0, 0], sizes = [32, 11], strides = [1, 1]} : vector<32x128xf32> to vector<32x11xf32>
    %135 = tpu.concatenate %133, %134 in 1 : vector<32x117xf32>, vector<32x11xf32> -> vector<32x128xf32>
    %136 = vector.extract_strided_slice %116 {offsets = [0, 12], sizes = [32, 116], strides = [1, 1]} : vector<32x128xf32> to vector<32x116xf32>
    %137 = vector.extract_strided_slice %116 {offsets = [0, 0], sizes = [32, 12], strides = [1, 1]} : vector<32x128xf32> to vector<32x12xf32>
    %138 = tpu.concatenate %136, %137 in 1 : vector<32x116xf32>, vector<32x12xf32> -> vector<32x128xf32>
    %139 = tpu.concatenate %120, %123, %126, %129, %116, %132, %135, %138 in 0 : vector<32x128xf32>, vector<32x128xf32>, vector<32x128xf32>, vector<32x128xf32>, vector<32x128xf32>, vector<32x128xf32>, vector<32x128xf32>, vector<32x128xf32> -> vector<256x128xf32>
    %c0_25 = arith.constant 0 : index
    %c0_26 = arith.constant 0 : index
    %140 = vector.load %arg8[%c0_25, %c0_26] : memref<1x288xf32, #tpu.memory_space<vmem>>, vector<1x256xf32>
    %cst_27 = arith.constant dense<0.000000e+00> : vector<1x128xf32>
    %141 = tpu.matmul %140, %139, %cst_27 {dimension_numbers = #tpu.dot_dimension_numbers<[1], [0], [0], [1], [0, 0, 1, 1], [], []>} : vector<1x256xf32>, vector<256x128xf32>, vector<1x128xf32> -> vector<1x128xf32>
    %142 = arith.addf %117, %141 : vector<1x128xf32>
    %143 = vector.extract_strided_slice %116 {offsets = [0, 13], sizes = [32, 115], strides = [1, 1]} : vector<32x128xf32> to vector<32x115xf32>
    %144 = vector.extract_strided_slice %116 {offsets = [0, 0], sizes = [32, 13], strides = [1, 1]} : vector<32x128xf32> to vector<32x13xf32>
    %145 = tpu.concatenate %143, %144 in 1 : vector<32x115xf32>, vector<32x13xf32> -> vector<32x128xf32>
    %c0_28 = arith.constant 0 : index
    %c256_29 = arith.constant 256 : index
    %146 = vector.load %arg8[%c0_28, %c256_29] : memref<1x288xf32, #tpu.memory_space<vmem>>, vector<1x32xf32>
    %cst_30 = arith.constant dense<0.000000e+00> : vector<1x128xf32>
    %147 = tpu.matmul %146, %145, %cst_30 {dimension_numbers = #tpu.dot_dimension_numbers<[1], [0], [0], [1], [0, 0, 1, 1], [], []>} : vector<1x32xf32>, vector<32x128xf32>, vector<1x128xf32> -> vector<1x128xf32>
    %148 = arith.addf %142, %147 : vector<1x128xf32>
    %c0_31 = arith.constant 0 : index
    %c0_32 = arith.constant 0 : index
    %149 = vector.load %arg9[%c0_31, %c0_32] : memref<1x1xf32, #tpu.memory_space<vmem>>, vector<1x1xf32>
    %150 = vector.broadcast %149 : vector<1x1xf32> to vector<1x128xf32>
    %151 = arith.addf %148, %150 : vector<1x128xf32>
    %cst_33 = arith.constant 0.000000e+00 : f32
    %152 = vector.broadcast %cst_33 : f32 to vector<1x128xf32>
    %153 = arith.maximumf %151, %152 : vector<1x128xf32>
    %c0_34 = arith.constant 0 : index
    %c0_35 = arith.constant 0 : index
    %154 = vector.load %arg10[%c0_34, %c0_35] : memref<128x128xf32, #tpu.memory_space<vmem>>, vector<128x128xf32>
    %cst_36 = arith.constant dense<0.000000e+00> : vector<1x128xf32>
    %155 = tpu.matmul %153, %154, %cst_36 {dimension_numbers = #tpu.dot_dimension_numbers<[1], [0], [0], [1], [0, 0, 1, 1], [], []>} : vector<1x128xf32>, vector<128x128xf32>, vector<1x128xf32> -> vector<1x128xf32>
    %c0_37 = arith.constant 0 : index
    %c0_38 = arith.constant 0 : index
    %156 = vector.load %arg11[%c0_37, %c0_38] : memref<128x128xf32, #tpu.memory_space<vmem>>, vector<128x128xf32>
    %cst_39 = arith.constant dense<0.000000e+00> : vector<1x128xf32>
    %157 = tpu.matmul %155, %156, %cst_39 {dimension_numbers = #tpu.dot_dimension_numbers<[1], [0], [0], [1], [0, 0, 1, 1], [], []>} : vector<1x128xf32>, vector<128x128xf32>, vector<1x128xf32> -> vector<1x128xf32>
    %c0_40 = arith.constant 0 : index
    %c0_41 = arith.constant 0 : index
    %158 = vector.load %arg12[%c0_40, %c0_41] : memref<1x128xf32, #tpu.memory_space<vmem>>, vector<1x128xf32>
    %159 = arith.addf %157, %158 : vector<1x128xf32>
    %cst_42 = arith.constant 0.000000e+00 : f32
    %160 = vector.broadcast %cst_42 : f32 to vector<1x128xf32>
    %161 = arith.maximumf %159, %160 : vector<1x128xf32>
    %c0_43 = arith.constant 0 : index
    %c0_44 = arith.constant 0 : index
    %162 = vector.load %arg13[%c0_43, %c0_44] : memref<128x128xf32, #tpu.memory_space<vmem>>, vector<128x128xf32>
    %cst_45 = arith.constant dense<0.000000e+00> : vector<1x128xf32>
    %163 = tpu.matmul %161, %162, %cst_45 {dimension_numbers = #tpu.dot_dimension_numbers<[1], [0], [0], [1], [0, 0, 1, 1], [], []>} : vector<1x128xf32>, vector<128x128xf32>, vector<1x128xf32> -> vector<1x128xf32>
    %c0_46 = arith.constant 0 : index
    %c0_47 = arith.constant 0 : index
    %164 = vector.load %arg14[%c0_46, %c0_47] : memref<1x128xf32, #tpu.memory_space<vmem>>, vector<1x128xf32>
    %165 = arith.addf %163, %164 : vector<1x128xf32>
    %c0_48 = arith.constant 0 : index
    %c0_49 = arith.constant 0 : index
    %166 = vector.load %arg15[%c0_48, %c0_49] : memref<128x128xf32, #tpu.memory_space<vmem>>, vector<128x128xf32>
    %cst_50 = arith.constant dense<0.000000e+00> : vector<1x128xf32>
    %167 = tpu.matmul %165, %166, %cst_50 {dimension_numbers = #tpu.dot_dimension_numbers<[1], [0], [0], [1], [0, 0, 1, 1], [], []>} : vector<1x128xf32>, vector<128x128xf32>, vector<1x128xf32> -> vector<1x128xf32>
    %c0_51 = arith.constant 0 : index
    %c0_52 = arith.constant 0 : index
    %168 = vector.load %arg16[%c0_51, %c0_52] : memref<1x128xf32, #tpu.memory_space<vmem>>, vector<1x128xf32>
    %169 = arith.addf %167, %168 : vector<1x128xf32>
    %c0_53 = arith.constant 0 : index
    %c0_54 = arith.constant 0 : index
    %c0_55 = arith.constant 0 : index
    %170 = vector.load %arg17[%c0_53, %c0_54, %c0_55] : memref<1x1x128xf32, #tpu.memory_space<vmem>>, vector<1x1x128xf32>
    %171 = vector.shape_cast %170 : vector<1x1x128xf32> to vector<1x128xf32>
    %172 = vector.shape_cast %169 : vector<1x128xf32> to vector<1x1x128xf32>
    tpu.vector_store %arg17[%c0_53, %c0_54, %c0_55], %172 {strides = array<i32>} : memref<1x1x128xf32, #tpu.memory_space<vmem>>, vector<1x1x128xf32>,
    return
  }
  func.func @transform_0(%arg0: i32) -> (i32, i32, i32) {
    %c0_i32 = arith.constant 0 : i32
    %c0_i32_0 = arith.constant 0 : i32
    %c0_i32_1 = arith.constant 0 : i32
    return %arg0, %c0_i32, %c0_i32_0 : i32, i32, i32
  }
  func.func @transform_1(%arg0: i32) -> (i32, i32) {
    %c0_i32 = arith.constant 0 : i32
    %c0_i32_0 = arith.constant 0 : i32
    %c0_i32_1 = arith.constant 0 : i32
    return %c0_i32, %c0_i32_0 : i32, i32
  }
  func.func @transform_2(%arg0: i32) -> (i32, i32) {
    %c0_i32 = arith.constant 0 : i32
    %c0_i32_0 = arith.constant 0 : i32
    %c0_i32_1 = arith.constant 0 : i32
    return %c0_i32, %c0_i32_0 : i32, i32
  }
  func.func @transform_3(%arg0: i32) -> (i32, i32) {
    %c0_i32 = arith.constant 0 : i32
    %c0_i32_0 = arith.constant 0 : i32
    %c0_i32_1 = arith.constant 0 : i32
    return %c0_i32, %c0_i32_0 : i32, i32
  }
  func.func @transform_4(%arg0: i32) -> (i32, i32) {
    %c0_i32 = arith.constant 0 : i32
    %c0_i32_0 = arith.constant 0 : i32
    %c0_i32_1 = arith.constant 0 : i32
    return %c0_i32, %c0_i32_0 : i32, i32
  }
  func.func @transform_5(%arg0: i32) -> (i32, i32) {
    %c0_i32 = arith.constant 0 : i32
    %c0_i32_0 = arith.constant 0 : i32
    %c0_i32_1 = arith.constant 0 : i32
    return %c0_i32, %c0_i32_0 : i32, i32
  }
  func.func @transform_6(%arg0: i32) -> (i32, i32) {
    %c0_i32 = arith.constant 0 : i32
    %c0_i32_0 = arith.constant 0 : i32
    %c0_i32_1 = arith.constant 0 : i32
    return %c0_i32, %c0_i32_0 : i32, i32
  }
  func.func @transform_7(%arg0: i32) -> (i32, i32) {
    %c0_i32 = arith.constant 0 : i32
    %c0_i32_0 = arith.constant 0 : i32
    %c0_i32_1 = arith.constant 0 : i32
    return %c0_i32, %c0_i32_0 : i32, i32
  }
  func.func @transform_8(%arg0: i32) -> (i32, i32) {
    %c0_i32 = arith.constant 0 : i32
    %c0_i32_0 = arith.constant 0 : i32
    %c0_i32_1 = arith.constant 0 : i32
    return %c0_i32, %c0_i32_0 : i32, i32
  }
  func.func @transform_9(%arg0: i32) -> (i32, i32) {
    %c0_i32 = arith.constant 0 : i32
    %c0_i32_0 = arith.constant 0 : i32
    %c0_i32_1 = arith.constant 0 : i32
    return %c0_i32, %c0_i32_0 : i32, i32
  }
  func.func @transform_10(%arg0: i32) -> (i32, i32) {
    %c0_i32 = arith.constant 0 : i32
    %c0_i32_0 = arith.constant 0 : i32
    %c0_i32_1 = arith.constant 0 : i32
    return %c0_i32, %c0_i32_0 : i32, i32
  }
  func.func @transform_11(%arg0: i32) -> (i32, i32) {
    %c0_i32 = arith.constant 0 : i32
    %c0_i32_0 = arith.constant 0 : i32
    %c0_i32_1 = arith.constant 0 : i32
    return %c0_i32, %c0_i32_0 : i32, i32
  }
  func.func @transform_12(%arg0: i32) -> (i32, i32) {
    %c0_i32 = arith.constant 0 : i32
    %c0_i32_0 = arith.constant 0 : i32
    %c0_i32_1 = arith.constant 0 : i32
    return %c0_i32, %c0_i32_0 : i32, i32
  }
  func.func @transform_13(%arg0: i32) -> (i32, i32) {
    %c0_i32 = arith.constant 0 : i32
    %c0_i32_0 = arith.constant 0 : i32
    %c0_i32_1 = arith.constant 0 : i32
    return %c0_i32, %c0_i32_0 : i32, i32
  }
  func.func @transform_14(%arg0: i32) -> (i32, i32) {
    %c0_i32 = arith.constant 0 : i32
    %c0_i32_0 = arith.constant 0 : i32
    %c0_i32_1 = arith.constant 0 : i32
    return %c0_i32, %c0_i32_0 : i32, i32
  }
  func.func @transform_15(%arg0: i32) -> (i32, i32) {
    %c0_i32 = arith.constant 0 : i32
    %c0_i32_0 = arith.constant 0 : i32
    %c0_i32_1 = arith.constant 0 : i32
    return %c0_i32, %c0_i32_0 : i32, i32
  }
  func.func @transform_16(%arg0: i32) -> (i32, i32, i32) {
    %c0_i32 = arith.constant 0 : i32
    %c0_i32_0 = arith.constant 0 : i32
    %c0_i32_1 = arith.constant 0 : i32
    return %arg0, %c0_i32, %c0_i32_0 : i32, i32, i32
  }
}

</mosaic_0001>

<llo_original>
// kernel: tpu_custom_call.1
$region0: #{tpu_custom_call.1}
  #allocation0 [shape = 'u32[]', space=smem, size = 0x4, offset = 0x4, fixed_abs, tag = 'smem constant byte address 0x4 - core index']
  #allocation1 [shape = 'u32[72,128]{1,0:T(1,128)}', space=vmem, size = 0x9000, scoped, tag = 'internal scratch']
  #allocation2 [shape = 'f32[1,1]{1,0:T(1,128)S(1)}', space=vmem, size = 0x200, scoped, tag = 'scoped memory for tpu_custom_call.1']
  %s0 = inlined_call_operand.vmem [shape: f32[2,1,384], index: 0, kind: input, shape index: {}]
  %s1 = inlined_call_operand.vmem [shape: f32[1,384], index: 1, kind: input, shape index: {}]
  %s2 = inlined_call_operand.vmem [shape: f32[32,1], index: 2, kind: input, shape index: {}]
  %s3 = inlined_call_operand.vmem [shape: f32[32,1], index: 3, kind: input, shape index: {}]
  %s4 = inlined_call_operand.hbm [shape: f32[32,800], index: 4, kind: input, shape index: {}]
  %s5 = inlined_call_operand.vmem [shape: f32[32,1], index: 5, kind: input, shape index: {}]
  %s6 = inlined_call_operand.hbm [shape: f32[384,128], index: 6, kind: input, shape index: {}]
  %s7 = inlined_call_operand.vmem [shape: f32[1,288], index: 7, kind: input, shape index: {}]
  %s8 = inlined_call_operand.<no memory space> [shape: f32[1,1], index: 8, kind: input, shape index: {}]
  %s9 = inlined_call_operand.hbm [shape: f32[128,128], index: 9, kind: input, shape index: {}]
  %s10 = inlined_call_operand.hbm [shape: f32[128,128], index: 10, kind: input, shape index: {}]
  %s11 = inlined_call_operand.vmem [shape: f32[1,128], index: 11, kind: input, shape index: {}]
  %s12 = inlined_call_operand.hbm [shape: f32[128,128], index: 12, kind: input, shape index: {}]
  %s13 = inlined_call_operand.vmem [shape: f32[1,128], index: 13, kind: input, shape index: {}]
  %s14 = inlined_call_operand.hbm [shape: f32[128,128], index: 14, kind: input, shape index: {}]
  %s15 = inlined_call_operand.vmem [shape: f32[1,128], index: 15, kind: input, shape index: {}]
  %s16 = inlined_call_operand.hbm [shape: f32[2,1,128], index: 16, kind: output, shape index: {}]
  %s17 = sld [smem:[#allocation0]]
  $region121: #{tpu_custom_call.1} parent=0
    _
  %s19 = ssub.s32 1, %s17
  %s20 = scalar_select 0, %s19, %s17
  %v21 = vstv %s8
  %22 = vst [vmem:[#allocation2] sm:$0x1] %v21
  $region1: #{tpu_custom_call.1} parent=0
    #allocation3 [shape = 'u8[114688]{0}', space=vmem, size = 0x1c000, scoped, tag = 'input window, operand 4, single buffered']
    #allocation4 [shape = 's32[2]{0}', space=sflag, size = 0x8, scoped, tag = 'scoped memory for tpu_custom_call.1']
    #allocation5 [shape = 's32[2]{0}', space=sflag, size = 0x8, scoped, tag = 'scoped memory for tpu_custom_call.1']
    #allocation6 [shape = 'u8[196608]{0}', space=vmem, size = 0x30000, scoped, tag = 'input window, operand 6, single buffered']
    #allocation7 [shape = 's32[1]{0}', space=sflag, size = 0x4, scoped, tag = 'scoped memory for tpu_custom_call.1']
    #allocation8 [shape = 'u8[65536]{0}', space=vmem, size = 0x10000, scoped, tag = 'input window, operand 9, single buffered']
    #allocation9 [shape = 'u8[65536]{0}', space=vmem, size = 0x10000, scoped, tag = 'input window, operand 10, single buffered']
    #allocation10 [shape = 's32[1]{0}', space=sflag, size = 0x4, scoped, tag = 'scoped memory for tpu_custom_call.1']
    #allocation11 [shape = 'u8[65536]{0}', space=vmem, size = 0x10000, scoped, tag = 'input window, operand 12, single buffered']
    #allocation12 [shape = 'u8[65536]{0}', space=vmem, size = 0x10000, scoped, tag = 'input window, operand 14, single buffered']
    #allocation13 [shape = 's32[1]{0}', space=sflag, size = 0x4, scoped, tag = 'scoped memory for tpu_custom_call.1']
    #allocation14 [shape = 'u8[1024]{0}', space=vmem, size = 0x400, scoped, tag = 'output window, operand 0']
    %23 = vsyncpa [#allocation4], 0
    %24 = vsyncpa [#allocation7], 0
    %25 = vsyncpa [#allocation10], 0
    %26 = vsyncpa [#allocation13], 0
    %27 = vsyncpa [#allocation5], 0
    %s28 = scalar_lea.sflag [#allocation5], 1
    %29 = vsyncpa %s28, 0
    loop: start=0, step=1, limit=4
    $region2: #{tpu_custom_call.1} parent=1 // loop_pre_header
      _
    $region3: #{tpu_custom_call.1} parent=1 // loop_header
      %s31 = sphi 0, %s35
      %p32 = scmp.ge.s32.totalorder %s31, 4
      %s41 = sphi 0, %s43
      %s44 = sphi 0, %s41
      %s45 = sphi 0, %s44
      %s61 = sphi 0, %s45
      %s65 = sphi 0, %s65
      %s67 = sphi 0, %s65
      %s68 = sphi 0, %s67
      %s82 = sphi 0, %s68
      %s86 = sphi 0, %s86
      %s88 = sphi 0, %s86
      %s89 = sphi 0, %s88
      %s103 = sphi 0, %s89
      %s107 = sphi 0, %s107
      %s109 = sphi 0, %s107
      %s110 = sphi 0, %s109
      %s124 = sphi 0, %s110
      %s128 = sphi 0, %s128
      %s130 = sphi 0, %s128
      %s131 = sphi 0, %s130
      %s145 = sphi 0, %s131
      %s149 = sphi 0, %s149
      %s151 = sphi 0, %s149
      %s152 = sphi 0, %s151
      %s166 = sphi 0, %s152
      %s170 = sphi 0, %s170
      %s172 = sphi 0, %s170
      %s173 = sphi 0, %s172
      %s187 = sphi 0, %s173
      %s191 = sphi 0, %s191
      %s193 = sphi 0, %s191
      %s194 = sphi 0, %s193
      %s208 = sphi 0, %s194
      %s212 = sphi 0, %s212
      %s214 = sphi 0, %s212
      %s215 = sphi 0, %s214
      %s229 = sphi 0, %s215
      %s233 = sphi 0, %s233
      %s235 = sphi 0, %s233
      %s236 = sphi 0, %s235
      %s250 = sphi 0, %s236
      %s254 = sphi 0, %s254
      %s256 = sphi 0, %s254
      %s257 = sphi 0, %s256
      %s271 = sphi 0, %s257
      %s275 = sphi 0, %s275
      %s277 = sphi 0, %s275
      %s278 = sphi 0, %s277
      %s292 = sphi 0, %s278
      %s296 = sphi 0, %s296
      %s298 = sphi 0, %s296
      %s299 = sphi 0, %s298
      %s313 = sphi 0, %s299
      %s317 = sphi 0, %s317
      %s319 = sphi 0, %s317
      %s320 = sphi 0, %s319
      %s334 = sphi 0, %s320
      %s338 = sphi 0, %s338
      %s340 = sphi 0, %s338
      %s341 = sphi 0, %s340
      %s355 = sphi 0, %s341
      %s359 = sphi 0, %s359
      %s361 = sphi 0, %s359
      %s362 = sphi 0, %s361
      %s376 = sphi 0, %s362
      %s382 = sphi 0, %s384
      %s385 = sphi 0, %s382
      %s386 = sphi 0, %s385
      %s402 = sphi 0, %s386
    $region4: #{tpu_custom_call.1} parent=1 // loop_header_branch
      %34 = sbr.rel (%p32) target = $region8
    $region5: #{tpu_custom_call.1} parent=1 // loop_body
      %s36 = ssub.s32 %s31, 1
      %s37 = ssub.s32 %s31, 2
      %s38 = sadd.s32 %s31, 1
      %s39 = ssub.s32 %s31, %s38
      %p40 = scmp.eq.s32.totalorder %s39, 0
      %s42 = sadd.s32 %s41, 1
      %s43 = scalar_select %p40, %s41, %s42
      %p46 = pneg %p40
      %p47 = scmp.eq.s32.totalorder %s31, 1
      %p48 = por %p46, %p47
      %p49 = scmp.ne.s32.totalorder %s41, %s44
      %p50 = scmp.eq.s32.totalorder %s31, 0
      %p51 = por %p49, %p50
      %p52 = scmp.ne.s32.totalorder %s41, %s44
      %p53 = scmp.eq.s32.totalorder %s36, 1
      %p54 = por %p52, %p53
      %p55 = scmp.ne.s32.totalorder %s44, %s45
      %p56 = scmp.eq.s32.totalorder %s36, 0
      %p57 = por %p55, %p56
      %p58 = scmp.ne.s32.totalorder %s44, %s45
      %p59 = scmp.eq.s32.totalorder %s37, 1
      %p60 = por %p58, %p59
      %p62 = scmp.ne.s32.totalorder %s45, %s61
      %p63 = scmp.eq.s32.totalorder %s37, 0
      %p64 = por %p62, %p63
      %s66 = sadd.s32 %s65, 1
      %p69 = scmp.eq.s32.totalorder %s31, 1
      %p70 = scmp.ne.s32.totalorder %s65, %s67
      %p71 = scmp.eq.s32.totalorder %s31, 0
      %p72 = por %p70, %p71
      %p73 = scmp.ne.s32.totalorder %s65, %s67
      %p74 = scmp.eq.s32.totalorder %s36, 1
      %p75 = por %p73, %p74
      %p76 = scmp.ne.s32.totalorder %s67, %s68
      %p77 = scmp.eq.s32.totalorder %s36, 0
      %p78 = por %p76, %p77
      %p79 = scmp.ne.s32.totalorder %s67, %s68
      %p80 = scmp.eq.s32.totalorder %s37, 1
      %p81 = por %p79, %p80
      %p83 = scmp.ne.s32.totalorder %s68, %s82
      %p84 = scmp.eq.s32.totalorder %s37, 0
      %p85 = por %p83, %p84
      %s87 = sadd.s32 %s86, 1
      %p90 = scmp.eq.s32.totalorder %s31, 1
      %p91 = scmp.ne.s32.totalorder %s86, %s88
      %p92 = scmp.eq.s32.totalorder %s31, 0
      %p93 = por %p91, %p92
      %p94 = scmp.ne.s32.totalorder %s86, %s88
      %p95 = scmp.eq.s32.totalorder %s36, 1
      %p96 = por %p94, %p95
      %p97 = scmp.ne.s32.totalorder %s88, %s89
      %p98 = scmp.eq.s32.totalorder %s36, 0
      %p99 = por %p97, %p98
      %p100 = scmp.ne.s32.totalorder %s88, %s89
      %p101 = scmp.eq.s32.totalorder %s37, 1
      %p102 = por %p100, %p101
      %p104 = scmp.ne.s32.totalorder %s89, %s103
      %p105 = scmp.eq.s32.totalorder %s37, 0
      %p106 = por %p104, %p105
      %s108 = sadd.s32 %s107, 1
      %p111 = scmp.eq.s32.totalorder %s31, 1
      %p112 = scmp.ne.s32.totalorder %s107, %s109
      %p113 = scmp.eq.s32.totalorder %s31, 0
      %p114 = por %p112, %p113
      %p115 = scmp.ne.s32.totalorder %s107, %s109
      %p116 = scmp.eq.s32.totalorder %s36, 1
      %p117 = por %p115, %p116
      %p118 = scmp.ne.s32.totalorder %s109, %s110
      %p119 = scmp.eq.s32.totalorder %s36, 0
      %p120 = por %p118, %p119
      %p121 = scmp.ne.s32.totalorder %s109, %s110
      %p122 = scmp.eq.s32.totalorder %s37, 1
      %p123 = por %p121, %p122
      %p125 = scmp.ne.s32.totalorder %s110, %s124
      %p126 = scmp.eq.s32.totalorder %s37, 0
      %p127 = por %p125, %p126
      %s129 = sadd.s32 %s128, 1
      %p132 = scmp.eq.s32.totalorder %s31, 1
      %p133 = scmp.ne.s32.totalorder %s128, %s130
      %p134 = scmp.eq.s32.totalorder %s31, 0
      %p135 = por %p133, %p134
      %p136 = scmp.ne.s32.totalorder %s128, %s130
      %p137 = scmp.eq.s32.totalorder %s36, 1
      %p138 = por %p136, %p137
      %p139 = scmp.ne.s32.totalorder %s130, %s131
      %p140 = scmp.eq.s32.totalorder %s36, 0
      %p141 = por %p139, %p140
      %p142 = scmp.ne.s32.totalorder %s130, %s131
      %p143 = scmp.eq.s32.totalorder %s37, 1
      %p144 = por %p142, %p143
      %p146 = scmp.ne.s32.totalorder %s131, %s145
      %p147 = scmp.eq.s32.totalorder %s37, 0
      %p148 = por %p146, %p147
      %s150 = sadd.s32 %s149, 1
      %p153 = scmp.eq.s32.totalorder %s31, 1
      %p154 = scmp.ne.s32.totalorder %s149, %s151
      %p155 = scmp.eq.s32.totalorder %s31, 0
      %p156 = por %p154, %p155
      %p157 = scmp.ne.s32.totalorder %s149, %s151
      %p158 = scmp.eq.s32.totalorder %s36, 1
      %p159 = por %p157, %p158
      %p160 = scmp.ne.s32.totalorder %s151, %s152
      %p161 = scmp.eq.s32.totalorder %s36, 0
      %p162 = por %p160, %p161
      %p163 = scmp.ne.s32.totalorder %s151, %s152
      %p164 = scmp.eq.s32.totalorder %s37, 1
      %p165 = por %p163, %p164
      %p167 = scmp.ne.s32.totalorder %s152, %s166
      %p168 = scmp.eq.s32.totalorder %s37, 0
      %p169 = por %p167, %p168
      %s171 = sadd.s32 %s170, 1
      %p174 = scmp.eq.s32.totalorder %s31, 1
      %p175 = scmp.ne.s32.totalorder %s170, %s172
      %p176 = scmp.eq.s32.totalorder %s31, 0
      %p177 = por %p175, %p176
      %p178 = scmp.ne.s32.totalorder %s170, %s172
      %p179 = scmp.eq.s32.totalorder %s36, 1
      %p180 = por %p178, %p179
      %p181 = scmp.ne.s32.totalorder %s172, %s173
      %p182 = scmp.eq.s32.totalorder %s36, 0
      %p183 = por %p181, %p182
      %p184 = scmp.ne.s32.totalorder %s172, %s173
      %p185 = scmp.eq.s32.totalorder %s37, 1
      %p186 = por %p184, %p185
      %p188 = scmp.ne.s32.totalorder %s173, %s187
      %p189 = scmp.eq.s32.totalorder %s37, 0
      %p190 = por %p188, %p189
      %s192 = sadd.s32 %s191, 1
      %p195 = scmp.eq.s32.totalorder %s31, 1
      %p196 = scmp.ne.s32.totalorder %s191, %s193
      %p197 = scmp.eq.s32.totalorder %s31, 0
      %p198 = por %p196, %p197
      %p199 = scmp.ne.s32.totalorder %s191, %s193
      %p200 = scmp.eq.s32.totalorder %s36, 1
      %p201 = por %p199, %p200
      %p202 = scmp.ne.s32.totalorder %s193, %s194
      %p203 = scmp.eq.s32.totalorder %s36, 0
      %p204 = por %p202, %p203
      %p205 = scmp.ne.s32.totalorder %s193, %s194
      %p206 = scmp.eq.s32.totalorder %s37, 1
      %p207 = por %p205, %p206
      %p209 = scmp.ne.s32.totalorder %s194, %s208
      %p210 = scmp.eq.s32.totalorder %s37, 0
      %p211 = por %p209, %p210
      %s213 = sadd.s32 %s212, 1
      %p216 = scmp.eq.s32.totalorder %s31, 1
      %p217 = scmp.ne.s32.totalorder %s212, %s214
      %p218 = scmp.eq.s32.totalorder %s31, 0
      %p219 = por %p217, %p218
      %p220 = scmp.ne.s32.totalorder %s212, %s214
      %p221 = scmp.eq.s32.totalorder %s36, 1
      %p222 = por %p220, %p221
      %p223 = scmp.ne.s32.totalorder %s214, %s215
      %p224 = scmp.eq.s32.totalorder %s36, 0
      %p225 = por %p223, %p224
      %p226 = scmp.ne.s32.totalorder %s214, %s215
      %p227 = scmp.eq.s32.totalorder %s37, 1
      %p228 = por %p226, %p227
      %p230 = scmp.ne.s32.totalorder %s215, %s229
      %p231 = scmp.eq.s32.totalorder %s37, 0
      %p232 = por %p230, %p231
      %s234 = sadd.s32 %s233, 1
      %p237 = scmp.eq.s32.totalorder %s31, 1
      %p238 = scmp.ne.s32.totalorder %s233, %s235
      %p239 = scmp.eq.s32.totalorder %s31, 0
      %p240 = por %p238, %p239
      %p241 = scmp.ne.s32.totalorder %s233, %s235
      %p242 = scmp.eq.s32.totalorder %s36, 1
      %p243 = por %p241, %p242
      %p244 = scmp.ne.s32.totalorder %s235, %s236
      %p245 = scmp.eq.s32.totalorder %s36, 0
      %p246 = por %p244, %p245
      %p247 = scmp.ne.s32.totalorder %s235, %s236
      %p248 = scmp.eq.s32.totalorder %s37, 1
      %p249 = por %p247, %p248
      %p251 = scmp.ne.s32.totalorder %s236, %s250
      %p252 = scmp.eq.s32.totalorder %s37, 0
      %p253 = por %p251, %p252
      %s255 = sadd.s32 %s254, 1
      %p258 = scmp.eq.s32.totalorder %s31, 1
      %p259 = scmp.ne.s32.totalorder %s254, %s256
      %p260 = scmp.eq.s32.totalorder %s31, 0
      %p261 = por %p259, %p260
      %p262 = scmp.ne.s32.totalorder %s254, %s256
      %p263 = scmp.eq.s32.totalorder %s36, 1
      %p264 = por %p262, %p263
      %p265 = scmp.ne.s32.totalorder %s256, %s257
      %p266 = scmp.eq.s32.totalorder %s36, 0
      %p267 = por %p265, %p266
      %p268 = scmp.ne.s32.totalorder %s256, %s257
      %p269 = scmp.eq.s32.totalorder %s37, 1
      %p270 = por %p268, %p269
      %p272 = scmp.ne.s32.totalorder %s257, %s271
      %p273 = scmp.eq.s32.totalorder %s37, 0
      %p274 = por %p272, %p273
      %s276 = sadd.s32 %s275, 1
      %p279 = scmp.eq.s32.totalorder %s31, 1
      %p280 = scmp.ne.s32.totalorder %s275, %s277
      %p281 = scmp.eq.s32.totalorder %s31, 0
      %p282 = por %p280, %p281
      %p283 = scmp.ne.s32.totalorder %s275, %s277
      %p284 = scmp.eq.s32.totalorder %s36, 1
      %p285 = por %p283, %p284
      %p286 = scmp.ne.s32.totalorder %s277, %s278
      %p287 = scmp.eq.s32.totalorder %s36, 0
      %p288 = por %p286, %p287
      %p289 = scmp.ne.s32.totalorder %s277, %s278
      %p290 = scmp.eq.s32.totalorder %s37, 1
      %p291 = por %p289, %p290
      %p293 = scmp.ne.s32.totalorder %s278, %s292
      %p294 = scmp.eq.s32.totalorder %s37, 0
      %p295 = por %p293, %p294
      %s297 = sadd.s32 %s296, 1
      %p300 = scmp.eq.s32.totalorder %s31, 1
      %p301 = scmp.ne.s32.totalorder %s296, %s298
      %p302 = scmp.eq.s32.totalorder %s31, 0
      %p303 = por %p301, %p302
      %p304 = scmp.ne.s32.totalorder %s296, %s298
      %p305 = scmp.eq.s32.totalorder %s36, 1
      %p306 = por %p304, %p305
      %p307 = scmp.ne.s32.totalorder %s298, %s299
      %p308 = scmp.eq.s32.totalorder %s36, 0
      %p309 = por %p307, %p308
      %p310 = scmp.ne.s32.totalorder %s298, %s299
      %p311 = scmp.eq.s32.totalorder %s37, 1
      %p312 = por %p310, %p311
      %p314 = scmp.ne.s32.totalorder %s299, %s313
      %p315 = scmp.eq.s32.totalorder %s37, 0
      %p316 = por %p314, %p315
      %s318 = sadd.s32 %s317, 1
      %p321 = scmp.eq.s32.totalorder %s31, 1
      %p322 = scmp.ne.s32.totalorder %s317, %s319
      %p323 = scmp.eq.s32.totalorder %s31, 0
      %p324 = por %p322, %p323
      %p325 = scmp.ne.s32.totalorder %s317, %s319
      %p326 = scmp.eq.s32.totalorder %s36, 1
      %p327 = por %p325, %p326
      %p328 = scmp.ne.s32.totalorder %s319, %s320
      %p329 = scmp.eq.s32.totalorder %s36, 0
      %p330 = por %p328, %p329
      %p331 = scmp.ne.s32.totalorder %s319, %s320
      %p332 = scmp.eq.s32.totalorder %s37, 1
      %p333 = por %p331, %p332
      %p335 = scmp.ne.s32.totalorder %s320, %s334
      %p336 = scmp.eq.s32.totalorder %s37, 0
      %p337 = por %p335, %p336
      %s339 = sadd.s32 %s338, 1
      %p342 = scmp.eq.s32.totalorder %s31, 1
      %p343 = scmp.ne.s32.totalorder %s338, %s340
      %p344 = scmp.eq.s32.totalorder %s31, 0
      %p345 = por %p343, %p344
      %p346 = scmp.ne.s32.totalorder %s338, %s340
      %p347 = scmp.eq.s32.totalorder %s36, 1
      %p348 = por %p346, %p347
      %p349 = scmp.ne.s32.totalorder %s340, %s341
      %p350 = scmp.eq.s32.totalorder %s36, 0
      %p351 = por %p349, %p350
      %p352 = scmp.ne.s32.totalorder %s340, %s341
      %p353 = scmp.eq.s32.totalorder %s37, 1
      %p354 = por %p352, %p353
      %p356 = scmp.ne.s32.totalorder %s341, %s355
      %p357 = scmp.eq.s32.totalorder %s37, 0
      %p358 = por %p356, %p357
      %s360 = sadd.s32 %s359, 1
      %p363 = scmp.eq.s32.totalorder %s31, 1
      %p364 = scmp.ne.s32.totalorder %s359, %s361
      %p365 = scmp.eq.s32.totalorder %s31, 0
      %p366 = por %p364, %p365
      %p367 = scmp.ne.s32.totalorder %s359, %s361
      %p368 = scmp.eq.s32.totalorder %s36, 1
      %p369 = por %p367, %p368
      %p370 = scmp.ne.s32.totalorder %s361, %s362
      %p371 = scmp.eq.s32.totalorder %s36, 0
      %p372 = por %p370, %p371
      %p373 = scmp.ne.s32.totalorder %s361, %s362
      %p374 = scmp.eq.s32.totalorder %s37, 1
      %p375 = por %p373, %p374
      %p377 = scmp.ne.s32.totalorder %s362, %s376
      %p378 = scmp.eq.s32.totalorder %s37, 0
      %p379 = por %p377, %p378
      %s380 = ssub.s32 %s31, %s38
      %p381 = scmp.eq.s32.totalorder %s380, 0
      %s383 = sadd.s32 %s382, 1
      %s384 = scalar_select %p381, %s382, %s383
      %p387 = pneg %p381
      %p388 = scmp.eq.s32.totalorder %s31, 1
      %p389 = por %p387, %p388
      %p390 = scmp.ne.s32.totalorder %s382, %s385
      %p391 = scmp.eq.s32.totalorder %s31, 0
      %p392 = por %p390, %p391
      %p393 = scmp.ne.s32.totalorder %s382, %s385
      %p394 = scmp.eq.s32.totalorder %s36, 1
      %p395 = por %p393, %p394
      %p396 = scmp.ne.s32.totalorder %s385, %s386
      %p397 = scmp.eq.s32.totalorder %s36, 0
      %p398 = por %p396, %p397
      %p399 = scmp.ne.s32.totalorder %s385, %s386
      %p400 = scmp.eq.s32.totalorder %s37, 1
      %p401 = por %p399, %p400
      %p403 = scmp.ne.s32.totalorder %s386, %s402
      %p404 = scmp.eq.s32.totalorder %s37, 0
      %p405 = por %p403, %p404
      %p406 = scmp.le.s32.totalorder 1, %s31
      %p407 = scmp.lt.s32.totalorder %s31, 3
      %p408 = pnand %p406, %p407
      %p409 = pneg %p408
      // Predicated region
      $region9: #{tpu_custom_call.1} parent=5 // pred_check
        _
      $region10: #{tpu_custom_call.1} parent=5 // pred_check_branch
        %411 = sbr.rel (%p408) target = $region12
      $region11: #{tpu_custom_call.1} parent=5 // pred_region
        %s412 = ssub.s32 %s31, 1
        // Predicated region
        $region13: #{tpu_custom_call.1} parent=11 // pred_check
          %p413 = pneg %p78
        $region14: #{tpu_custom_call.1} parent=11 // pred_check_branch
          %415 = sbr.rel (%p413) target = $region16
        $region15: #{tpu_custom_call.1} parent=11 // pred_region
          _
        $region16: #{tpu_custom_call.1} parent=11 // pred_fallthru
          _
        // Predicated region
        $region17: #{tpu_custom_call.1} parent=11 // pred_check
          %p416 = pneg %p99
        $region18: #{tpu_custom_call.1} parent=11 // pred_check_branch
          %418 = sbr.rel (%p416) target = $region20
        $region19: #{tpu_custom_call.1} parent=11 // pred_region
          _
        $region20: #{tpu_custom_call.1} parent=11 // pred_fallthru
          _
        // Predicated region
        $region21: #{tpu_custom_call.1} parent=11 // pred_check
          %p419 = pneg %p120
        $region22: #{tpu_custom_call.1} parent=11 // pred_check_branch
          %421 = sbr.rel (%p419) target = $region24
        $region23: #{tpu_custom_call.1} parent=11 // pred_region
          _
        $region24: #{tpu_custom_call.1} parent=11 // pred_fallthru
          _
        // Predicated region
        $region25: #{tpu_custom_call.1} parent=11 // pred_check
          %p422 = pneg %p141
        $region26: #{tpu_custom_call.1} parent=11 // pred_check_branch
          %424 = sbr.rel (%p422) target = $region28
        $region27: #{tpu_custom_call.1} parent=11 // pred_region
          %426 = vsyncadd [#allocation4], 0
          %s427 = sshll.u32 %s4, 4
          %s428 = int_to_ptr.hbm [resolvable:$true] %s427
          %s429 = sshll.u32 [#allocation3], 4
          %s430 = int_to_ptr.vmem [resolvable:$true] %s429
          %435 = dma.hbm_to_vmem [thread:$0]  %s428, 3584, %s430, [#allocation4], 896, 896, 56
        $region28: #{tpu_custom_call.1} parent=11 // pred_fallthru
          _
        // Predicated region
        $region29: #{tpu_custom_call.1} parent=11 // pred_check
          %p436 = pneg %p162
        $region30: #{tpu_custom_call.1} parent=11 // pred_check_branch
          %438 = sbr.rel (%p436) target = $region32
        $region31: #{tpu_custom_call.1} parent=11 // pred_region
          _
        $region32: #{tpu_custom_call.1} parent=11 // pred_fallthru
          _
        // Predicated region
        $region33: #{tpu_custom_call.1} parent=11 // pred_check
          %p439 = pneg %p183
        $region34: #{tpu_custom_call.1} parent=11 // pred_check_branch
          %441 = sbr.rel (%p439) target = $region36
        $region35: #{tpu_custom_call.1} parent=11 // pred_region
          %443 = vsyncadd [#allocation7], 0
          %s444 = sshll.u32 %s6, 4
          %s445 = int_to_ptr.hbm [resolvable:$true] %s444
          %s446 = sshll.u32 [#allocation6], 4
          %s447 = int_to_ptr.vmem [resolvable:$true] %s446
          %452 = dma.hbm_to_vmem [thread:$0]  %s445, 6144, %s447, [#allocation7], 128, 128, 8
        $region36: #{tpu_custom_call.1} parent=11 // pred_fallthru
          _
        // Predicated region
        $region37: #{tpu_custom_call.1} parent=11 // pred_check
          %p453 = pneg %p204
        $region38: #{tpu_custom_call.1} parent=11 // pred_check_branch
          %455 = sbr.rel (%p453) target = $region40
        $region39: #{tpu_custom_call.1} parent=11 // pred_region
          _
        $region40: #{tpu_custom_call.1} parent=11 // pred_fallthru
          _
        // Predicated region
        $region41: #{tpu_custom_call.1} parent=11 // pred_check
          %p456 = pneg %p225
        $region42: #{tpu_custom_call.1} parent=11 // pred_check_branch
          %458 = sbr.rel (%p456) target = $region44
        $region43: #{tpu_custom_call.1} parent=11 // pred_region
          _
        $region44: #{tpu_custom_call.1} parent=11 // pred_fallthru
          _
        // Predicated region
        $region45: #{tpu_custom_call.1} parent=11 // pred_check
          %p459 = pneg %p246
        $region46: #{tpu_custom_call.1} parent=11 // pred_check_branch
          %461 = sbr.rel (%p459) target = $region48
        $region47: #{tpu_custom_call.1} parent=11 // pred_region
          %463 = vsyncadd [#allocation7], 0
          %s464 = sshll.u32 %s9, 4
          %s465 = int_to_ptr.hbm [resolvable:$true] %s464
          %s466 = sshll.u32 [#allocation8], 4
          %s467 = int_to_ptr.vmem [resolvable:$true] %s466
          %472 = dma.hbm_to_vmem [thread:$0]  %s465, 2048, %s467, [#allocation7], 128, 128, 8
        $region48: #{tpu_custom_call.1} parent=11 // pred_fallthru
          _
        // Predicated region
        $region49: #{tpu_custom_call.1} parent=11 // pred_check
          %p473 = pneg %p267
        $region50: #{tpu_custom_call.1} parent=11 // pred_check_branch
          %475 = sbr.rel (%p473) target = $region52
        $region51: #{tpu_custom_call.1} parent=11 // pred_region
          %477 = vsyncadd [#allocation10], 0
          %s478 = sshll.u32 %s10, 4
          %s479 = int_to_ptr.hbm [resolvable:$true] %s478
          %s480 = sshll.u32 [#allocation9], 4
          %s481 = int_to_ptr.vmem [resolvable:$true] %s480
          %486 = dma.hbm_to_vmem [thread:$0]  %s479, 2048, %s481, [#allocation10], 128, 128, 8
        $region52: #{tpu_custom_call.1} parent=11 // pred_fallthru
          _
        // Predicated region
        $region53: #{tpu_custom_call.1} parent=11 // pred_check
          %p487 = pneg %p288
        $region54: #{tpu_custom_call.1} parent=11 // pred_check_branch
          %489 = sbr.rel (%p487) target = $region56
        $region55: #{tpu_custom_call.1} parent=11 // pred_region
          _
        $region56: #{tpu_custom_call.1} parent=11 // pred_fallthru
          _
        // Predicated region
        $region57: #{tpu_custom_call.1} parent=11 // pred_check
          %p490 = pneg %p309
        $region58: #{tpu_custom_call.1} parent=11 // pred_check_branch
          %492 = sbr.rel (%p490) target = $region60
        $region59: #{tpu_custom_call.1} parent=11 // pred_region
          %494 = vsyncadd [#allocation10], 0
          %s495 = sshll.u32 %s12, 4
          %s496 = int_to_ptr.hbm [resolvable:$true] %s495
          %s497 = sshll.u32 [#allocation11], 4
          %s498 = int_to_ptr.vmem [resolvable:$true] %s497
          %503 = dma.hbm_to_vmem [thread:$0]  %s496, 2048, %s498, [#allocation10], 128, 128, 8
        $region60: #{tpu_custom_call.1} parent=11 // pred_fallthru
          _
        // Predicated region
        $region61: #{tpu_custom_call.1} parent=11 // pred_check
          %p504 = pneg %p330
        $region62: #{tpu_custom_call.1} parent=11 // pred_check_branch
          %506 = sbr.rel (%p504) target = $region64
        $region63: #{tpu_custom_call.1} parent=11 // pred_region
          _
        $region64: #{tpu_custom_call.1} parent=11 // pred_fallthru
          _
        // Predicated region
        $region65: #{tpu_custom_call.1} parent=11 // pred_check
          %p507 = pneg %p351
        $region66: #{tpu_custom_call.1} parent=11 // pred_check_branch
          %509 = sbr.rel (%p507) target = $region68
        $region67: #{tpu_custom_call.1} parent=11 // pred_region
          %511 = vsyncadd [#allocation13], 0
          %s512 = sshll.u32 %s14, 4
          %s513 = int_to_ptr.hbm [resolvable:$true] %s512
          %s514 = sshll.u32 [#allocation12], 4
          %s515 = int_to_ptr.vmem [resolvable:$true] %s514
          %520 = dma.hbm_to_vmem [thread:$0]  %s513, 2048, %s515, [#allocation13], 128, 128, 8
        $region68: #{tpu_custom_call.1} parent=11 // pred_fallthru
          _
        // Predicated region
        $region69: #{tpu_custom_call.1} parent=11 // pred_check
          %p521 = pneg %p372
        $region70: #{tpu_custom_call.1} parent=11 // pred_check_branch
          %523 = sbr.rel (%p521) target = $region72
        $region71: #{tpu_custom_call.1} parent=11 // pred_region
          _
        $region72: #{tpu_custom_call.1} parent=11 // pred_fallthru
          _
      $region12: #{tpu_custom_call.1} parent=5 // pred_fallthru
        _
      %p524 = scmp.lt.s32.totalorder %s31, 2
      // Predicated region
      $region73: #{tpu_custom_call.1} parent=5 // pred_check
        %p525 = pneg %p524
      $region74: #{tpu_custom_call.1} parent=5 // pred_check_branch
        %527 = sbr.rel (%p525) target = $region76
      $region75: #{tpu_custom_call.1} parent=5 // pred_region
        // Predicated region
        $region77: #{tpu_custom_call.1} parent=75 // pred_check
          %p528 = pneg %p51
        $region78: #{tpu_custom_call.1} parent=75 // pred_check_branch
          %530 = sbr.rel (%p528) target = $region80
        $region79: #{tpu_custom_call.1} parent=75 // pred_region
          %p531 = scmp.lt.s32.totalorder %s31, 1
          %s532 = scalar_select %p531, %s31, 1
          %s533 = smul.addr %s532, 3
          %s534 = scalar_lea.vmem %s0, %s533
        $region80: #{tpu_custom_call.1} parent=75 // pred_fallthru
          _
      $region76: #{tpu_custom_call.1} parent=5 // pred_fallthru
        _
      %p535 = scmp.le.s32.totalorder 1, %s31
      %p536 = scmp.lt.s32.totalorder %s31, 3
      %p537 = pnand %p535, %p536
      %p538 = pneg %p537
      // Predicated region
      $region81: #{tpu_custom_call.1} parent=5 // pred_check
        _
      $region82: #{tpu_custom_call.1} parent=5 // pred_check_branch
        %540 = sbr.rel (%p537) target = $region84
      $region83: #{tpu_custom_call.1} parent=5 // pred_region
        %s541 = ssub.s32 %s31, 1
        // Predicated region
        $region85: #{tpu_custom_call.1} parent=83 // pred_check
          %p542 = pneg %p141
        $region86: #{tpu_custom_call.1} parent=83 // pred_check_branch
          %544 = sbr.rel (%p542) target = $region88
        $region87: #{tpu_custom_call.1} parent=83 // pred_region
          %546 = dma.done [#allocation4], 3584
        $region88: #{tpu_custom_call.1} parent=83 // pred_fallthru
          _
        // Predicated region
        $region89: #{tpu_custom_call.1} parent=83 // pred_check
          %p547 = pneg %p183
        $region90: #{tpu_custom_call.1} parent=83 // pred_check_branch
          %549 = sbr.rel (%p547) target = $region92
        $region91: #{tpu_custom_call.1} parent=83 // pred_region
          %551 = dma.done [#allocation7], 6144
        $region92: #{tpu_custom_call.1} parent=83 // pred_fallthru
          _
        // Predicated region
        $region93: #{tpu_custom_call.1} parent=83 // pred_check
          %p552 = pneg %p246
        $region94: #{tpu_custom_call.1} parent=83 // pred_check_branch
          %554 = sbr.rel (%p552) target = $region96
        $region95: #{tpu_custom_call.1} parent=83 // pred_region
          %556 = dma.done [#allocation7], 2048
        $region96: #{tpu_custom_call.1} parent=83 // pred_fallthru
          _
        // Predicated region
        $region97: #{tpu_custom_call.1} parent=83 // pred_check
          %p557 = pneg %p267
        $region98: #{tpu_custom_call.1} parent=83 // pred_check_branch
          %559 = sbr.rel (%p557) target = $region100
        $region99: #{tpu_custom_call.1} parent=83 // pred_region
          %561 = dma.done [#allocation10], 2048
        $region100: #{tpu_custom_call.1} parent=83 // pred_fallthru
          _
        // Predicated region
        $region101: #{tpu_custom_call.1} parent=83 // pred_check
          %p562 = pneg %p309
        $region102: #{tpu_custom_call.1} parent=83 // pred_check_branch
          %564 = sbr.rel (%p562) target = $region104
        $region103: #{tpu_custom_call.1} parent=83 // pred_region
          %566 = dma.done [#allocation10], 2048
        $region104: #{tpu_custom_call.1} parent=83 // pred_fallthru
          _
        // Predicated region
        $region105: #{tpu_custom_call.1} parent=83 // pred_check
          %p567 = pneg %p351
        $region106: #{tpu_custom_call.1} parent=83 // pred_check_branch
          %569 = sbr.rel (%p567) target = $region108
        $region107: #{tpu_custom_call.1} parent=83 // pred_region
          %571 = dma.done [#allocation13], 2048
        $region108: #{tpu_custom_call.1} parent=83 // pred_fallthru
          _
        %p572 = scmp.lt.s32.totalorder %s36, 1
        %s573 = scalar_select %p572, %s36, 1
        %s574 = smul.addr %s573, 3
        %s575 = scalar_lea.vmem %s0, %s574
        %p576 = pneg %p57
        %p577 = pneg %p54
        %p578 = pneg %p78
        %p579 = pneg %p75
        %p580 = pneg %p99
        %p581 = pneg %p96
        %p582 = pneg %p120
        %p583 = pneg %p117
        %p584 = pneg %p141
        %p585 = pneg %p138
        %p586 = pneg %p162
        %p587 = pneg %p159
        %p588 = pneg %p183
        %p589 = pneg %p180
        %p590 = pneg %p204
        %p591 = pneg %p201
        %p592 = pneg %p225
        %p593 = pneg %p222
        %p594 = pneg %p246
        %p595 = pneg %p243
        %p596 = pneg %p267
        %p597 = pneg %p264
        %p598 = pneg %p288
        %p599 = pneg %p285
        %p600 = pneg %p309
        %p601 = pneg %p306
        %p602 = pneg %p330
        %p603 = pneg %p327
        %p604 = pneg %p351
        %p605 = pneg %p348
        %p606 = pneg %p372
        %p607 = pneg %p369
        %p608 = pneg %p398
        %p609 = pneg %p395
        %s610 = sand.u32 %s385, 1
        %s611 = scalar_lea.sflag [#allocation5], %s610
        %s612 = sand.u32 %s385, 1
        %s613 = scalar_lea.vmem [#allocation14], %s612
        %p614 = scmp.lt.s32.totalorder %s36, 1
        %s615 = scalar_select %p614, %s36, 1
        %s616 = smul.addr %s615, 3
        %s617 = scalar_lea.vmem %s0, %s616
        %v618 = vld [vmem:[%s617] sm:$0x7]
        %v619 = vld [vmem:[%s2] sm:$0xff]
        %v620 = vld [vmem:[%s2 + $0x8] sm:$0xff]
        %v621 = vld [vmem:[%s2 + $0x10] sm:$0xff]
        %v622 = vld [vmem:[%s2 + $0x18] sm:$0xff]
        %624 = vset.pattern.permute.xlu0 0
        %625 = vperm.xlu0 %624, %v619
        %v626 = vpop.permute.xlu0 %625
        %629 = vset.pattern.permute.xlu0 0
        %630 = vperm.xlu0 %629, %v620
        %v631 = vpop.permute.xlu0 %630
        %634 = vset.pattern.permute.xlu0 0
        %635 = vperm.xlu0 %634, %v621
        %v636 = vpop.permute.xlu0 %635
        %639 = vset.pattern.permute.xlu0 0
        %640 = vperm.xlu0 %639, %v622
        %v641 = vpop.permute.xlu0 %640
        %v644 = vperm.slane %v618, 0
        %v645 = vperm.slane %v618, 1
        %v646 = vperm.slane %v618, 2
        %v650 = vmul.f32 %v626, %v644
        %v651 = vmul.f32 %v626, %v645
        %v652 = vmul.f32 %v626, %v646
        %v653 = vmul.f32 %v631, %v644
        %v654 = vmul.f32 %v631, %v645
        %v655 = vmul.f32 %v631, %v646
        %v656 = vmul.f32 %v636, %v644
        %v657 = vmul.f32 %v636, %v645
        %v658 = vmul.f32 %v636, %v646
        %v659 = vmul.f32 %v641, %v644
        %v660 = vmul.f32 %v641, %v645
        %v661 = vmul.f32 %v641, %v646
        %v662 = vld [vmem:[%s3] sm:$0xff]
        %v663 = vld [vmem:[%s3 + $0x8] sm:$0xff]
        %v664 = vld [vmem:[%s3 + $0x10] sm:$0xff]
        %v665 = vld [vmem:[%s3 + $0x18] sm:$0xff]
        %667 = vset.pattern.permute.xlu0 0
        %668 = vperm.xlu0 %667, %v662
        %v669 = vpop.permute.xlu0 %668
        %672 = vset.pattern.permute.xlu0 0
        %673 = vperm.xlu0 %672, %v663
        %v674 = vpop.permute.xlu0 %673
        %677 = vset.pattern.permute.xlu0 0
        %678 = vperm.xlu0 %677, %v664
        %v679 = vpop.permute.xlu0 %678
        %682 = vset.pattern.permute.xlu0 0
        %683 = vperm.xlu0 %682, %v665
        %v684 = vpop.permute.xlu0 %683
        %v686 = vadd.f32 %v650, %v669
        %v687 = vadd.f32 %v651, %v669
        %v688 = vadd.f32 %v652, %v669
        %v689 = vadd.f32 %v653, %v674
        %v690 = vadd.f32 %v654, %v674
        %v691 = vadd.f32 %v655, %v674
        %v692 = vadd.f32 %v656, %v679
        %v693 = vadd.f32 %v657, %v679
        %v694 = vadd.f32 %v658, %v679
        %v695 = vadd.f32 %v659, %v684
        %v696 = vadd.f32 %v660, %v684
        %v697 = vadd.f32 %v661, %v684
        %v698 = vmax.f32 %v686, 0.0
        %v699 = vmax.f32 %v687, 0.0
        %v700 = vmax.f32 %v688, 0.0
        %v701 = vmax.f32 %v689, 0.0
        %v702 = vmax.f32 %v690, 0.0
        %v703 = vmax.f32 %v691, 0.0
        %v704 = vmax.f32 %v692, 0.0
        %v705 = vmax.f32 %v693, 0.0
        %v706 = vmax.f32 %v694, 0.0
        %v707 = vmax.f32 %v695, 0.0
        %v708 = vmax.f32 %v696, 0.0
        %v709 = vmax.f32 %v697, 0.0
        %v710 = vld [vmem:[%s1] sm:$0x7]
        %v712 = vperm.slane %v710, 0
        %v713 = vperm.slane %v710, 1
        %v714 = vperm.slane %v710, 2
        %v718 = vmul.f32 %v698, %v712
        %v719 = vmul.f32 %v699, %v713
        %v720 = vmul.f32 %v700, %v714
        %v721 = vmul.f32 %v701, %v712
        %v722 = vmul.f32 %v702, %v713
        %v723 = vmul.f32 %v703, %v714
        %v724 = vmul.f32 %v704, %v712
        %v725 = vmul.f32 %v705, %v713
        %v726 = vmul.f32 %v706, %v714
        %v727 = vmul.f32 %v707, %v712
        %v728 = vmul.f32 %v708, %v713
        %v729 = vmul.f32 %v709, %v714
        %734 = vrot.lane.b32.xlu0 %v720, 50
        %v735 = vpop.permute.xlu0 %734
        %736 = vrot.lane.b32.xlu0 %v723, 50
        %v737 = vpop.permute.xlu0 %736
        %738 = vrot.lane.b32.xlu0 %v726, 50
        %v739 = vpop.permute.xlu0 %738
        %740 = vrot.lane.b32.xlu0 %v729, 50
        %v741 = vpop.permute.xlu0 %740
        %754 = vrot.lane.b32.xlu0 %v718, 50
        %v755 = vpop.permute.xlu0 %754
        %756 = vrot.lane.b32.xlu0 %v719, 50
        %v757 = vpop.permute.xlu0 %756
        %758 = vrot.lane.b32.xlu0 %v721, 50
        %v759 = vpop.permute.xlu0 %758
        %760 = vrot.lane.b32.xlu0 %v722, 50
        %v761 = vpop.permute.xlu0 %760
        %762 = vrot.lane.b32.xlu0 %v724, 50
        %v763 = vpop.permute.xlu0 %762
        %764 = vrot.lane.b32.xlu0 %v725, 50
        %v765 = vpop.permute.xlu0 %764
        %766 = vrot.lane.b32.xlu0 %v727, 50
        %v767 = vpop.permute.xlu0 %766
        %768 = vrot.lane.b32.xlu0 %v728, 50
        %v769 = vpop.permute.xlu0 %768
        %vm770 = vcmask 408576
        %v771 = vsel %vm770, %v755, %v757
        %v772 = vsel %vm770, %v757, %v735
        %v773 = vsel %vm770, %v759, %v761
        %v774 = vsel %vm770, %v761, %v737
        %v775 = vsel %vm770, %v763, %v765
        %v776 = vsel %vm770, %v765, %v739
        %v777 = vsel %vm770, %v767, %v769
        %v778 = vsel %vm770, %v769, %v741
        %v791 = vsel %vm770, %v735, %v755
        %v792 = vsel %vm770, %v737, %v759
        %v793 = vsel %vm770, %v739, %v763
        %v794 = vsel %vm770, %v741, %v767
        %795 = vrot.lane.b32.xlu0 %v720, 49
        %v796 = vpop.permute.xlu0 %795
        %797 = vrot.lane.b32.xlu0 %v723, 49
        %v798 = vpop.permute.xlu0 %797
        %799 = vrot.lane.b32.xlu0 %v726, 49
        %v800 = vpop.permute.xlu0 %799
        %801 = vrot.lane.b32.xlu0 %v729, 49
        %v802 = vpop.permute.xlu0 %801
        %807 = vrot.lane.b32.xlu0 %v718, 49
        %v808 = vpop.permute.xlu0 %807
        %809 = vrot.lane.b32.xlu0 %v719, 49
        %v810 = vpop.permute.xlu0 %809
        %811 = vrot.lane.b32.xlu0 %v721, 49
        %v812 = vpop.permute.xlu0 %811
        %813 = vrot.lane.b32.xlu0 %v722, 49
        %v814 = vpop.permute.xlu0 %813
        %815 = vrot.lane.b32.xlu0 %v724, 49
        %v816 = vpop.permute.xlu0 %815
        %817 = vrot.lane.b32.xlu0 %v725, 49
        %v818 = vpop.permute.xlu0 %817
        %819 = vrot.lane.b32.xlu0 %v727, 49
        %v820 = vpop.permute.xlu0 %819
        %821 = vrot.lane.b32.xlu0 %v728, 49
        %v822 = vpop.permute.xlu0 %821
        %vm823 = vcmask 400384
        %v824 = vsel %vm823, %v808, %v810
        %v825 = vsel %vm823, %v810, %v796
        %v826 = vsel %vm823, %v812, %v814
        %v827 = vsel %vm823, %v814, %v798
        %v828 = vsel %vm823, %v816, %v818
        %v829 = vsel %vm823, %v818, %v800
        %v830 = vsel %vm823, %v820, %v822
        %v831 = vsel %vm823, %v822, %v802
        %v844 = vsel %vm823, %v796, %v808
        %v845 = vsel %vm823, %v798, %v812
        %v846 = vsel %vm823, %v800, %v816
        %v847 = vsel %vm823, %v802, %v820
        %848 = vrot.lane.b32.xlu0 %v720, 48
        %v849 = vpop.permute.xlu0 %848
        %850 = vrot.lane.b32.xlu0 %v723, 48
        %v851 = vpop.permute.xlu0 %850
        %852 = vrot.lane.b32.xlu0 %v726, 48
        %v853 = vpop.permute.xlu0 %852
        %854 = vrot.lane.b32.xlu0 %v729, 48
        %v855 = vpop.permute.xlu0 %854
        %860 = vrot.lane.b32.xlu0 %v718, 48
        %v861 = vpop.permute.xlu0 %860
        %862 = vrot.lane.b32.xlu0 %v719, 48
        %v863 = vpop.permute.xlu0 %862
        %864 = vrot.lane.b32.xlu0 %v721, 48
        %v865 = vpop.permute.xlu0 %864
        %866 = vrot.lane.b32.xlu0 %v722, 48
        %v867 = vpop.permute.xlu0 %866
        %868 = vrot.lane.b32.xlu0 %v724, 48
        %v869 = vpop.permute.xlu0 %868
        %870 = vrot.lane.b32.xlu0 %v725, 48
        %v871 = vpop.permute.xlu0 %870
        %872 = vrot.lane.b32.xlu0 %v727, 48
        %v873 = vpop.permute.xlu0 %872
        %874 = vrot.lane.b32.xlu0 %v728, 48
        %v875 = vpop.permute.xlu0 %874
        %vm876 = vcmask 392192
        %v877 = vsel %vm876, %v861, %v863
        %v878 = vsel %vm876, %v863, %v849
        %v879 = vsel %vm876, %v865, %v867
        %v880 = vsel %vm876, %v867, %v851
        %v881 = vsel %vm876, %v869, %v871
        %v882 = vsel %vm876, %v871, %v853
        %v883 = vsel %vm876, %v873, %v875
        %v884 = vsel %vm876, %v875, %v855
        %v897 = vsel %vm876, %v849, %v861
        %v898 = vsel %vm876, %v851, %v865
        %v899 = vsel %vm876, %v853, %v869
        %v900 = vsel %vm876, %v855, %v873
        %901 = vrot.lane.b32.xlu0 %v720, 47
        %v902 = vpop.permute.xlu0 %901
        %903 = vrot.lane.b32.xlu0 %v723, 47
        %v904 = vpop.permute.xlu0 %903
        %905 = vrot.lane.b32.xlu0 %v726, 47
        %v906 = vpop.permute.xlu0 %905
        %907 = vrot.lane.b32.xlu0 %v729, 47
        %v908 = vpop.permute.xlu0 %907
        %913 = vrot.lane.b32.xlu0 %v718, 47
        %v914 = vpop.permute.xlu0 %913
        %915 = vrot.lane.b32.xlu0 %v719, 47
        %v916 = vpop.permute.xlu0 %915
        %917 = vrot.lane.b32.xlu0 %v721, 47
        %v918 = vpop.permute.xlu0 %917
        %919 = vrot.lane.b32.xlu0 %v722, 47
        %v920 = vpop.permute.xlu0 %919
        %921 = vrot.lane.b32.xlu0 %v724, 47
        %v922 = vpop.permute.xlu0 %921
        %923 = vrot.lane.b32.xlu0 %v725, 47
        %v924 = vpop.permute.xlu0 %923
        %925 = vrot.lane.b32.xlu0 %v727, 47
        %v926 = vpop.permute.xlu0 %925
        %927 = vrot.lane.b32.xlu0 %v728, 47
        %v928 = vpop.permute.xlu0 %927
        %vm929 = vcmask 384000
        %v930 = vsel %vm929, %v914, %v916
        %v931 = vsel %vm929, %v916, %v902
        %v932 = vsel %vm929, %v918, %v920
        %v933 = vsel %vm929, %v920, %v904
        %v934 = vsel %vm929, %v922, %v924
        %v935 = vsel %vm929, %v924, %v906
        %v936 = vsel %vm929, %v926, %v928
        %v937 = vsel %vm929, %v928, %v908
        %v950 = vsel %vm929, %v902, %v914
        %v951 = vsel %vm929, %v904, %v918
        %v952 = vsel %vm929, %v906, %v922
        %v953 = vsel %vm929, %v908, %v926
        %954 = vrot.lane.b32.xlu0 %v720, 46
        %v955 = vpop.permute.xlu0 %954
        %956 = vrot.lane.b32.xlu0 %v723, 46
        %v957 = vpop.permute.xlu0 %956
        %958 = vrot.lane.b32.xlu0 %v726, 46
        %v959 = vpop.permute.xlu0 %958
        %960 = vrot.lane.b32.xlu0 %v729, 46
        %v961 = vpop.permute.xlu0 %960
        %966 = vrot.lane.b32.xlu0 %v718, 46
        %v967 = vpop.permute.xlu0 %966
        %968 = vrot.lane.b32.xlu0 %v719, 46
        %v969 = vpop.permute.xlu0 %968
        %970 = vrot.lane.b32.xlu0 %v721, 46
        %v971 = vpop.permute.xlu0 %970
        %972 = vrot.lane.b32.xlu0 %v722, 46
        %v973 = vpop.permute.xlu0 %972
        %974 = vrot.lane.b32.xlu0 %v724, 46
        %v975 = vpop.permute.xlu0 %974
        %976 = vrot.lane.b32.xlu0 %v725, 46
        %v977 = vpop.permute.xlu0 %976
        %978 = vrot.lane.b32.xlu0 %v727, 46
        %v979 = vpop.permute.xlu0 %978
        %980 = vrot.lane.b32.xlu0 %v728, 46
        %v981 = vpop.permute.xlu0 %980
        %vm982 = vcmask 375808
        %v983 = vsel %vm982, %v967, %v969
        %v984 = vsel %vm982, %v969, %v955
        %v985 = vsel %vm982, %v971, %v973
        %v986 = vsel %vm982, %v973, %v957
        %v987 = vsel %vm982, %v975, %v977
        %v988 = vsel %vm982, %v977, %v959
        %v989 = vsel %vm982, %v979, %v981
        %v990 = vsel %vm982, %v981, %v961
        %v1003 = vsel %vm982, %v955, %v967
        %v1004 = vsel %vm982, %v957, %v971
        %v1005 = vsel %vm982, %v959, %v975
        %v1006 = vsel %vm982, %v961, %v979
        %1007 = vrot.lane.b32.xlu0 %v720, 26
        %v1008 = vpop.permute.xlu0 %1007
        %1009 = vrot.lane.b32.xlu0 %v723, 26
        %v1010 = vpop.permute.xlu0 %1009
        %1011 = vrot.lane.b32.xlu0 %v726, 26
        %v1012 = vpop.permute.xlu0 %1011
        %1013 = vrot.lane.b32.xlu0 %v729, 26
        %v1014 = vpop.permute.xlu0 %1013
        %1019 = vrot.lane.b32.xlu0 %v718, 26
        %v1020 = vpop.permute.xlu0 %1019
        %1021 = vrot.lane.b32.xlu0 %v719, 26
        %v1022 = vpop.permute.xlu0 %1021
        %1023 = vrot.lane.b32.xlu0 %v721, 26
        %v1024 = vpop.permute.xlu0 %1023
        %1025 = vrot.lane.b32.xlu0 %v722, 26
        %v1026 = vpop.permute.xlu0 %1025
        %1027 = vrot.lane.b32.xlu0 %v724, 26
        %v1028 = vpop.permute.xlu0 %1027
        %1029 = vrot.lane.b32.xlu0 %v725, 26
        %v1030 = vpop.permute.xlu0 %1029
        %1031 = vrot.lane.b32.xlu0 %v727, 26
        %v1032 = vpop.permute.xlu0 %1031
        %1033 = vrot.lane.b32.xlu0 %v728, 26
        %v1034 = vpop.permute.xlu0 %1033
        %vm1035 = vcmask 211968
        %v1036 = vsel %vm1035, %v1020, %v1022
        %v1037 = vsel %vm1035, %v1022, %v1008
        %v1038 = vsel %vm1035, %v1024, %v1026
        %v1039 = vsel %vm1035, %v1026, %v1010
        %v1040 = vsel %vm1035, %v1028, %v1030
        %v1041 = vsel %vm1035, %v1030, %v1012
        %v1042 = vsel %vm1035, %v1032, %v1034
        %v1043 = vsel %vm1035, %v1034, %v1014
        %v1056 = vsel %vm1035, %v1008, %v1020
        %v1057 = vsel %vm1035, %v1010, %v1024
        %v1058 = vsel %vm1035, %v1012, %v1028
        %v1059 = vsel %vm1035, %v1014, %v1032
        %1060 = vrot.lane.b32.xlu0 %v720, 25
        %v1061 = vpop.permute.xlu0 %1060
        %1062 = vrot.lane.b32.xlu0 %v723, 25
        %v1063 = vpop.permute.xlu0 %1062
        %1064 = vrot.lane.b32.xlu0 %v726, 25
        %v1065 = vpop.permute.xlu0 %1064
        %1066 = vrot.lane.b32.xlu0 %v729, 25
        %v1067 = vpop.permute.xlu0 %1066
        %1072 = vrot.lane.b32.xlu0 %v718, 25
        %v1073 = vpop.permute.xlu0 %1072
        %1074 = vrot.lane.b32.xlu0 %v719, 25
        %v1075 = vpop.permute.xlu0 %1074
        %1076 = vrot.lane.b32.xlu0 %v721, 25
        %v1077 = vpop.permute.xlu0 %1076
        %1078 = vrot.lane.b32.xlu0 %v722, 25
        %v1079 = vpop.permute.xlu0 %1078
        %1080 = vrot.lane.b32.xlu0 %v724, 25
        %v1081 = vpop.permute.xlu0 %1080
        %1082 = vrot.lane.b32.xlu0 %v725, 25
        %v1083 = vpop.permute.xlu0 %1082
        %1084 = vrot.lane.b32.xlu0 %v727, 25
        %v1085 = vpop.permute.xlu0 %1084
        %1086 = vrot.lane.b32.xlu0 %v728, 25
        %v1087 = vpop.permute.xlu0 %1086
        %vm1088 = vcmask 203776
        %v1089 = vsel %vm1088, %v1073, %v1075
        %v1090 = vsel %vm1088, %v1075, %v1061
        %v1091 = vsel %vm1088, %v1077, %v1079
        %v1092 = vsel %vm1088, %v1079, %v1063
        %v1093 = vsel %vm1088, %v1081, %v1083
        %v1094 = vsel %vm1088, %v1083, %v1065
        %v1095 = vsel %vm1088, %v1085, %v1087
        %v1096 = vsel %vm1088, %v1087, %v1067
        %v1109 = vsel %vm1088, %v1061, %v1073
        %v1110 = vsel %vm1088, %v1063, %v1077
        %v1111 = vsel %vm1088, %v1065, %v1081
        %v1112 = vsel %vm1088, %v1067, %v1085
        %1113 = vrot.lane.b32.xlu0 %v720, 24
        %v1114 = vpop.permute.xlu0 %1113
        %1115 = vrot.lane.b32.xlu0 %v723, 24
        %v1116 = vpop.permute.xlu0 %1115
        %1117 = vrot.lane.b32.xlu0 %v726, 24
        %v1118 = vpop.permute.xlu0 %1117
        %1119 = vrot.lane.b32.xlu0 %v729, 24
        %v1120 = vpop.permute.xlu0 %1119
        %1125 = vrot.lane.b32.xlu0 %v718, 24
        %v1126 = vpop.permute.xlu0 %1125
        %1127 = vrot.lane.b32.xlu0 %v719, 24
        %v1128 = vpop.permute.xlu0 %1127
        %1129 = vrot.lane.b32.xlu0 %v721, 24
        %v1130 = vpop.permute.xlu0 %1129
        %1131 = vrot.lane.b32.xlu0 %v722, 24
        %v1132 = vpop.permute.xlu0 %1131
        %1133 = vrot.lane.b32.xlu0 %v724, 24
        %v1134 = vpop.permute.xlu0 %1133
        %1135 = vrot.lane.b32.xlu0 %v725, 24
        %v1136 = vpop.permute.xlu0 %1135
        %1137 = vrot.lane.b32.xlu0 %v727, 24
        %v1138 = vpop.permute.xlu0 %1137
        %1139 = vrot.lane.b32.xlu0 %v728, 24
        %v1140 = vpop.permute.xlu0 %1139
        %vm1141 = vcmask 195584
        %v1142 = vsel %vm1141, %v1126, %v1128
        %v1143 = vsel %vm1141, %v1128, %v1114
        %v1144 = vsel %vm1141, %v1130, %v1132
        %v1145 = vsel %vm1141, %v1132, %v1116
        %v1146 = vsel %vm1141, %v1134, %v1136
        %v1147 = vsel %vm1141, %v1136, %v1118
        %v1148 = vsel %vm1141, %v1138, %v1140
        %v1149 = vsel %vm1141, %v1140, %v1120
        %v1162 = vsel %vm1141, %v1114, %v1126
        %v1163 = vsel %vm1141, %v1116, %v1130
        %v1164 = vsel %vm1141, %v1118, %v1134
        %v1165 = vsel %vm1141, %v1120, %v1138
        %v1166 = vld [vmem:[#allocation3] sm:$0xff]
        %v1167 = vld [vmem:[#allocation3 + $0x8] sm:$0xff]
        %v1168 = vld [vmem:[#allocation3 + $0x38] sm:$0xff]
        %v1169 = vld [vmem:[#allocation3 + $0x40] sm:$0xff]
        %v1170 = vld [vmem:[#allocation3 + $0x70] sm:$0xff]
        %v1171 = vld [vmem:[#allocation3 + $0x78] sm:$0xff]
        %v1172 = vld [vmem:[#allocation3 + $0xa8] sm:$0xff]
        %v1173 = vld [vmem:[#allocation3 + $0xb0] sm:$0xff]
        %1174 = vrot.lane.b32.xlu0 %v720, 23
        %v1175 = vpop.permute.xlu0 %1174
        %1176 = vrot.lane.b32.xlu0 %v723, 23
        %v1177 = vpop.permute.xlu0 %1176
        %1178 = vrot.lane.b32.xlu0 %v726, 23
        %v1179 = vpop.permute.xlu0 %1178
        %1180 = vrot.lane.b32.xlu0 %v729, 23
        %v1181 = vpop.permute.xlu0 %1180
        %1186 = vrot.lane.b32.xlu0 %v718, 23
        %v1187 = vpop.permute.xlu0 %1186
        %1188 = vrot.lane.b32.xlu0 %v719, 23
        %v1189 = vpop.permute.xlu0 %1188
        %1190 = vrot.lane.b32.xlu0 %v721, 23
        %v1191 = vpop.permute.xlu0 %1190
        %1192 = vrot.lane.b32.xlu0 %v722, 23
        %v1193 = vpop.permute.xlu0 %1192
        %1194 = vrot.lane.b32.xlu0 %v724, 23
        %v1195 = vpop.permute.xlu0 %1194
        %1196 = vrot.lane.b32.xlu0 %v725, 23
        %v1197 = vpop.permute.xlu0 %1196
        %1198 = vrot.lane.b32.xlu0 %v727, 23
        %v1199 = vpop.permute.xlu0 %1198
        %1200 = vrot.lane.b32.xlu0 %v728, 23
        %v1201 = vpop.permute.xlu0 %1200
        %vm1202 = vcmask 187392
        %v1203 = vsel %vm1202, %v1187, %v1189
        %v1204 = vsel %vm1202, %v1189, %v1175
        %v1205 = vsel %vm1202, %v1191, %v1193
        %v1206 = vsel %vm1202, %v1193, %v1177
        %v1207 = vsel %vm1202, %v1195, %v1197
        %v1208 = vsel %vm1202, %v1197, %v1179
        %v1209 = vsel %vm1202, %v1199, %v1201
        %v1210 = vsel %vm1202, %v1201, %v1181
        %v1223 = vsel %vm1202, %v1175, %v1187
        %v1224 = vsel %vm1202, %v1177, %v1191
        %v1225 = vsel %vm1202, %v1179, %v1195
        %v1226 = vsel %vm1202, %v1181, %v1199
        %1227 = vrot.lane.b32.xlu0 %v720, 22
        %v1228 = vpop.permute.xlu0 %1227
        %1229 = vrot.lane.b32.xlu0 %v723, 22
        %v1230 = vpop.permute.xlu0 %1229
        %1231 = vrot.lane.b32.xlu0 %v726, 22
        %v1232 = vpop.permute.xlu0 %1231
        %1233 = vrot.lane.b32.xlu0 %v729, 22
        %v1234 = vpop.permute.xlu0 %1233
        %1239 = vrot.lane.b32.xlu0 %v718, 22
        %v1240 = vpop.permute.xlu0 %1239
        %1241 = vrot.lane.b32.xlu0 %v719, 22
        %v1242 = vpop.permute.xlu0 %1241
        %1243 = vrot.lane.b32.xlu0 %v721, 22
        %v1244 = vpop.permute.xlu0 %1243
        %1245 = vrot.lane.b32.xlu0 %v722, 22
        %v1246 = vpop.permute.xlu0 %1245
        %1247 = vrot.lane.b32.xlu0 %v724, 22
        %v1248 = vpop.permute.xlu0 %1247
        %1249 = vrot.lane.b32.xlu0 %v725, 22
        %v1250 = vpop.permute.xlu0 %1249
        %1251 = vrot.lane.b32.xlu0 %v727, 22
        %v1252 = vpop.permute.xlu0 %1251
        %1253 = vrot.lane.b32.xlu0 %v728, 22
        %v1254 = vpop.permute.xlu0 %1253
        %vm1255 = vcmask 179200
        %v1256 = vsel %vm1255, %v1240, %v1242
        %v1257 = vsel %vm1255, %v1242, %v1228
        %v1258 = vsel %vm1255, %v1244, %v1246
        %v1259 = vsel %vm1255, %v1246, %v1230
        %v1260 = vsel %vm1255, %v1248, %v1250
        %v1261 = vsel %vm1255, %v1250, %v1232
        %v1262 = vsel %vm1255, %v1252, %v1254
        %v1263 = vsel %vm1255, %v1254, %v1234
        %v1276 = vsel %vm1255, %v1228, %v1240
        %v1277 = vsel %vm1255, %v1230, %v1244
        %v1278 = vsel %vm1255, %v1232, %v1248
        %v1279 = vsel %vm1255, %v1234, %v1252
        %1280 = vrot.lane.b32.xlu0 %v720, 2
        %v1281 = vpop.permute.xlu0 %1280
        %1282 = vrot.lane.b32.xlu0 %v723, 2
        %v1283 = vpop.permute.xlu0 %1282
        %1284 = vrot.lane.b32.xlu0 %v726, 2
        %v1285 = vpop.permute.xlu0 %1284
        %1286 = vrot.lane.b32.xlu0 %v729, 2
        %v1287 = vpop.permute.xlu0 %1286
        %1292 = vrot.lane.b32.xlu0 %v718, 2
        %v1293 = vpop.permute.xlu0 %1292
        %1294 = vrot.lane.b32.xlu0 %v719, 2
        %v1295 = vpop.permute.xlu0 %1294
        %1296 = vrot.lane.b32.xlu0 %v721, 2
        %v1297 = vpop.permute.xlu0 %1296
        %1298 = vrot.lane.b32.xlu0 %v722, 2
        %v1299 = vpop.permute.xlu0 %1298
        %1300 = vrot.lane.b32.xlu0 %v724, 2
        %v1301 = vpop.permute.xlu0 %1300
        %1302 = vrot.lane.b32.xlu0 %v725, 2
        %v1303 = vpop.permute.xlu0 %1302
        %1304 = vrot.lane.b32.xlu0 %v727, 2
        %v1305 = vpop.permute.xlu0 %1304
        %1306 = vrot.lane.b32.xlu0 %v728, 2
        %v1307 = vpop.permute.xlu0 %1306
        %vm1308 = vcmask 15360
        %v1309 = vsel %vm1308, %v1293, %v1295
        %v1310 = vsel %vm1308, %v1295, %v1281
        %v1311 = vsel %vm1308, %v1297, %v1299
        %v1312 = vsel %vm1308, %v1299, %v1283
        %v1313 = vsel %vm1308, %v1301, %v1303
        %v1314 = vsel %vm1308, %v1303, %v1285
        %v1315 = vsel %vm1308, %v1305, %v1307
        %v1316 = vsel %vm1308, %v1307, %v1287
        %v1329 = vsel %vm1308, %v1281, %v1293
        %v1330 = vsel %vm1308, %v1283, %v1297
        %v1331 = vsel %vm1308, %v1285, %v1301
        %v1332 = vsel %vm1308, %v1287, %v1305
        %1333 = vrot.lane.b32.xlu0 %v720, 1
        %v1334 = vpop.permute.xlu0 %1333
        %1335 = vrot.lane.b32.xlu0 %v723, 1
        %v1336 = vpop.permute.xlu0 %1335
        %1337 = vrot.lane.b32.xlu0 %v726, 1
        %v1338 = vpop.permute.xlu0 %1337
        %1339 = vrot.lane.b32.xlu0 %v729, 1
        %v1340 = vpop.permute.xlu0 %1339
        %1345 = vrot.lane.b32.xlu0 %v718, 1
        %v1346 = vpop.permute.xlu0 %1345
        %1347 = vrot.lane.b32.xlu0 %v719, 1
        %v1348 = vpop.permute.xlu0 %1347
        %1349 = vrot.lane.b32.xlu0 %v721, 1
        %v1350 = vpop.permute.xlu0 %1349
        %1351 = vrot.lane.b32.xlu0 %v722, 1
        %v1352 = vpop.permute.xlu0 %1351
        %1353 = vrot.lane.b32.xlu0 %v724, 1
        %v1354 = vpop.permute.xlu0 %1353
        %1355 = vrot.lane.b32.xlu0 %v725, 1
        %v1356 = vpop.permute.xlu0 %1355
        %1357 = vrot.lane.b32.xlu0 %v727, 1
        %v1358 = vpop.permute.xlu0 %1357
        %1359 = vrot.lane.b32.xlu0 %v728, 1
        %v1360 = vpop.permute.xlu0 %1359
        %vm1361 = vcmask 7168
        %v1362 = vsel %vm1361, %v1346, %v1348
        %v1363 = vsel %vm1361, %v1348, %v1334
        %v1364 = vsel %vm1361, %v1350, %v1352
        %v1365 = vsel %vm1361, %v1352, %v1336
        %v1366 = vsel %vm1361, %v1354, %v1356
        %v1367 = vsel %vm1361, %v1356, %v1338
        %v1368 = vsel %vm1361, %v1358, %v1360
        %v1369 = vsel %vm1361, %v1360, %v1340
        %v1382 = vsel %vm1361, %v1334, %v1346
        %v1383 = vsel %vm1361, %v1336, %v1350
        %v1384 = vsel %vm1361, %v1338, %v1354
        %v1385 = vsel %vm1361, %v1340, %v1358
        %1386 = vrot.lane.b32.xlu0 %v718, 127
        %v1387 = vpop.permute.xlu0 %1386
        %1388 = vrot.lane.b32.xlu0 %v719, 127
        %v1389 = vpop.permute.xlu0 %1388
        %1390 = vrot.lane.b32.xlu0 %v720, 127
        %v1391 = vpop.permute.xlu0 %1390
        %1392 = vrot.lane.b32.xlu0 %v721, 127
        %v1393 = vpop.permute.xlu0 %1392
        %1394 = vrot.lane.b32.xlu0 %v722, 127
        %v1395 = vpop.permute.xlu0 %1394
        %1396 = vrot.lane.b32.xlu0 %v723, 127
        %v1397 = vpop.permute.xlu0 %1396
        %1398 = vrot.lane.b32.xlu0 %v724, 127
        %v1399 = vpop.permute.xlu0 %1398
        %1400 = vrot.lane.b32.xlu0 %v725, 127
        %v1401 = vpop.permute.xlu0 %1400
        %1402 = vrot.lane.b32.xlu0 %v726, 127
        %v1403 = vpop.permute.xlu0 %1402
        %1404 = vrot.lane.b32.xlu0 %v727, 127
        %v1405 = vpop.permute.xlu0 %1404
        %1406 = vrot.lane.b32.xlu0 %v728, 127
        %v1407 = vpop.permute.xlu0 %1406
        %1408 = vrot.lane.b32.xlu0 %v729, 127
        %v1409 = vpop.permute.xlu0 %1408
        %vm1410 = vcmask 1039360
        %v1411 = vsel %vm1410, %v1387, %v1389
        %v1412 = vsel %vm1410, %v1389, %v1391
        %v1413 = vsel %vm1410, %v1393, %v1395
        %v1414 = vsel %vm1410, %v1395, %v1397
        %v1415 = vsel %vm1410, %v1399, %v1401
        %v1416 = vsel %vm1410, %v1401, %v1403
        %v1417 = vsel %vm1410, %v1405, %v1407
        %v1418 = vsel %vm1410, %v1407, %v1409
        %v1435 = vsel %vm1410, %v1391, %v1387
        %v1436 = vsel %vm1410, %v1397, %v1393
        %v1437 = vsel %vm1410, %v1403, %v1399
        %v1438 = vsel %vm1410, %v1409, %v1405
        %1439 = vrot.lane.b32.xlu0 %v718, 126
        %v1440 = vpop.permute.xlu0 %1439
        %1441 = vrot.lane.b32.xlu0 %v719, 126
        %v1442 = vpop.permute.xlu0 %1441
        %1443 = vrot.lane.b32.xlu0 %v720, 126
        %v1444 = vpop.permute.xlu0 %1443
        %1445 = vrot.lane.b32.xlu0 %v721, 126
        %v1446 = vpop.permute.xlu0 %1445
        %1447 = vrot.lane.b32.xlu0 %v722, 126
        %v1448 = vpop.permute.xlu0 %1447
        %1449 = vrot.lane.b32.xlu0 %v723, 126
        %v1450 = vpop.permute.xlu0 %1449
        %1451 = vrot.lane.b32.xlu0 %v724, 126
        %v1452 = vpop.permute.xlu0 %1451
        %1453 = vrot.lane.b32.xlu0 %v725, 126
        %v1454 = vpop.permute.xlu0 %1453
        %1455 = vrot.lane.b32.xlu0 %v726, 126
        %v1456 = vpop.permute.xlu0 %1455
        %1457 = vrot.lane.b32.xlu0 %v727, 126
        %v1458 = vpop.permute.xlu0 %1457
        %1459 = vrot.lane.b32.xlu0 %v728, 126
        %v1460 = vpop.permute.xlu0 %1459
        %1461 = vrot.lane.b32.xlu0 %v729, 126
        %v1462 = vpop.permute.xlu0 %1461
        %vm1463 = vcmask 1031168
        %v1464 = vsel %vm1463, %v1440, %v1442
        %v1465 = vsel %vm1463, %v1442, %v1444
        %v1466 = vsel %vm1463, %v1446, %v1448
        %v1467 = vsel %vm1463, %v1448, %v1450
        %v1468 = vsel %vm1463, %v1452, %v1454
        %v1469 = vsel %vm1463, %v1454, %v1456
        %v1470 = vsel %vm1463, %v1458, %v1460
        %v1471 = vsel %vm1463, %v1460, %v1462
        %v1488 = vsel %vm1463, %v1444, %v1440
        %v1489 = vsel %vm1463, %v1450, %v1446
        %v1490 = vsel %vm1463, %v1456, %v1452
        %v1491 = vsel %vm1463, %v1462, %v1458
        %1492 = vrot.lane.b32.xlu0 %v718, 106
        %v1493 = vpop.permute.xlu0 %1492
        %1494 = vrot.lane.b32.xlu0 %v719, 106
        %v1495 = vpop.permute.xlu0 %1494
        %1496 = vrot.lane.b32.xlu0 %v720, 106
        %v1497 = vpop.permute.xlu0 %1496
        %1498 = vrot.lane.b32.xlu0 %v721, 106
        %v1499 = vpop.permute.xlu0 %1498
        %1500 = vrot.lane.b32.xlu0 %v722, 106
        %v1501 = vpop.permute.xlu0 %1500
        %1502 = vrot.lane.b32.xlu0 %v723, 106
        %v1503 = vpop.permute.xlu0 %1502
        %1504 = vrot.lane.b32.xlu0 %v724, 106
        %v1505 = vpop.permute.xlu0 %1504
        %1506 = vrot.lane.b32.xlu0 %v725, 106
        %v1507 = vpop.permute.xlu0 %1506
        %1508 = vrot.lane.b32.xlu0 %v726, 106
        %v1509 = vpop.permute.xlu0 %1508
        %1510 = vrot.lane.b32.xlu0 %v727, 106
        %v1511 = vpop.permute.xlu0 %1510
        %1512 = vrot.lane.b32.xlu0 %v728, 106
        %v1513 = vpop.permute.xlu0 %1512
        %1514 = vrot.lane.b32.xlu0 %v729, 106
        %v1515 = vpop.permute.xlu0 %1514
        %vm1516 = vcmask 867328
        %v1517 = vsel %vm1516, %v1493, %v1495
        %v1518 = vsel %vm1516, %v1495, %v1497
        %v1519 = vsel %vm1516, %v1499, %v1501
        %v1520 = vsel %vm1516, %v1501, %v1503
        %v1521 = vsel %vm1516, %v1505, %v1507
        %v1522 = vsel %vm1516, %v1507, %v1509
        %v1523 = vsel %vm1516, %v1511, %v1513
        %v1524 = vsel %vm1516, %v1513, %v1515
        %v1541 = vsel %vm1516, %v1497, %v1493
        %v1542 = vsel %vm1516, %v1503, %v1499
        %v1543 = vsel %vm1516, %v1509, %v1505
        %v1544 = vsel %vm1516, %v1515, %v1511
        %v1545 = vld [vmem:[#allocation3 + $0x10] sm:$0xff]
        %v1546 = vld [vmem:[#allocation3 + $0x18] sm:$0xff]
        %v1547 = vld [vmem:[#allocation3 + $0x48] sm:$0xff]
        %v1548 = vld [vmem:[#allocation3 + $0x50] sm:$0xff]
        %v1549 = vld [vmem:[#allocation3 + $0x80] sm:$0xff]
        %v1550 = vld [vmem:[#allocation3 + $0x88] sm:$0xff]
        %v1551 = vld [vmem:[#allocation3 + $0xb8] sm:$0xff]
        %v1552 = vld [vmem:[#allocation3 + $0xc0] sm:$0xff]
        %1553 = vmatpush.msra.mxu0 %v1385
        %1554 = vmatpush.msra.mxu0 %v1384
        %1555 = vmatpush.msra.mxu0 %v1383
        %1556 = vmatpush.msra.mxu0 %v1382
        %1557 = vmatpush.msra.mxu0 %v1332
        %1558 = vmatpush.msra.mxu0 %v1331
        %1559 = vmatpush.msra.mxu0 %v1330
        %1560 = vmatpush.msra.mxu0 %v1329
        %1561 = vmatpush.msra.mxu0 %v1279
        %1562 = vmatpush.msra.mxu0 %v1278
        %1563 = vmatpush.msra.mxu0 %v1277
        %1564 = vmatpush.msra.mxu0 %v1276
        %1565 = vmatpush.msra.mxu0 %v1226
        %1566 = vmatpush.msra.mxu0 %v1225
        %1567 = vmatpush.msra.mxu0 %v1224
        %1568 = vmatpush.msra.mxu0 %v1223
        %1569 = vmatmul.f32.gmra.mxu0 %v1545
        %v1570 = vpop.f32.mrf.mxu0
        %v1571 = vadd.f32 0.0, %v1570
        %1572 = vmatmul.f32.gmra.mxu0 %v1547
        %v1573 = vpop.f32.mrf.mxu0
        %v1574 = vadd.f32 0.0, %v1573
        %1575 = vmatmul.f32.gmra.mxu0 %v1549
        %v1576 = vpop.f32.mrf.mxu0
        %v1577 = vadd.f32 0.0, %v1576
        %1578 = vmatmul.f32.gmra.mxu0 %v1551
        %v1579 = vpop.f32.mrf.mxu0
        %v1580 = vadd.f32 0.0, %v1579
        %1581 = vdwg.mxu0
        %1582 = vmatpush.msra.mxu0 %v1523
        %1583 = vmatpush.msra.mxu0 %v1521
        %1584 = vmatpush.msra.mxu0 %v1519
        %1585 = vmatpush.msra.mxu0 %v1517
        %1586 = vmatpush.msra.mxu0 %v1470
        %1587 = vmatpush.msra.mxu0 %v1468
        %1588 = vmatpush.msra.mxu0 %v1466
        %1589 = vmatpush.msra.mxu0 %v1464
        %1590 = vmatpush.msra.mxu0 %v1417
        %1591 = vmatpush.msra.mxu0 %v1415
        %1592 = vmatpush.msra.mxu0 %v1413
        %1593 = vmatpush.msra.mxu0 %v1411
        %1594 = vmatpush.msra.mxu0 %v727
        %1595 = vmatpush.msra.mxu0 %v724
        %1596 = vmatpush.msra.mxu0 %v721
        %1597 = vmatpush.msra.mxu0 %v718
        %1598 = vmatmul.f32.gmra.mxu0 %v1546
        %v1599 = vpop.f32.mrf.mxu0
        %v1600 = vadd.f32 %v1571, %v1599
        %1601 = vmatmul.f32.gmra.mxu0 %v1548
        %v1602 = vpop.f32.mrf.mxu0
        %v1603 = vadd.f32 %v1574, %v1602
        %1604 = vmatmul.f32.gmra.mxu0 %v1550
        %v1605 = vpop.f32.mrf.mxu0
        %v1606 = vadd.f32 %v1577, %v1605
        %1607 = vmatmul.f32.gmra.mxu0 %v1552
        %v1608 = vpop.f32.mrf.mxu0
        %v1609 = vadd.f32 %v1580, %v1608
        %1610 = vdwg.mxu0
        %1611 = vmatpush.msra.mxu0 %v1368
        %1612 = vmatpush.msra.mxu0 %v1366
        %1613 = vmatpush.msra.mxu0 %v1364
        %1614 = vmatpush.msra.mxu0 %v1362
        %1615 = vmatpush.msra.mxu0 %v1315
        %1616 = vmatpush.msra.mxu0 %v1313
        %1617 = vmatpush.msra.mxu0 %v1311
        %1618 = vmatpush.msra.mxu0 %v1309
        %1619 = vmatpush.msra.mxu0 %v1262
        %1620 = vmatpush.msra.mxu0 %v1260
        %1621 = vmatpush.msra.mxu0 %v1258
        %1622 = vmatpush.msra.mxu0 %v1256
        %1623 = vmatpush.msra.mxu0 %v1209
        %1624 = vmatpush.msra.mxu0 %v1207
        %1625 = vmatpush.msra.mxu0 %v1205
        %1626 = vmatpush.msra.mxu0 %v1203
        %1627 = vmatmul.f32.gmra.mxu0 %v1545
        %v1628 = vpop.f32.mrf.mxu0
        %v1629 = vadd.f32 0.0, %v1628
        %1630 = vmatmul.f32.gmra.mxu0 %v1547
        %v1631 = vpop.f32.mrf.mxu0
        %v1632 = vadd.f32 0.0, %v1631
        %1633 = vmatmul.f32.gmra.mxu0 %v1549
        %v1634 = vpop.f32.mrf.mxu0
        %v1635 = vadd.f32 0.0, %v1634
        %1636 = vmatmul.f32.gmra.mxu0 %v1551
        %v1637 = vpop.f32.mrf.mxu0
        %v1638 = vadd.f32 0.0, %v1637
        %1639 = vdwg.mxu0
        %1640 = vmatpush.msra.mxu0 %v1524
        %1641 = vmatpush.msra.mxu0 %v1522
        %1642 = vmatpush.msra.mxu0 %v1520
        %1643 = vmatpush.msra.mxu0 %v1518
        %1644 = vmatpush.msra.mxu0 %v1471
        %1645 = vmatpush.msra.mxu0 %v1469
        %1646 = vmatpush.msra.mxu0 %v1467
        %1647 = vmatpush.msra.mxu0 %v1465
        %1648 = vmatpush.msra.mxu0 %v1418
        %1649 = vmatpush.msra.mxu0 %v1416
        %1650 = vmatpush.msra.mxu0 %v1414
        %1651 = vmatpush.msra.mxu0 %v1412
        %1652 = vmatpush.msra.mxu0 %v728
        %1653 = vmatpush.msra.mxu0 %v725
        %1654 = vmatpush.msra.mxu0 %v722
        %1655 = vmatpush.msra.mxu0 %v719
        %1656 = vmatmul.f32.gmra.mxu0 %v1546
        %v1657 = vpop.f32.mrf.mxu0
        %v1658 = vadd.f32 %v1629, %v1657
        %1659 = vmatmul.f32.gmra.mxu0 %v1548
        %v1660 = vpop.f32.mrf.mxu0
        %v1661 = vadd.f32 %v1632, %v1660
        %1662 = vmatmul.f32.gmra.mxu0 %v1550
        %v1663 = vpop.f32.mrf.mxu0
        %v1664 = vadd.f32 %v1635, %v1663
        %1665 = vmatmul.f32.gmra.mxu0 %v1552
        %v1666 = vpop.f32.mrf.mxu0
        %v1667 = vadd.f32 %v1638, %v1666
        %1668 = vdwg.mxu0
        %1669 = vmatpush.msra.mxu0 %v1369
        %1670 = vmatpush.msra.mxu0 %v1367
        %1671 = vmatpush.msra.mxu0 %v1365
        %1672 = vmatpush.msra.mxu0 %v1363
        %1673 = vmatpush.msra.mxu0 %v1316
        %1674 = vmatpush.msra.mxu0 %v1314
        %1675 = vmatpush.msra.mxu0 %v1312
        %1676 = vmatpush.msra.mxu0 %v1310
        %1677 = vmatpush.msra.mxu0 %v1263
        %1678 = vmatpush.msra.mxu0 %v1261
        %1679 = vmatpush.msra.mxu0 %v1259
        %1680 = vmatpush.msra.mxu0 %v1257
        %1681 = vmatpush.msra.mxu0 %v1210
        %1682 = vmatpush.msra.mxu0 %v1208
        %1683 = vmatpush.msra.mxu0 %v1206
        %1684 = vmatpush.msra.mxu0 %v1204
        %1685 = vmatmul.f32.gmra.mxu0 %v1545
        %v1686 = vpop.f32.mrf.mxu0
        %v1687 = vadd.f32 0.0, %v1686
        %1688 = vmatmul.f32.gmra.mxu0 %v1547
        %v1689 = vpop.f32.mrf.mxu0
        %v1690 = vadd.f32 0.0, %v1689
        %1691 = vmatmul.f32.gmra.mxu0 %v1549
        %v1692 = vpop.f32.mrf.mxu0
        %v1693 = vadd.f32 0.0, %v1692
        %1694 = vmatmul.f32.gmra.mxu0 %v1551
        %v1695 = vpop.f32.mrf.mxu0
        %v1696 = vadd.f32 0.0, %v1695
        %1697 = vdwg.mxu0
        %1698 = vmatpush.msra.mxu0 %v1544
        %1699 = vmatpush.msra.mxu0 %v1543
        %1700 = vmatpush.msra.mxu0 %v1542
        %1701 = vmatpush.msra.mxu0 %v1541
        %1702 = vmatpush.msra.mxu0 %v1491
        %1703 = vmatpush.msra.mxu0 %v1490
        %1704 = vmatpush.msra.mxu0 %v1489
        %1705 = vmatpush.msra.mxu0 %v1488
        %1706 = vmatpush.msra.mxu0 %v1438
        %1707 = vmatpush.msra.mxu0 %v1437
        %1708 = vmatpush.msra.mxu0 %v1436
        %1709 = vmatpush.msra.mxu0 %v1435
        %1710 = vmatpush.msra.mxu0 %v729
        %1711 = vmatpush.msra.mxu0 %v726
        %1712 = vmatpush.msra.mxu0 %v723
        %1713 = vmatpush.msra.mxu0 %v720
        %1714 = vmatmul.f32.gmra.mxu0 %v1546
        %v1715 = vpop.f32.mrf.mxu0
        %v1716 = vadd.f32 %v1687, %v1715
        %1717 = vmatmul.f32.gmra.mxu0 %v1548
        %v1718 = vpop.f32.mrf.mxu0
        %v1719 = vadd.f32 %v1690, %v1718
        %1720 = vmatmul.f32.gmra.mxu0 %v1550
        %v1721 = vpop.f32.mrf.mxu0
        %v1722 = vadd.f32 %v1693, %v1721
        %1723 = vmatmul.f32.gmra.mxu0 %v1552
        %v1724 = vpop.f32.mrf.mxu0
        %v1725 = vadd.f32 %v1696, %v1724
        %1726 = vdwg.mxu0
        %1727 = vmatpush.msra.mxu0 %v953
        %1728 = vmatpush.msra.mxu0 %v952
        %1729 = vmatpush.msra.mxu0 %v951
        %1730 = vmatpush.msra.mxu0 %v950
        %1731 = vmatpush.msra.mxu0 %v900
        %1732 = vmatpush.msra.mxu0 %v899
        %1733 = vmatpush.msra.mxu0 %v898
        %1734 = vmatpush.msra.mxu0 %v897
        %1735 = vmatpush.msra.mxu0 %v847
        %1736 = vmatpush.msra.mxu0 %v846
        %1737 = vmatpush.msra.mxu0 %v845
        %1738 = vmatpush.msra.mxu0 %v844
        %1739 = vmatpush.msra.mxu0 %v794
        %1740 = vmatpush.msra.mxu0 %v793
        %1741 = vmatpush.msra.mxu0 %v792
        %1742 = vmatpush.msra.mxu0 %v791
        %1743 = vmatmul.f32.gmra.mxu0 %v1166
        %v1744 = vpop.f32.mrf.mxu0
        %v1745 = vadd.f32 %v1600, %v1744
        %1746 = vmatmul.f32.gmra.mxu0 %v1168
        %v1747 = vpop.f32.mrf.mxu0
        %v1748 = vadd.f32 %v1603, %v1747
        %1749 = vmatmul.f32.gmra.mxu0 %v1170
        %v1750 = vpop.f32.mrf.mxu0
        %v1751 = vadd.f32 %v1606, %v1750
        %1752 = vmatmul.f32.gmra.mxu0 %v1172
        %v1753 = vpop.f32.mrf.mxu0
        %v1754 = vadd.f32 %v1609, %v1753
        %1755 = vdwg.mxu0
        %1756 = vmatpush.msra.mxu0 %v1165
        %1757 = vmatpush.msra.mxu0 %v1164
        %1758 = vmatpush.msra.mxu0 %v1163
        %1759 = vmatpush.msra.mxu0 %v1162
        %1760 = vmatpush.msra.mxu0 %v1112
        %1761 = vmatpush.msra.mxu0 %v1111
        %1762 = vmatpush.msra.mxu0 %v1110
        %1763 = vmatpush.msra.mxu0 %v1109
        %1764 = vmatpush.msra.mxu0 %v1059
        %1765 = vmatpush.msra.mxu0 %v1058
        %1766 = vmatpush.msra.mxu0 %v1057
        %1767 = vmatpush.msra.mxu0 %v1056
        %1768 = vmatpush.msra.mxu0 %v1006
        %1769 = vmatpush.msra.mxu0 %v1005
        %1770 = vmatpush.msra.mxu0 %v1004
        %1771 = vmatpush.msra.mxu0 %v1003
        %1772 = vmatmul.f32.gmra.mxu0 %v1167
        %v1773 = vpop.f32.mrf.mxu0
        %v1774 = vadd.f32 %v1745, %v1773
        %1775 = vmatmul.f32.gmra.mxu0 %v1169
        %v1776 = vpop.f32.mrf.mxu0
        %v1777 = vadd.f32 %v1748, %v1776
        %1778 = vmatmul.f32.gmra.mxu0 %v1171
        %v1779 = vpop.f32.mrf.mxu0
        %v1780 = vadd.f32 %v1751, %v1779
        %1781 = vmatmul.f32.gmra.mxu0 %v1173
        %v1782 = vpop.f32.mrf.mxu0
        %v1783 = vadd.f32 %v1754, %v1782
        %1784 = vdwg.mxu0
        %1785 = vmatpush.msra.mxu0 %v936
        %1786 = vmatpush.msra.mxu0 %v934
        %1787 = vmatpush.msra.mxu0 %v932
        %1788 = vmatpush.msra.mxu0 %v930
        %1789 = vmatpush.msra.mxu0 %v883
        %1790 = vmatpush.msra.mxu0 %v881
        %1791 = vmatpush.msra.mxu0 %v879
        %1792 = vmatpush.msra.mxu0 %v877
        %1793 = vmatpush.msra.mxu0 %v830
        %1794 = vmatpush.msra.mxu0 %v828
        %1795 = vmatpush.msra.mxu0 %v826
        %1796 = vmatpush.msra.mxu0 %v824
        %1797 = vmatpush.msra.mxu0 %v777
        %1798 = vmatpush.msra.mxu0 %v775
        %1799 = vmatpush.msra.mxu0 %v773
        %1800 = vmatpush.msra.mxu0 %v771
        %1801 = vmatmul.f32.gmra.mxu0 %v1166
        %v1802 = vpop.f32.mrf.mxu0
        %v1803 = vadd.f32 %v1658, %v1802
        %1804 = vmatmul.f32.gmra.mxu0 %v1168
        %v1805 = vpop.f32.mrf.mxu0
        %v1806 = vadd.f32 %v1661, %v1805
        %1807 = vmatmul.f32.gmra.mxu0 %v1170
        %v1808 = vpop.f32.mrf.mxu0
        %v1809 = vadd.f32 %v1664, %v1808
        %1810 = vmatmul.f32.gmra.mxu0 %v1172
        %v1811 = vpop.f32.mrf.mxu0
        %v1812 = vadd.f32 %v1667, %v1811
        %1813 = vdwg.mxu0
        %1814 = vmatpush.msra.mxu0 %v1148
        %1815 = vmatpush.msra.mxu0 %v1146
        %1816 = vmatpush.msra.mxu0 %v1144
        %1817 = vmatpush.msra.mxu0 %v1142
        %1818 = vmatpush.msra.mxu0 %v1095
        %1819 = vmatpush.msra.mxu0 %v1093
        %1820 = vmatpush.msra.mxu0 %v1091
        %1821 = vmatpush.msra.mxu0 %v1089
        %1822 = vmatpush.msra.mxu0 %v1042
        %1823 = vmatpush.msra.mxu0 %v1040
        %1824 = vmatpush.msra.mxu0 %v1038
        %1825 = vmatpush.msra.mxu0 %v1036
        %1826 = vmatpush.msra.mxu0 %v989
        %1827 = vmatpush.msra.mxu0 %v987
        %1828 = vmatpush.msra.mxu0 %v985
        %1829 = vmatpush.msra.mxu0 %v983
        %1830 = vmatmul.f32.gmra.mxu0 %v1167
        %v1831 = vpop.f32.mrf.mxu0
        %v1832 = vadd.f32 %v1803, %v1831
        %1833 = vmatmul.f32.gmra.mxu0 %v1169
        %v1834 = vpop.f32.mrf.mxu0
        %v1835 = vadd.f32 %v1806, %v1834
        %1836 = vmatmul.f32.gmra.mxu0 %v1171
        %v1837 = vpop.f32.mrf.mxu0
        %v1838 = vadd.f32 %v1809, %v1837
        %1839 = vmatmul.f32.gmra.mxu0 %v1173
        %v1840 = vpop.f32.mrf.mxu0
        %v1841 = vadd.f32 %v1812, %v1840
        %1842 = vdwg.mxu0
        %1843 = vmatpush.msra.mxu0 %v937
        %1844 = vmatpush.msra.mxu0 %v935
        %1845 = vmatpush.msra.mxu0 %v933
        %1846 = vmatpush.msra.mxu0 %v931
        %1847 = vmatpush.msra.mxu0 %v884
        %1848 = vmatpush.msra.mxu0 %v882
        %1849 = vmatpush.msra.mxu0 %v880
        %1850 = vmatpush.msra.mxu0 %v878
        %1851 = vmatpush.msra.mxu0 %v831
        %1852 = vmatpush.msra.mxu0 %v829
        %1853 = vmatpush.msra.mxu0 %v827
        %1854 = vmatpush.msra.mxu0 %v825
        %1855 = vmatpush.msra.mxu0 %v778
        %1856 = vmatpush.msra.mxu0 %v776
        %1857 = vmatpush.msra.mxu0 %v774
        %1858 = vmatpush.msra.mxu0 %v772
        %1859 = vmatmul.f32.gmra.mxu0 %v1166
        %v1860 = vpop.f32.mrf.mxu0
        %v1861 = vadd.f32 %v1716, %v1860
        %1862 = vmatmul.f32.gmra.mxu0 %v1168
        %v1863 = vpop.f32.mrf.mxu0
        %v1864 = vadd.f32 %v1719, %v1863
        %1865 = vmatmul.f32.gmra.mxu0 %v1170
        %v1866 = vpop.f32.mrf.mxu0
        %v1867 = vadd.f32 %v1722, %v1866
        %1868 = vmatmul.f32.gmra.mxu0 %v1172
        %v1869 = vpop.f32.mrf.mxu0
        %v1870 = vadd.f32 %v1725, %v1869
        %1871 = vdwg.mxu0
        %1872 = vmatpush.msra.mxu0 %v1149
        %1873 = vmatpush.msra.mxu0 %v1147
        %1874 = vmatpush.msra.mxu0 %v1145
        %1875 = vmatpush.msra.mxu0 %v1143
        %1876 = vmatpush.msra.mxu0 %v1096
        %1877 = vmatpush.msra.mxu0 %v1094
        %1878 = vmatpush.msra.mxu0 %v1092
        %1879 = vmatpush.msra.mxu0 %v1090
        %1880 = vmatpush.msra.mxu0 %v1043
        %1881 = vmatpush.msra.mxu0 %v1041
        %1882 = vmatpush.msra.mxu0 %v1039
        %1883 = vmatpush.msra.mxu0 %v1037
        %1884 = vmatpush.msra.mxu0 %v990
        %1885 = vmatpush.msra.mxu0 %v988
        %1886 = vmatpush.msra.mxu0 %v986
        %1887 = vmatpush.msra.mxu0 %v984
        %1888 = vmatmul.f32.gmra.mxu0 %v1167
        %v1889 = vpop.f32.mrf.mxu0
        %v1890 = vadd.f32 %v1861, %v1889
        %1891 = vmatmul.f32.gmra.mxu0 %v1169
        %v1892 = vpop.f32.mrf.mxu0
        %v1893 = vadd.f32 %v1864, %v1892
        %1894 = vmatmul.f32.gmra.mxu0 %v1171
        %v1895 = vpop.f32.mrf.mxu0
        %v1896 = vadd.f32 %v1867, %v1895
        %1897 = vmatmul.f32.gmra.mxu0 %v1173
        %v1898 = vpop.f32.mrf.mxu0
        %v1899 = vadd.f32 %v1870, %v1898
        %1900 = vdwg.mxu0
        %1901 = vrot.lane.b32.xlu0 %v718, 105
        %v1902 = vpop.permute.xlu0 %1901
        %1903 = vrot.lane.b32.xlu0 %v719, 105
        %v1904 = vpop.permute.xlu0 %1903
        %1905 = vrot.lane.b32.xlu0 %v720, 105
        %v1906 = vpop.permute.xlu0 %1905
        %1907 = vrot.lane.b32.xlu0 %v721, 105
        %v1908 = vpop.permute.xlu0 %1907
        %1909 = vrot.lane.b32.xlu0 %v722, 105
        %v1910 = vpop.permute.xlu0 %1909
        %1911 = vrot.lane.b32.xlu0 %v723, 105
        %v1912 = vpop.permute.xlu0 %1911
        %1913 = vrot.lane.b32.xlu0 %v724, 105
        %v1914 = vpop.permute.xlu0 %1913
        %1915 = vrot.lane.b32.xlu0 %v725, 105
        %v1916 = vpop.permute.xlu0 %1915
        %1917 = vrot.lane.b32.xlu0 %v726, 105
        %v1918 = vpop.permute.xlu0 %1917
        %1919 = vrot.lane.b32.xlu0 %v727, 105
        %v1920 = vpop.permute.xlu0 %1919
        %1921 = vrot.lane.b32.xlu0 %v728, 105
        %v1922 = vpop.permute.xlu0 %1921
        %1923 = vrot.lane.b32.xlu0 %v729, 105
        %v1924 = vpop.permute.xlu0 %1923
        %vm1925 = vcmask 859136
        %v1926 = vsel %vm1925, %v1902, %v1904
        %v1927 = vsel %vm1925, %v1904, %v1906
        %v1928 = vsel %vm1925, %v1908, %v1910
        %v1929 = vsel %vm1925, %v1910, %v1912
        %v1930 = vsel %vm1925, %v1914, %v1916
        %v1931 = vsel %vm1925, %v1916, %v1918
        %v1932 = vsel %vm1925, %v1920, %v1922
        %v1933 = vsel %vm1925, %v1922, %v1924
        %v1950 = vsel %vm1925, %v1906, %v1902
        %v1951 = vsel %vm1925, %v1912, %v1908
        %v1952 = vsel %vm1925, %v1918, %v1914
        %v1953 = vsel %vm1925, %v1924, %v1920
        %1954 = vrot.lane.b32.xlu0 %v718, 104
        %v1955 = vpop.permute.xlu0 %1954
        %1956 = vrot.lane.b32.xlu0 %v719, 104
        %v1957 = vpop.permute.xlu0 %1956
        %1958 = vrot.lane.b32.xlu0 %v720, 104
        %v1959 = vpop.permute.xlu0 %1958
        %1960 = vrot.lane.b32.xlu0 %v721, 104
        %v1961 = vpop.permute.xlu0 %1960
        %1962 = vrot.lane.b32.xlu0 %v722, 104
        %v1963 = vpop.permute.xlu0 %1962
        %1964 = vrot.lane.b32.xlu0 %v723, 104
        %v1965 = vpop.permute.xlu0 %1964
        %1966 = vrot.lane.b32.xlu0 %v724, 104
        %v1967 = vpop.permute.xlu0 %1966
        %1968 = vrot.lane.b32.xlu0 %v725, 104
        %v1969 = vpop.permute.xlu0 %1968
        %1970 = vrot.lane.b32.xlu0 %v726, 104
        %v1971 = vpop.permute.xlu0 %1970
        %1972 = vrot.lane.b32.xlu0 %v727, 104
        %v1973 = vpop.permute.xlu0 %1972
        %1974 = vrot.lane.b32.xlu0 %v728, 104
        %v1975 = vpop.permute.xlu0 %1974
        %1976 = vrot.lane.b32.xlu0 %v729, 104
        %v1977 = vpop.permute.xlu0 %1976
        %vm1978 = vcmask 850944
        %v1979 = vsel %vm1978, %v1955, %v1957
        %v1980 = vsel %vm1978, %v1957, %v1959
        %v1981 = vsel %vm1978, %v1961, %v1963
        %v1982 = vsel %vm1978, %v1963, %v1965
        %v1983 = vsel %vm1978, %v1967, %v1969
        %v1984 = vsel %vm1978, %v1969, %v1971
        %v1985 = vsel %vm1978, %v1973, %v1975
        %v1986 = vsel %vm1978, %v1975, %v1977
        %v2003 = vsel %vm1978, %v1959, %v1955
        %v2004 = vsel %vm1978, %v1965, %v1961
        %v2005 = vsel %vm1978, %v1971, %v1967
        %v2006 = vsel %vm1978, %v1977, %v1973
        %2007 = vrot.lane.b32.xlu0 %v718, 103
        %v2008 = vpop.permute.xlu0 %2007
        %2009 = vrot.lane.b32.xlu0 %v719, 103
        %v2010 = vpop.permute.xlu0 %2009
        %2011 = vrot.lane.b32.xlu0 %v720, 103
        %v2012 = vpop.permute.xlu0 %2011
        %2013 = vrot.lane.b32.xlu0 %v721, 103
        %v2014 = vpop.permute.xlu0 %2013
        %2015 = vrot.lane.b32.xlu0 %v722, 103
        %v2016 = vpop.permute.xlu0 %2015
        %2017 = vrot.lane.b32.xlu0 %v723, 103
        %v2018 = vpop.permute.xlu0 %2017
        %2019 = vrot.lane.b32.xlu0 %v724, 103
        %v2020 = vpop.permute.xlu0 %2019
        %2021 = vrot.lane.b32.xlu0 %v725, 103
        %v2022 = vpop.permute.xlu0 %2021
        %2023 = vrot.lane.b32.xlu0 %v726, 103
        %v2024 = vpop.permute.xlu0 %2023
        %2025 = vrot.lane.b32.xlu0 %v727, 103
        %v2026 = vpop.permute.xlu0 %2025
        %2027 = vrot.lane.b32.xlu0 %v728, 103
        %v2028 = vpop.permute.xlu0 %2027
        %2029 = vrot.lane.b32.xlu0 %v729, 103
        %v2030 = vpop.permute.xlu0 %2029
        %vm2031 = vcmask 842752
        %v2032 = vsel %vm2031, %v2008, %v2010
        %v2033 = vsel %vm2031, %v2010, %v2012
        %v2034 = vsel %vm2031, %v2014, %v2016
        %v2035 = vsel %vm2031, %v2016, %v2018
        %v2036 = vsel %vm2031, %v2020, %v2022
        %v2037 = vsel %vm2031, %v2022, %v2024
        %v2038 = vsel %vm2031, %v2026, %v2028
        %v2039 = vsel %vm2031, %v2028, %v2030
        %v2056 = vsel %vm2031, %v2012, %v2008
        %v2057 = vsel %vm2031, %v2018, %v2014
        %v2058 = vsel %vm2031, %v2024, %v2020
        %v2059 = vsel %vm2031, %v2030, %v2026
        %2060 = vrot.lane.b32.xlu0 %v718, 102
        %v2061 = vpop.permute.xlu0 %2060
        %2062 = vrot.lane.b32.xlu0 %v719, 102
        %v2063 = vpop.permute.xlu0 %2062
        %2064 = vrot.lane.b32.xlu0 %v720, 102
        %v2065 = vpop.permute.xlu0 %2064
        %2066 = vrot.lane.b32.xlu0 %v721, 102
        %v2067 = vpop.permute.xlu0 %2066
        %2068 = vrot.lane.b32.xlu0 %v722, 102
        %v2069 = vpop.permute.xlu0 %2068
        %2070 = vrot.lane.b32.xlu0 %v723, 102
        %v2071 = vpop.permute.xlu0 %2070
        %2072 = vrot.lane.b32.xlu0 %v724, 102
        %v2073 = vpop.permute.xlu0 %2072
        %2074 = vrot.lane.b32.xlu0 %v725, 102
        %v2075 = vpop.permute.xlu0 %2074
        %2076 = vrot.lane.b32.xlu0 %v726, 102
        %v2077 = vpop.permute.xlu0 %2076
        %2078 = vrot.lane.b32.xlu0 %v727, 102
        %v2079 = vpop.permute.xlu0 %2078
        %2080 = vrot.lane.b32.xlu0 %v728, 102
        %v2081 = vpop.permute.xlu0 %2080
        %2082 = vrot.lane.b32.xlu0 %v729, 102
        %v2083 = vpop.permute.xlu0 %2082
        %vm2084 = vcmask 834560
        %v2085 = vsel %vm2084, %v2061, %v2063
        %v2086 = vsel %vm2084, %v2063, %v2065
        %v2087 = vsel %vm2084, %v2067, %v2069
        %v2088 = vsel %vm2084, %v2069, %v2071
        %v2089 = vsel %vm2084, %v2073, %v2075
        %v2090 = vsel %vm2084, %v2075, %v2077
        %v2091 = vsel %vm2084, %v2079, %v2081
        %v2092 = vsel %vm2084, %v2081, %v2083
        %v2109 = vsel %vm2084, %v2065, %v2061
        %v2110 = vsel %vm2084, %v2071, %v2067
        %v2111 = vsel %vm2084, %v2077, %v2073
        %v2112 = vsel %vm2084, %v2083, %v2079
        %2113 = vrot.lane.b32.xlu0 %v718, 82
        %v2114 = vpop.permute.xlu0 %2113
        %2115 = vrot.lane.b32.xlu0 %v719, 82
        %v2116 = vpop.permute.xlu0 %2115
        %2117 = vrot.lane.b32.xlu0 %v720, 82
        %v2118 = vpop.permute.xlu0 %2117
        %2119 = vrot.lane.b32.xlu0 %v721, 82
        %v2120 = vpop.permute.xlu0 %2119
        %2121 = vrot.lane.b32.xlu0 %v722, 82
        %v2122 = vpop.permute.xlu0 %2121
        %2123 = vrot.lane.b32.xlu0 %v723, 82
        %v2124 = vpop.permute.xlu0 %2123
        %2125 = vrot.lane.b32.xlu0 %v724, 82
        %v2126 = vpop.permute.xlu0 %2125
        %2127 = vrot.lane.b32.xlu0 %v725, 82
        %v2128 = vpop.permute.xlu0 %2127
        %2129 = vrot.lane.b32.xlu0 %v726, 82
        %v2130 = vpop.permute.xlu0 %2129
        %2131 = vrot.lane.b32.xlu0 %v727, 82
        %v2132 = vpop.permute.xlu0 %2131
        %2133 = vrot.lane.b32.xlu0 %v728, 82
        %v2134 = vpop.permute.xlu0 %2133
        %2135 = vrot.lane.b32.xlu0 %v729, 82
        %v2136 = vpop.permute.xlu0 %2135
        %vm2137 = vcmask 670720
        %v2138 = vsel %vm2137, %v2114, %v2116
        %v2139 = vsel %vm2137, %v2116, %v2118
        %v2140 = vsel %vm2137, %v2120, %v2122
        %v2141 = vsel %vm2137, %v2122, %v2124
        %v2142 = vsel %vm2137, %v2126, %v2128
        %v2143 = vsel %vm2137, %v2128, %v2130
        %v2144 = vsel %vm2137, %v2132, %v2134
        %v2145 = vsel %vm2137, %v2134, %v2136
        %v2162 = vsel %vm2137, %v2118, %v2114
        %v2163 = vsel %vm2137, %v2124, %v2120
        %v2164 = vsel %vm2137, %v2130, %v2126
        %v2165 = vsel %vm2137, %v2136, %v2132
        %2166 = vrot.lane.b32.xlu0 %v718, 81
        %v2167 = vpop.permute.xlu0 %2166
        %2168 = vrot.lane.b32.xlu0 %v719, 81
        %v2169 = vpop.permute.xlu0 %2168
        %2170 = vrot.lane.b32.xlu0 %v720, 81
        %v2171 = vpop.permute.xlu0 %2170
        %2172 = vrot.lane.b32.xlu0 %v721, 81
        %v2173 = vpop.permute.xlu0 %2172
        %2174 = vrot.lane.b32.xlu0 %v722, 81
        %v2175 = vpop.permute.xlu0 %2174
        %2176 = vrot.lane.b32.xlu0 %v723, 81
        %v2177 = vpop.permute.xlu0 %2176
        %2178 = vrot.lane.b32.xlu0 %v724, 81
        %v2179 = vpop.permute.xlu0 %2178
        %2180 = vrot.lane.b32.xlu0 %v725, 81
        %v2181 = vpop.permute.xlu0 %2180
        %2182 = vrot.lane.b32.xlu0 %v726, 81
        %v2183 = vpop.permute.xlu0 %2182
        %2184 = vrot.lane.b32.xlu0 %v727, 81
        %v2185 = vpop.permute.xlu0 %2184
        %2186 = vrot.lane.b32.xlu0 %v728, 81
        %v2187 = vpop.permute.xlu0 %2186
        %2188 = vrot.lane.b32.xlu0 %v729, 81
        %v2189 = vpop.permute.xlu0 %2188
        %vm2190 = vcmask 662528
        %v2191 = vsel %vm2190, %v2167, %v2169
        %v2192 = vsel %vm2190, %v2169, %v2171
        %v2193 = vsel %vm2190, %v2173, %v2175
        %v2194 = vsel %vm2190, %v2175, %v2177
        %v2195 = vsel %vm2190, %v2179, %v2181
        %v2196 = vsel %vm2190, %v2181, %v2183
        %v2197 = vsel %vm2190, %v2185, %v2187
        %v2198 = vsel %vm2190, %v2187, %v2189
        %v2215 = vsel %vm2190, %v2171, %v2167
        %v2216 = vsel %vm2190, %v2177, %v2173
        %v2217 = vsel %vm2190, %v2183, %v2179
        %v2218 = vsel %vm2190, %v2189, %v2185
        %2219 = vrot.lane.b32.xlu0 %v718, 80
        %v2220 = vpop.permute.xlu0 %2219
        %2221 = vrot.lane.b32.xlu0 %v719, 80
        %v2222 = vpop.permute.xlu0 %2221
        %2223 = vrot.lane.b32.xlu0 %v720, 80
        %v2224 = vpop.permute.xlu0 %2223
        %2225 = vrot.lane.b32.xlu0 %v721, 80
        %v2226 = vpop.permute.xlu0 %2225
        %2227 = vrot.lane.b32.xlu0 %v722, 80
        %v2228 = vpop.permute.xlu0 %2227
        %2229 = vrot.lane.b32.xlu0 %v723, 80
        %v2230 = vpop.permute.xlu0 %2229
        %2231 = vrot.lane.b32.xlu0 %v724, 80
        %v2232 = vpop.permute.xlu0 %2231
        %2233 = vrot.lane.b32.xlu0 %v725, 80
        %v2234 = vpop.permute.xlu0 %2233
        %2235 = vrot.lane.b32.xlu0 %v726, 80
        %v2236 = vpop.permute.xlu0 %2235
        %2237 = vrot.lane.b32.xlu0 %v727, 80
        %v2238 = vpop.permute.xlu0 %2237
        %2239 = vrot.lane.b32.xlu0 %v728, 80
        %v2240 = vpop.permute.xlu0 %2239
        %2241 = vrot.lane.b32.xlu0 %v729, 80
        %v2242 = vpop.permute.xlu0 %2241
        %vm2243 = vcmask 654336
        %v2244 = vsel %vm2243, %v2220, %v2222
        %v2245 = vsel %vm2243, %v2222, %v2224
        %v2246 = vsel %vm2243, %v2226, %v2228
        %v2247 = vsel %vm2243, %v2228, %v2230
        %v2248 = vsel %vm2243, %v2232, %v2234
        %v2249 = vsel %vm2243, %v2234, %v2236
        %v2250 = vsel %vm2243, %v2238, %v2240
        %v2251 = vsel %vm2243, %v2240, %v2242
        %v2268 = vsel %vm2243, %v2224, %v2220
        %v2269 = vsel %vm2243, %v2230, %v2226
        %v2270 = vsel %vm2243, %v2236, %v2232
        %v2271 = vsel %vm2243, %v2242, %v2238
        %2272 = vrot.lane.b32.xlu0 %v718, 79
        %v2273 = vpop.permute.xlu0 %2272
        %2274 = vrot.lane.b32.xlu0 %v719, 79
        %v2275 = vpop.permute.xlu0 %2274
        %2276 = vrot.lane.b32.xlu0 %v720, 79
        %v2277 = vpop.permute.xlu0 %2276
        %2278 = vrot.lane.b32.xlu0 %v721, 79
        %v2279 = vpop.permute.xlu0 %2278
        %2280 = vrot.lane.b32.xlu0 %v722, 79
        %v2281 = vpop.permute.xlu0 %2280
        %2282 = vrot.lane.b32.xlu0 %v723, 79
        %v2283 = vpop.permute.xlu0 %2282
        %2284 = vrot.lane.b32.xlu0 %v724, 79
        %v2285 = vpop.permute.xlu0 %2284
        %2286 = vrot.lane.b32.xlu0 %v725, 79
        %v2287 = vpop.permute.xlu0 %2286
        %2288 = vrot.lane.b32.xlu0 %v726, 79
        %v2289 = vpop.permute.xlu0 %2288
        %2290 = vrot.lane.b32.xlu0 %v727, 79
        %v2291 = vpop.permute.xlu0 %2290
        %2292 = vrot.lane.b32.xlu0 %v728, 79
        %v2293 = vpop.permute.xlu0 %2292
        %2294 = vrot.lane.b32.xlu0 %v729, 79
        %v2295 = vpop.permute.xlu0 %2294
        %vm2296 = vcmask 646144
        %v2297 = vsel %vm2296, %v2273, %v2275
        %v2298 = vsel %vm2296, %v2275, %v2277
        %v2299 = vsel %vm2296, %v2279, %v2281
        %v2300 = vsel %vm2296, %v2281, %v2283
        %v2301 = vsel %vm2296, %v2285, %v2287
        %v2302 = vsel %vm2296, %v2287, %v2289
        %v2303 = vsel %vm2296, %v2291, %v2293
        %v2304 = vsel %vm2296, %v2293, %v2295
        %v2321 = vsel %vm2296, %v2277, %v2273
        %v2322 = vsel %vm2296, %v2283, %v2279
        %v2323 = vsel %vm2296, %v2289, %v2285
        %v2324 = vsel %vm2296, %v2295, %v2291
        %v2325 = vld [vmem:[#allocation3 + $0x20] sm:$0xff]
        %v2326 = vld [vmem:[#allocation3 + $0x28] sm:$0xff]
        %v2327 = vld [vmem:[#allocation3 + $0x58] sm:$0xff]
        %v2328 = vld [vmem:[#allocation3 + $0x60] sm:$0xff]
        %v2329 = vld [vmem:[#allocation3 + $0x90] sm:$0xff]
        %v2330 = vld [vmem:[#allocation3 + $0x98] sm:$0xff]
        %v2331 = vld [vmem:[#allocation3 + $0xc8] sm:$0xff]
        %v2332 = vld [vmem:[#allocation3 + $0xd0] sm:$0xff]
        %2333 = vmatpush.msra.mxu0 %v2091
        %2334 = vmatpush.msra.mxu0 %v2089
        %2335 = vmatpush.msra.mxu0 %v2087
        %2336 = vmatpush.msra.mxu0 %v2085
        %2337 = vmatpush.msra.mxu0 %v2038
        %2338 = vmatpush.msra.mxu0 %v2036
        %2339 = vmatpush.msra.mxu0 %v2034
        %2340 = vmatpush.msra.mxu0 %v2032
        %2341 = vmatpush.msra.mxu0 %v1985
        %2342 = vmatpush.msra.mxu0 %v1983
        %2343 = vmatpush.msra.mxu0 %v1981
        %2344 = vmatpush.msra.mxu0 %v1979
        %2345 = vmatpush.msra.mxu0 %v1932
        %2346 = vmatpush.msra.mxu0 %v1930
        %2347 = vmatpush.msra.mxu0 %v1928
        %2348 = vmatpush.msra.mxu0 %v1926
        %2349 = vmatmul.f32.gmra.mxu0 %v2325
        %v2350 = vpop.f32.mrf.mxu0
        %v2351 = vadd.f32 0.0, %v2350
        %2352 = vmatmul.f32.gmra.mxu0 %v2327
        %v2353 = vpop.f32.mrf.mxu0
        %v2354 = vadd.f32 0.0, %v2353
        %2355 = vmatmul.f32.gmra.mxu0 %v2329
        %v2356 = vpop.f32.mrf.mxu0
        %v2357 = vadd.f32 0.0, %v2356
        %2358 = vmatmul.f32.gmra.mxu0 %v2331
        %v2359 = vpop.f32.mrf.mxu0
        %v2360 = vadd.f32 0.0, %v2359
        %2361 = vdwg.mxu0
        %2362 = vmatpush.msra.mxu0 %v2303
        %2363 = vmatpush.msra.mxu0 %v2301
        %2364 = vmatpush.msra.mxu0 %v2299
        %2365 = vmatpush.msra.mxu0 %v2297
        %2366 = vmatpush.msra.mxu0 %v2250
        %2367 = vmatpush.msra.mxu0 %v2248
        %2368 = vmatpush.msra.mxu0 %v2246
        %2369 = vmatpush.msra.mxu0 %v2244
        %2370 = vmatpush.msra.mxu0 %v2197
        %2371 = vmatpush.msra.mxu0 %v2195
        %2372 = vmatpush.msra.mxu0 %v2193
        %2373 = vmatpush.msra.mxu0 %v2191
        %2374 = vmatpush.msra.mxu0 %v2144
        %2375 = vmatpush.msra.mxu0 %v2142
        %2376 = vmatpush.msra.mxu0 %v2140
        %2377 = vmatpush.msra.mxu0 %v2138
        %2378 = vmatmul.f32.gmra.mxu0 %v2326
        %v2379 = vpop.f32.mrf.mxu0
        %v2380 = vadd.f32 %v2351, %v2379
        %2381 = vmatmul.f32.gmra.mxu0 %v2328
        %v2382 = vpop.f32.mrf.mxu0
        %v2383 = vadd.f32 %v2354, %v2382
        %2384 = vmatmul.f32.gmra.mxu0 %v2330
        %v2385 = vpop.f32.mrf.mxu0
        %v2386 = vadd.f32 %v2357, %v2385
        %2387 = vmatmul.f32.gmra.mxu0 %v2332
        %v2388 = vpop.f32.mrf.mxu0
        %v2389 = vadd.f32 %v2360, %v2388
        %2390 = vdwg.mxu0
        %2391 = vmatpush.msra.mxu0 %v2092
        %2392 = vmatpush.msra.mxu0 %v2090
        %2393 = vmatpush.msra.mxu0 %v2088
        %2394 = vmatpush.msra.mxu0 %v2086
        %2395 = vmatpush.msra.mxu0 %v2039
        %2396 = vmatpush.msra.mxu0 %v2037
        %2397 = vmatpush.msra.mxu0 %v2035
        %2398 = vmatpush.msra.mxu0 %v2033
        %2399 = vmatpush.msra.mxu0 %v1986
        %2400 = vmatpush.msra.mxu0 %v1984
        %2401 = vmatpush.msra.mxu0 %v1982
        %2402 = vmatpush.msra.mxu0 %v1980
        %2403 = vmatpush.msra.mxu0 %v1933
        %2404 = vmatpush.msra.mxu0 %v1931
        %2405 = vmatpush.msra.mxu0 %v1929
        %2406 = vmatpush.msra.mxu0 %v1927
        %2407 = vmatmul.f32.gmra.mxu0 %v2325
        %v2408 = vpop.f32.mrf.mxu0
        %v2409 = vadd.f32 0.0, %v2408
        %2410 = vmatmul.f32.gmra.mxu0 %v2327
        %v2411 = vpop.f32.mrf.mxu0
        %v2412 = vadd.f32 0.0, %v2411
        %2413 = vmatmul.f32.gmra.mxu0 %v2329
        %v2414 = vpop.f32.mrf.mxu0
        %v2415 = vadd.f32 0.0, %v2414
        %2416 = vmatmul.f32.gmra.mxu0 %v2331
        %v2417 = vpop.f32.mrf.mxu0
        %v2418 = vadd.f32 0.0, %v2417
        %2419 = vdwg.mxu0
        %2420 = vmatpush.msra.mxu0 %v2304
        %2421 = vmatpush.msra.mxu0 %v2302
        %2422 = vmatpush.msra.mxu0 %v2300
        %2423 = vmatpush.msra.mxu0 %v2298
        %2424 = vmatpush.msra.mxu0 %v2251
        %2425 = vmatpush.msra.mxu0 %v2249
        %2426 = vmatpush.msra.mxu0 %v2247
        %2427 = vmatpush.msra.mxu0 %v2245
        %2428 = vmatpush.msra.mxu0 %v2198
        %2429 = vmatpush.msra.mxu0 %v2196
        %2430 = vmatpush.msra.mxu0 %v2194
        %2431 = vmatpush.msra.mxu0 %v2192
        %2432 = vmatpush.msra.mxu0 %v2145
        %2433 = vmatpush.msra.mxu0 %v2143
        %2434 = vmatpush.msra.mxu0 %v2141
        %2435 = vmatpush.msra.mxu0 %v2139
        %2436 = vmatmul.f32.gmra.mxu0 %v2326
        %v2437 = vpop.f32.mrf.mxu0
        %v2438 = vadd.f32 %v2409, %v2437
        %2439 = vmatmul.f32.gmra.mxu0 %v2328
        %v2440 = vpop.f32.mrf.mxu0
        %v2441 = vadd.f32 %v2412, %v2440
        %2442 = vmatmul.f32.gmra.mxu0 %v2330
        %v2443 = vpop.f32.mrf.mxu0
        %v2444 = vadd.f32 %v2415, %v2443
        %2445 = vmatmul.f32.gmra.mxu0 %v2332
        %v2446 = vpop.f32.mrf.mxu0
        %v2447 = vadd.f32 %v2418, %v2446
        %2448 = vdwg.mxu0
        %2449 = vmatpush.msra.mxu0 %v2112
        %2450 = vmatpush.msra.mxu0 %v2111
        %2451 = vmatpush.msra.mxu0 %v2110
        %2452 = vmatpush.msra.mxu0 %v2109
        %2453 = vmatpush.msra.mxu0 %v2059
        %2454 = vmatpush.msra.mxu0 %v2058
        %2455 = vmatpush.msra.mxu0 %v2057
        %2456 = vmatpush.msra.mxu0 %v2056
        %2457 = vmatpush.msra.mxu0 %v2006
        %2458 = vmatpush.msra.mxu0 %v2005
        %2459 = vmatpush.msra.mxu0 %v2004
        %2460 = vmatpush.msra.mxu0 %v2003
        %2461 = vmatpush.msra.mxu0 %v1953
        %2462 = vmatpush.msra.mxu0 %v1952
        %2463 = vmatpush.msra.mxu0 %v1951
        %2464 = vmatpush.msra.mxu0 %v1950
        %2465 = vmatmul.f32.gmra.mxu0 %v2325
        %v2466 = vpop.f32.mrf.mxu0
        %v2467 = vadd.f32 0.0, %v2466
        %2468 = vmatmul.f32.gmra.mxu0 %v2327
        %v2469 = vpop.f32.mrf.mxu0
        %v2470 = vadd.f32 0.0, %v2469
        %2471 = vmatmul.f32.gmra.mxu0 %v2329
        %v2472 = vpop.f32.mrf.mxu0
        %v2473 = vadd.f32 0.0, %v2472
        %2474 = vmatmul.f32.gmra.mxu0 %v2331
        %v2475 = vpop.f32.mrf.mxu0
        %v2476 = vadd.f32 0.0, %v2475
        %2477 = vdwg.mxu0
        %2478 = vmatpush.msra.mxu0 %v2324
        %2479 = vmatpush.msra.mxu0 %v2323
        %2480 = vmatpush.msra.mxu0 %v2322
        %2481 = vmatpush.msra.mxu0 %v2321
        %2482 = vmatpush.msra.mxu0 %v2271
        %2483 = vmatpush.msra.mxu0 %v2270
        %2484 = vmatpush.msra.mxu0 %v2269
        %2485 = vmatpush.msra.mxu0 %v2268
        %2486 = vmatpush.msra.mxu0 %v2218
        %2487 = vmatpush.msra.mxu0 %v2217
        %2488 = vmatpush.msra.mxu0 %v2216
        %2489 = vmatpush.msra.mxu0 %v2215
        %2490 = vmatpush.msra.mxu0 %v2165
        %2491 = vmatpush.msra.mxu0 %v2164
        %2492 = vmatpush.msra.mxu0 %v2163
        %2493 = vmatpush.msra.mxu0 %v2162
        %2494 = vmatmul.f32.gmra.mxu0 %v2326
        %v2495 = vpop.f32.mrf.mxu0
        %v2496 = vadd.f32 %v2467, %v2495
        %2497 = vmatmul.f32.gmra.mxu0 %v2328
        %v2498 = vpop.f32.mrf.mxu0
        %v2499 = vadd.f32 %v2470, %v2498
        %2500 = vmatmul.f32.gmra.mxu0 %v2330
        %v2501 = vpop.f32.mrf.mxu0
        %v2502 = vadd.f32 %v2473, %v2501
        %2503 = vmatmul.f32.gmra.mxu0 %v2332
        %v2504 = vpop.f32.mrf.mxu0
        %v2505 = vadd.f32 %v2476, %v2504
        %2506 = vdwg.mxu0
        %v2507 = vadd.f32 %v1774, %v2380
        %v2508 = vadd.f32 %v1832, %v2438
        %v2509 = vadd.f32 %v1890, %v2496
        %v2510 = vadd.f32 %v1777, %v2383
        %v2511 = vadd.f32 %v1835, %v2441
        %v2512 = vadd.f32 %v1893, %v2499
        %v2513 = vadd.f32 %v1780, %v2386
        %v2514 = vadd.f32 %v1838, %v2444
        %v2515 = vadd.f32 %v1896, %v2502
        %v2516 = vadd.f32 %v1783, %v2389
        %v2517 = vadd.f32 %v1841, %v2447
        %v2518 = vadd.f32 %v1899, %v2505
        %2519 = vrot.lane.b32.xlu0 %v718, 78
        %v2520 = vpop.permute.xlu0 %2519
        %2521 = vrot.lane.b32.xlu0 %v719, 78
        %v2522 = vpop.permute.xlu0 %2521
        %2523 = vrot.lane.b32.xlu0 %v720, 78
        %v2524 = vpop.permute.xlu0 %2523
        %2525 = vrot.lane.b32.xlu0 %v721, 78
        %v2526 = vpop.permute.xlu0 %2525
        %2527 = vrot.lane.b32.xlu0 %v722, 78
        %v2528 = vpop.permute.xlu0 %2527
        %2529 = vrot.lane.b32.xlu0 %v723, 78
        %v2530 = vpop.permute.xlu0 %2529
        %2531 = vrot.lane.b32.xlu0 %v724, 78
        %v2532 = vpop.permute.xlu0 %2531
        %2533 = vrot.lane.b32.xlu0 %v725, 78
        %v2534 = vpop.permute.xlu0 %2533
        %2535 = vrot.lane.b32.xlu0 %v726, 78
        %v2536 = vpop.permute.xlu0 %2535
        %2537 = vrot.lane.b32.xlu0 %v727, 78
        %v2538 = vpop.permute.xlu0 %2537
        %2539 = vrot.lane.b32.xlu0 %v728, 78
        %v2540 = vpop.permute.xlu0 %2539
        %2541 = vrot.lane.b32.xlu0 %v729, 78
        %v2542 = vpop.permute.xlu0 %2541
        %vm2543 = vcmask 637952
        %v2544 = vsel %vm2543, %v2520, %v2522
        %v2545 = vsel %vm2543, %v2522, %v2524
        %v2546 = vsel %vm2543, %v2526, %v2528
        %v2547 = vsel %vm2543, %v2528, %v2530
        %v2548 = vsel %vm2543, %v2532, %v2534
        %v2549 = vsel %vm2543, %v2534, %v2536
        %v2550 = vsel %vm2543, %v2538, %v2540
        %v2551 = vsel %vm2543, %v2540, %v2542
        %v2568 = vsel %vm2543, %v2524, %v2520
        %v2569 = vsel %vm2543, %v2530, %v2526
        %v2570 = vsel %vm2543, %v2536, %v2532
        %v2571 = vsel %vm2543, %v2542, %v2538
        %v2572 = vld [vmem:[#allocation3 + $0x30] sm:$0xff]
        %v2573 = vld [vmem:[#allocation3 + $0x68] sm:$0xff]
        %v2574 = vld [vmem:[#allocation3 + $0xa0] sm:$0xff]
        %v2575 = vld [vmem:[#allocation3 + $0xd8] sm:$0xff]
        %vm2576 = vcmask 261120
        %v2578 = vsel %vm2576, %v2572, 0
        %v2581 = vsel %vm2576, %v2573, 0
        %v2584 = vsel %vm2576, %v2574, 0
        %v2587 = vsel %vm2576, %v2575, 0
        %2589 = vmatpush.msra.mxu0 0.0
        %2590 = vmatpush.msra.mxu0 0.0
        %2591 = vmatpush.msra.mxu0 0.0
        %2592 = vmatpush.msra.mxu0 0.0
        %2593 = vmatpush.msra.mxu0 0.0
        %2594 = vmatpush.msra.mxu0 0.0
        %2595 = vmatpush.msra.mxu0 0.0
        %2596 = vmatpush.msra.mxu0 0.0
        %2597 = vmatpush.msra.mxu0 0.0
        %2598 = vmatpush.msra.mxu0 0.0
        %2599 = vmatpush.msra.mxu0 0.0
        %2600 = vmatpush.msra.mxu0 0.0
        %2601 = vmatpush.msra.mxu0 %v2550
        %2602 = vmatpush.msra.mxu0 %v2548
        %2603 = vmatpush.msra.mxu0 %v2546
        %2604 = vmatpush.msra.mxu0 %v2544
        %2605 = vmatmul.f32.gmra.mxu0 %v2578
        %v2606 = vpop.f32.mrf.mxu0
        %v2607 = vadd.f32 0.0, %v2606
        %2608 = vmatmul.f32.gmra.mxu0 %v2581
        %v2609 = vpop.f32.mrf.mxu0
        %v2610 = vadd.f32 0.0, %v2609
        %2611 = vmatmul.f32.gmra.mxu0 %v2584
        %v2612 = vpop.f32.mrf.mxu0
        %v2613 = vadd.f32 0.0, %v2612
        %2614 = vmatmul.f32.gmra.mxu0 %v2587
        %v2615 = vpop.f32.mrf.mxu0
        %v2616 = vadd.f32 0.0, %v2615
        %2617 = vdwg.mxu0
        %2618 = vmatpush.msra.mxu0 0.0
        %2619 = vmatpush.msra.mxu0 0.0
        %2620 = vmatpush.msra.mxu0 0.0
        %2621 = vmatpush.msra.mxu0 0.0
        %2622 = vmatpush.msra.mxu0 0.0
        %2623 = vmatpush.msra.mxu0 0.0
        %2624 = vmatpush.msra.mxu0 0.0
        %2625 = vmatpush.msra.mxu0 0.0
        %2626 = vmatpush.msra.mxu0 0.0
        %2627 = vmatpush.msra.mxu0 0.0
        %2628 = vmatpush.msra.mxu0 0.0
        %2629 = vmatpush.msra.mxu0 0.0
        %2630 = vmatpush.msra.mxu0 %v2551
        %2631 = vmatpush.msra.mxu0 %v2549
        %2632 = vmatpush.msra.mxu0 %v2547
        %2633 = vmatpush.msra.mxu0 %v2545
        %2634 = vmatmul.f32.gmra.mxu0 %v2578
        %v2635 = vpop.f32.mrf.mxu0
        %v2636 = vadd.f32 0.0, %v2635
        %2637 = vmatmul.f32.gmra.mxu0 %v2581
        %v2638 = vpop.f32.mrf.mxu0
        %v2639 = vadd.f32 0.0, %v2638
        %2640 = vmatmul.f32.gmra.mxu0 %v2584
        %v2641 = vpop.f32.mrf.mxu0
        %v2642 = vadd.f32 0.0, %v2641
        %2643 = vmatmul.f32.gmra.mxu0 %v2587
        %v2644 = vpop.f32.mrf.mxu0
        %v2645 = vadd.f32 0.0, %v2644
        %2646 = vdwg.mxu0
        %2647 = vmatpush.msra.mxu0 0.0
        %2648 = vmatpush.msra.mxu0 0.0
        %2649 = vmatpush.msra.mxu0 0.0
        %2650 = vmatpush.msra.mxu0 0.0
        %2651 = vmatpush.msra.mxu0 0.0
        %2652 = vmatpush.msra.mxu0 0.0
        %2653 = vmatpush.msra.mxu0 0.0
        %2654 = vmatpush.msra.mxu0 0.0
        %2655 = vmatpush.msra.mxu0 0.0
        %2656 = vmatpush.msra.mxu0 0.0
        %2657 = vmatpush.msra.mxu0 0.0
        %2658 = vmatpush.msra.mxu0 0.0
        %2659 = vmatpush.msra.mxu0 %v2571
        %2660 = vmatpush.msra.mxu0 %v2570
        %2661 = vmatpush.msra.mxu0 %v2569
        %2662 = vmatpush.msra.mxu0 %v2568
        %2663 = vmatmul.f32.gmra.mxu0 %v2578
        %v2664 = vpop.f32.mrf.mxu0
        %v2665 = vadd.f32 0.0, %v2664
        %2666 = vmatmul.f32.gmra.mxu0 %v2581
        %v2667 = vpop.f32.mrf.mxu0
        %v2668 = vadd.f32 0.0, %v2667
        %2669 = vmatmul.f32.gmra.mxu0 %v2584
        %v2670 = vpop.f32.mrf.mxu0
        %v2671 = vadd.f32 0.0, %v2670
        %2672 = vmatmul.f32.gmra.mxu0 %v2587
        %v2673 = vpop.f32.mrf.mxu0
        %v2674 = vadd.f32 0.0, %v2673
        %2675 = vdwg.mxu0
        %v2676 = vadd.f32 %v2507, %v2607
        %v2677 = vadd.f32 %v2508, %v2636
        %v2678 = vadd.f32 %v2509, %v2665
        %v2679 = vadd.f32 %v2510, %v2610
        %v2680 = vadd.f32 %v2511, %v2639
        %v2681 = vadd.f32 %v2512, %v2668
        %v2682 = vadd.f32 %v2513, %v2613
        %v2683 = vadd.f32 %v2514, %v2642
        %v2684 = vadd.f32 %v2515, %v2671
        %v2685 = vadd.f32 %v2516, %v2616
        %v2686 = vadd.f32 %v2517, %v2645
        %v2687 = vadd.f32 %v2518, %v2674
        %v2688 = vld [vmem:[%s5] sm:$0xff]
        %v2689 = vld [vmem:[%s5 + $0x8] sm:$0xff]
        %v2690 = vld [vmem:[%s5 + $0x10] sm:$0xff]
        %v2691 = vld [vmem:[%s5 + $0x18] sm:$0xff]
        %2693 = vset.pattern.permute.xlu0 0
        %2694 = vperm.xlu0 %2693, %v2688
        %v2695 = vpop.permute.xlu0 %2694
        %2698 = vset.pattern.permute.xlu0 0
        %2699 = vperm.xlu0 %2698, %v2689
        %v2700 = vpop.permute.xlu0 %2699
        %2703 = vset.pattern.permute.xlu0 0
        %2704 = vperm.xlu0 %2703, %v2690
        %v2705 = vpop.permute.xlu0 %2704
        %2708 = vset.pattern.permute.xlu0 0
        %2709 = vperm.xlu0 %2708, %v2691
        %v2710 = vpop.permute.xlu0 %2709
        %v2712 = vadd.f32 %v2676, %v2695
        %v2713 = vadd.f32 %v2677, %v2695
        %v2714 = vadd.f32 %v2678, %v2695
        %v2715 = vadd.f32 %v2679, %v2700
        %v2716 = vadd.f32 %v2680, %v2700
        %v2717 = vadd.f32 %v2681, %v2700
        %v2718 = vadd.f32 %v2682, %v2705
        %v2719 = vadd.f32 %v2683, %v2705
        %v2720 = vadd.f32 %v2684, %v2705
        %v2721 = vadd.f32 %v2685, %v2710
        %v2722 = vadd.f32 %v2686, %v2710
        %v2723 = vadd.f32 %v2687, %v2710
        %v2724 = vmax.f32 %v2712, 0.0
        %v2725 = vmax.f32 %v2713, 0.0
        %v2726 = vmax.f32 %v2714, 0.0
        %v2727 = vmax.f32 %v2715, 0.0
        %v2728 = vmax.f32 %v2716, 0.0
        %v2729 = vmax.f32 %v2717, 0.0
        %v2730 = vmax.f32 %v2718, 0.0
        %v2731 = vmax.f32 %v2719, 0.0
        %v2732 = vmax.f32 %v2720, 0.0
        %v2733 = vmax.f32 %v2721, 0.0
        %v2734 = vmax.f32 %v2722, 0.0
        %v2735 = vmax.f32 %v2723, 0.0
        %2748 = vrot.lane.b32.xlu0 %v2724, 127
        %v2749 = vpop.permute.xlu0 %2748
        %2750 = vrot.lane.b32.xlu0 %v2725, 127
        %v2751 = vpop.permute.xlu0 %2750
        %2752 = vrot.lane.b32.xlu0 %v2726, 127
        %v2753 = vpop.permute.xlu0 %2752
        %2754 = vrot.lane.b32.xlu0 %v2727, 127
        %v2755 = vpop.permute.xlu0 %2754
        %2756 = vrot.lane.b32.xlu0 %v2728, 127
        %v2757 = vpop.permute.xlu0 %2756
        %2758 = vrot.lane.b32.xlu0 %v2729, 127
        %v2759 = vpop.permute.xlu0 %2758
        %2760 = vrot.lane.b32.xlu0 %v2730, 127
        %v2761 = vpop.permute.xlu0 %2760
        %2762 = vrot.lane.b32.xlu0 %v2731, 127
        %v2763 = vpop.permute.xlu0 %2762
        %2764 = vrot.lane.b32.xlu0 %v2732, 127
        %v2765 = vpop.permute.xlu0 %2764
        %2766 = vrot.lane.b32.xlu0 %v2733, 127
        %v2767 = vpop.permute.xlu0 %2766
        %2768 = vrot.lane.b32.xlu0 %v2734, 127
        %v2769 = vpop.permute.xlu0 %2768
        %2770 = vrot.lane.b32.xlu0 %v2735, 127
        %v2771 = vpop.permute.xlu0 %2770
        %v2772 = vsel %vm1410, %v2749, %v2751
        %v2773 = vsel %vm1410, %v2751, %v2753
        %v2774 = vsel %vm1410, %v2755, %v2757
        %v2775 = vsel %vm1410, %v2757, %v2759
        %v2776 = vsel %vm1410, %v2761, %v2763
        %v2777 = vsel %vm1410, %v2763, %v2765
        %v2778 = vsel %vm1410, %v2767, %v2769
        %v2779 = vsel %vm1410, %v2769, %v2771
        %v2796 = vsel %vm1410, %v2753, %v2749
        %v2797 = vsel %vm1410, %v2759, %v2755
        %v2798 = vsel %vm1410, %v2765, %v2761
        %v2799 = vsel %vm1410, %v2771, %v2767
        %v2800 = vmax.f32 %v2724, %v2772
        %v2801 = vmax.f32 %v2725, %v2773
        %v2802 = vmax.f32 %v2726, %v2796
        %v2803 = vmax.f32 %v2727, %v2774
        %v2804 = vmax.f32 %v2728, %v2775
        %v2805 = vmax.f32 %v2729, %v2797
        %v2806 = vmax.f32 %v2730, %v2776
        %v2807 = vmax.f32 %v2731, %v2777
        %v2808 = vmax.f32 %v2732, %v2798
        %v2809 = vmax.f32 %v2733, %v2778
        %v2810 = vmax.f32 %v2734, %v2779
        %v2811 = vmax.f32 %v2735, %v2799
        %2824 = vrot.lane.b32.xlu0 %v2800, 104
        %v2825 = vpop.permute.xlu0 %2824
        %2826 = vrot.lane.b32.xlu0 %v2801, 104
        %v2827 = vpop.permute.xlu0 %2826
        %2828 = vrot.lane.b32.xlu0 %v2802, 104
        %v2829 = vpop.permute.xlu0 %2828
        %2830 = vrot.lane.b32.xlu0 %v2803, 104
        %v2831 = vpop.permute.xlu0 %2830
        %2832 = vrot.lane.b32.xlu0 %v2804, 104
        %v2833 = vpop.permute.xlu0 %2832
        %2834 = vrot.lane.b32.xlu0 %v2805, 104
        %v2835 = vpop.permute.xlu0 %2834
        %2836 = vrot.lane.b32.xlu0 %v2806, 104
        %v2837 = vpop.permute.xlu0 %2836
        %2838 = vrot.lane.b32.xlu0 %v2807, 104
        %v2839 = vpop.permute.xlu0 %2838
        %2840 = vrot.lane.b32.xlu0 %v2808, 104
        %v2841 = vpop.permute.xlu0 %2840
        %2842 = vrot.lane.b32.xlu0 %v2809, 104
        %v2843 = vpop.permute.xlu0 %2842
        %2844 = vrot.lane.b32.xlu0 %v2810, 104
        %v2845 = vpop.permute.xlu0 %2844
        %2846 = vrot.lane.b32.xlu0 %v2811, 104
        %v2847 = vpop.permute.xlu0 %2846
        %v2848 = vsel %vm1978, %v2825, %v2827
        %v2849 = vsel %vm1978, %v2827, %v2829
        %v2850 = vsel %vm1978, %v2831, %v2833
        %v2851 = vsel %vm1978, %v2833, %v2835
        %v2852 = vsel %vm1978, %v2837, %v2839
        %v2853 = vsel %vm1978, %v2839, %v2841
        %v2854 = vsel %vm1978, %v2843, %v2845
        %v2855 = vsel %vm1978, %v2845, %v2847
        %v2872 = vsel %vm1978, %v2829, %v2825
        %v2873 = vsel %vm1978, %v2835, %v2831
        %v2874 = vsel %vm1978, %v2841, %v2837
        %v2875 = vsel %vm1978, %v2847, %v2843
        %v2876 = vmax.f32 %v2800, %v2848
        %v2877 = vmax.f32 %v2801, %v2849
        %v2878 = vmax.f32 %v2802, %v2872
        %v2879 = vmax.f32 %v2803, %v2850
        %v2880 = vmax.f32 %v2804, %v2851
        %v2881 = vmax.f32 %v2805, %v2873
        %v2882 = vmax.f32 %v2806, %v2852
        %v2883 = vmax.f32 %v2807, %v2853
        %v2884 = vmax.f32 %v2808, %v2874
        %v2885 = vmax.f32 %v2809, %v2854
        %v2886 = vmax.f32 %v2810, %v2855
        %v2887 = vmax.f32 %v2811, %v2875
        %v2888 = vld [vmem:[#allocation6] sm:$0xff]
        %v2889 = vld [vmem:[#allocation6 + $0x8] sm:$0xff]
        %v2890 = vld [vmem:[#allocation6 + $0x10] sm:$0xff]
        %v2891 = vld [vmem:[#allocation6 + $0x18] sm:$0xff]
        %v2892 = vld [vmem:[#allocation6 + $0x20] sm:$0xff]
        %v2893 = vld [vmem:[#allocation6 + $0x28] sm:$0xff]
        %v2894 = vld [vmem:[#allocation6 + $0x30] sm:$0xff]
        %v2895 = vld [vmem:[#allocation6 + $0x38] sm:$0xff]
        %v2896 = vld [vmem:[#allocation6 + $0x40] sm:$0xff]
        %v2897 = vld [vmem:[#allocation6 + $0x48] sm:$0xff]
        %v2898 = vld [vmem:[#allocation6 + $0x50] sm:$0xff]
        %v2899 = vld [vmem:[#allocation6 + $0x58] sm:$0xff]
        %v2900 = vld [vmem:[#allocation6 + $0x60] sm:$0xff]
        %v2901 = vld [vmem:[#allocation6 + $0x68] sm:$0xff]
        %v2902 = vld [vmem:[#allocation6 + $0x70] sm:$0xff]
        %v2903 = vld [vmem:[#allocation6 + $0x78] sm:$0xff]
        %v2904 = vld [vmem:[#allocation6 + $0x80] sm:$0xff]
        %v2905 = vld [vmem:[#allocation6 + $0x88] sm:$0xff]
        %v2906 = vld [vmem:[#allocation6 + $0x90] sm:$0xff]
        %v2907 = vld [vmem:[#allocation6 + $0x98] sm:$0xff]
        %v2908 = vld [vmem:[#allocation6 + $0xa0] sm:$0xff]
        %v2909 = vld [vmem:[#allocation6 + $0xa8] sm:$0xff]
        %v2910 = vld [vmem:[#allocation6 + $0xb0] sm:$0xff]
        %v2911 = vld [vmem:[#allocation6 + $0xb8] sm:$0xff]
        %v2912 = vld [vmem:[#allocation6 + $0xc0] sm:$0xff]
        %v2913 = vld [vmem:[#allocation6 + $0xc8] sm:$0xff]
        %v2914 = vld [vmem:[#allocation6 + $0xd0] sm:$0xff]
        %v2915 = vld [vmem:[#allocation6 + $0xd8] sm:$0xff]
        %v2916 = vld [vmem:[#allocation6 + $0xe0] sm:$0xff]
        %v2917 = vld [vmem:[#allocation6 + $0xe8] sm:$0xff]
        %v2918 = vld [vmem:[#allocation6 + $0xf0] sm:$0xff]
        %v2919 = vld [vmem:[#allocation6 + $0xf8] sm:$0xff]
        %v2920 = vld [vmem:[#allocation6 + $0x100] sm:$0xff]
        %v2921 = vld [vmem:[#allocation6 + $0x108] sm:$0xff]
        %v2922 = vld [vmem:[#allocation6 + $0x110] sm:$0xff]
        %v2923 = vld [vmem:[#allocation6 + $0x118] sm:$0xff]
        %v2924 = vld [vmem:[#allocation6 + $0x120] sm:$0xff]
        %v2925 = vld [vmem:[#allocation6 + $0x128] sm:$0xff]
        %v2926 = vld [vmem:[#allocation6 + $0x130] sm:$0xff]
        %v2927 = vld [vmem:[#allocation6 + $0x138] sm:$0xff]
        %v2928 = vld [vmem:[#allocation6 + $0x140] sm:$0xff]
        %v2929 = vld [vmem:[#allocation6 + $0x148] sm:$0xff]
        %v2930 = vld [vmem:[#allocation6 + $0x150] sm:$0xff]
        %v2931 = vld [vmem:[#allocation6 + $0x158] sm:$0xff]
        %v2932 = vld [vmem:[#allocation6 + $0x160] sm:$0xff]
        %v2933 = vld [vmem:[#allocation6 + $0x168] sm:$0xff]
        %v2934 = vld [vmem:[#allocation6 + $0x170] sm:$0xff]
        %v2935 = vld [vmem:[#allocation6 + $0x178] sm:$0xff]
        %2936 = vmatpush.msra.mxu0 %v2903
        %2937 = vmatpush.msra.mxu0 %v2902
        %2938 = vmatpush.msra.mxu0 %v2901
        %2939 = vmatpush.msra.mxu0 %v2900
        %2940 = vmatpush.msra.mxu0 %v2899
        %2941 = vmatpush.msra.mxu0 %v2898
        %2942 = vmatpush.msra.mxu0 %v2897
        %2943 = vmatpush.msra.mxu0 %v2896
        %2944 = vmatpush.msra.mxu0 %v2895
        %2945 = vmatpush.msra.mxu0 %v2894
        %2946 = vmatpush.msra.mxu0 %v2893
        %2947 = vmatpush.msra.mxu0 %v2892
        %2948 = vmatpush.msra.mxu0 %v2891
        %2949 = vmatpush.msra.mxu0 %v2890
        %2950 = vmatpush.msra.mxu0 %v2889
        %2951 = vmatpush.msra.mxu0 %v2888
        %2952 = vmatmul.f32.gmra.mxu0 %v2876
        %v2953 = vpop.f32.mrf.mxu0
        %v2954 = vadd.f32 0.0, %v2953
        %2955 = vmatmul.f32.gmra.mxu0 %v2879
        %v2956 = vpop.f32.mrf.mxu0
        %v2957 = vadd.f32 0.0, %v2956
        %2958 = vmatmul.f32.gmra.mxu0 %v2882
        %v2959 = vpop.f32.mrf.mxu0
        %v2960 = vadd.f32 0.0, %v2959
        %2961 = vmatmul.f32.gmra.mxu0 %v2885
        %v2962 = vpop.f32.mrf.mxu0
        %v2963 = vadd.f32 0.0, %v2962
        %2964 = vdwg.mxu0
        %2965 = vmatpush.msra.mxu0 %v2919
        %2966 = vmatpush.msra.mxu0 %v2918
        %2967 = vmatpush.msra.mxu0 %v2917
        %2968 = vmatpush.msra.mxu0 %v2916
        %2969 = vmatpush.msra.mxu0 %v2915
        %2970 = vmatpush.msra.mxu0 %v2914
        %2971 = vmatpush.msra.mxu0 %v2913
        %2972 = vmatpush.msra.mxu0 %v2912
        %2973 = vmatpush.msra.mxu0 %v2911
        %2974 = vmatpush.msra.mxu0 %v2910
        %2975 = vmatpush.msra.mxu0 %v2909
        %2976 = vmatpush.msra.mxu0 %v2908
        %2977 = vmatpush.msra.mxu0 %v2907
        %2978 = vmatpush.msra.mxu0 %v2906
        %2979 = vmatpush.msra.mxu0 %v2905
        %2980 = vmatpush.msra.mxu0 %v2904
        %2981 = vmatmul.f32.gmra.mxu0 %v2877
        %v2982 = vpop.f32.mrf.mxu0
        %v2983 = vadd.f32 %v2954, %v2982
        %2984 = vmatmul.f32.gmra.mxu0 %v2880
        %v2985 = vpop.f32.mrf.mxu0
        %v2986 = vadd.f32 %v2957, %v2985
        %2987 = vmatmul.f32.gmra.mxu0 %v2883
        %v2988 = vpop.f32.mrf.mxu0
        %v2989 = vadd.f32 %v2960, %v2988
        %2990 = vmatmul.f32.gmra.mxu0 %v2886
        %v2991 = vpop.f32.mrf.mxu0
        %v2992 = vadd.f32 %v2963, %v2991
        %2993 = vdwg.mxu0
        %2994 = vmatpush.msra.mxu0 %v2935
        %2995 = vmatpush.msra.mxu0 %v2934
        %2996 = vmatpush.msra.mxu0 %v2933
        %2997 = vmatpush.msra.mxu0 %v2932
        %2998 = vmatpush.msra.mxu0 %v2931
        %2999 = vmatpush.msra.mxu0 %v2930
        %3000 = vmatpush.msra.mxu0 %v2929
        %3001 = vmatpush.msra.mxu0 %v2928
        %3002 = vmatpush.msra.mxu0 %v2927
        %3003 = vmatpush.msra.mxu0 %v2926
        %3004 = vmatpush.msra.mxu0 %v2925
        %3005 = vmatpush.msra.mxu0 %v2924
        %3006 = vmatpush.msra.mxu0 %v2923
        %3007 = vmatpush.msra.mxu0 %v2922
        %3008 = vmatpush.msra.mxu0 %v2921
        %3009 = vmatpush.msra.mxu0 %v2920
        %3010 = vmatmul.f32.gmra.mxu0 %v2878
        %v3011 = vpop.f32.mrf.mxu0
        %v3012 = vadd.f32 %v2983, %v3011
        %3013 = vmatmul.f32.gmra.mxu0 %v2881
        %v3014 = vpop.f32.mrf.mxu0
        %v3015 = vadd.f32 %v2986, %v3014
        %3016 = vmatmul.f32.gmra.mxu0 %v2884
        %v3017 = vpop.f32.mrf.mxu0
        %v3018 = vadd.f32 %v2989, %v3017
        %3019 = vmatmul.f32.gmra.mxu0 %v2887
        %v3020 = vpop.f32.mrf.mxu0
        %v3021 = vadd.f32 %v2992, %v3020
        %3022 = vdwg.mxu0
        %3027 = vrot.lane.b32.xlu0 %v3012, 13
        %v3028 = vpop.permute.xlu0 %3027
        %3029 = vrot.lane.b32.xlu0 %v3015, 13
        %v3030 = vpop.permute.xlu0 %3029
        %3031 = vrot.lane.b32.xlu0 %v3018, 13
        %v3032 = vpop.permute.xlu0 %3031
        %3033 = vrot.lane.b32.xlu0 %v3021, 13
        %v3034 = vpop.permute.xlu0 %3033
        %3039 = vrot.lane.b32.xlu0 %v3012, 12
        %v3040 = vpop.permute.xlu0 %3039
        %3041 = vrot.lane.b32.xlu0 %v3015, 12
        %v3042 = vpop.permute.xlu0 %3041
        %3043 = vrot.lane.b32.xlu0 %v3018, 12
        %v3044 = vpop.permute.xlu0 %3043
        %3045 = vrot.lane.b32.xlu0 %v3021, 12
        %v3046 = vpop.permute.xlu0 %3045
        %3051 = vrot.lane.b32.xlu0 %v3012, 11
        %v3052 = vpop.permute.xlu0 %3051
        %3053 = vrot.lane.b32.xlu0 %v3015, 11
        %v3054 = vpop.permute.xlu0 %3053
        %3055 = vrot.lane.b32.xlu0 %v3018, 11
        %v3056 = vpop.permute.xlu0 %3055
        %3057 = vrot.lane.b32.xlu0 %v3021, 11
        %v3058 = vpop.permute.xlu0 %3057
        %3063 = vrot.lane.b32.xlu0 %v3012, 1
        %v3064 = vpop.permute.xlu0 %3063
        %3065 = vrot.lane.b32.xlu0 %v3015, 1
        %v3066 = vpop.permute.xlu0 %3065
        %3067 = vrot.lane.b32.xlu0 %v3018, 1
        %v3068 = vpop.permute.xlu0 %3067
        %3069 = vrot.lane.b32.xlu0 %v3021, 1
        %v3070 = vpop.permute.xlu0 %3069
        %3075 = vrot.lane.b32.xlu0 %v3012, 127
        %v3076 = vpop.permute.xlu0 %3075
        %3077 = vrot.lane.b32.xlu0 %v3015, 127
        %v3078 = vpop.permute.xlu0 %3077
        %3079 = vrot.lane.b32.xlu0 %v3018, 127
        %v3080 = vpop.permute.xlu0 %3079
        %3081 = vrot.lane.b32.xlu0 %v3021, 127
        %v3082 = vpop.permute.xlu0 %3081
        %3087 = vrot.lane.b32.xlu0 %v3012, 117
        %v3088 = vpop.permute.xlu0 %3087
        %3089 = vrot.lane.b32.xlu0 %v3015, 117
        %v3090 = vpop.permute.xlu0 %3089
        %3091 = vrot.lane.b32.xlu0 %v3018, 117
        %v3092 = vpop.permute.xlu0 %3091
        %3093 = vrot.lane.b32.xlu0 %v3021, 117
        %v3094 = vpop.permute.xlu0 %3093
        %3099 = vrot.lane.b32.xlu0 %v3012, 116
        %v3100 = vpop.permute.xlu0 %3099
        %3101 = vrot.lane.b32.xlu0 %v3015, 116
        %v3102 = vpop.permute.xlu0 %3101
        %3103 = vrot.lane.b32.xlu0 %v3018, 116
        %v3104 = vpop.permute.xlu0 %3103
        %3105 = vrot.lane.b32.xlu0 %v3021, 116
        %v3106 = vpop.permute.xlu0 %3105
        %v3111 = vld [vmem:[%s7] sm:$0x3]
        %3112 = vrot.lane.b32.xlu0 %v3012, 115
        %v3113 = vpop.permute.xlu0 %3112
        %3114 = vrot.lane.b32.xlu0 %v3015, 115
        %v3115 = vpop.permute.xlu0 %3114
        %3116 = vrot.lane.b32.xlu0 %v3018, 115
        %v3117 = vpop.permute.xlu0 %3116
        %3118 = vrot.lane.b32.xlu0 %v3021, 115
        %v3119 = vpop.permute.xlu0 %3118
        %v3124 = vld [vmem:[%s7 + $0x2] sm:$0x1]
        %v3126 = vsel %vm2576, %v3124, 0
        %3128 = vmatpush.msra.mxu0 0.0
        %3129 = vmatpush.msra.mxu0 0.0
        %3130 = vmatpush.msra.mxu0 0.0
        %3131 = vmatpush.msra.mxu0 0.0
        %3132 = vmatpush.msra.mxu0 0.0
        %3133 = vmatpush.msra.mxu0 0.0
        %3134 = vmatpush.msra.mxu0 0.0
        %3135 = vmatpush.msra.mxu0 0.0
        %3136 = vmatpush.msra.mxu0 0.0
        %3137 = vmatpush.msra.mxu0 0.0
        %3138 = vmatpush.msra.mxu0 0.0
        %3139 = vmatpush.msra.mxu0 0.0
        %3140 = vmatpush.msra.mxu0 %v3119
        %3141 = vmatpush.msra.mxu0 %v3117
        %3142 = vmatpush.msra.mxu0 %v3115
        %3143 = vmatpush.msra.mxu0 %v3113
        %3144 = vmatmul.f32.gmra.mxu0 %v3126
        %v3145 = vpop.f32.mrf.mxu0
        %v3146 = vadd.f32 0.0, %v3145
        %3147 = vdwg.mxu0
        %v3149 = vperm.slane %v3111, 0
        %v3150 = vperm.slane %v3111, 1
        %3153 = vmatpush.msra.mxu0 %v3070
        %3154 = vmatpush.msra.mxu0 %v3068
        %3155 = vmatpush.msra.mxu0 %v3066
        %3156 = vmatpush.msra.mxu0 %v3064
        %3157 = vmatpush.msra.mxu0 %v3058
        %3158 = vmatpush.msra.mxu0 %v3056
        %3159 = vmatpush.msra.mxu0 %v3054
        %3160 = vmatpush.msra.mxu0 %v3052
        %3161 = vmatpush.msra.mxu0 %v3046
        %3162 = vmatpush.msra.mxu0 %v3044
        %3163 = vmatpush.msra.mxu0 %v3042
        %3164 = vmatpush.msra.mxu0 %v3040
        %3165 = vmatpush.msra.mxu0 %v3034
        %3166 = vmatpush.msra.mxu0 %v3032
        %3167 = vmatpush.msra.mxu0 %v3030
        %3168 = vmatpush.msra.mxu0 %v3028
        %3169 = vmatmul.f32.gmra.mxu0 %v3149
        %v3170 = vpop.f32.mrf.mxu0
        %v3171 = vadd.f32 %v3146, %v3170
        %3172 = vdwg.mxu0
        %3173 = vmatpush.msra.mxu0 %v3106
        %3174 = vmatpush.msra.mxu0 %v3104
        %3175 = vmatpush.msra.mxu0 %v3102
        %3176 = vmatpush.msra.mxu0 %v3100
        %3177 = vmatpush.msra.mxu0 %v3094
        %3178 = vmatpush.msra.mxu0 %v3092
        %3179 = vmatpush.msra.mxu0 %v3090
        %3180 = vmatpush.msra.mxu0 %v3088
        %3181 = vmatpush.msra.mxu0 %v3082
        %3182 = vmatpush.msra.mxu0 %v3080
        %3183 = vmatpush.msra.mxu0 %v3078
        %3184 = vmatpush.msra.mxu0 %v3076
        %3185 = vmatpush.msra.mxu0 %v3021
        %3186 = vmatpush.msra.mxu0 %v3018
        %3187 = vmatpush.msra.mxu0 %v3015
        %3188 = vmatpush.msra.mxu0 %v3012
        %3189 = vmatmul.f32.gmra.mxu0 %v3150
        %v3190 = vpop.f32.mrf.mxu0
        %v3191 = vadd.f32 %v3171, %v3190
        %3192 = vdwg.mxu0
        %v3193 = vld [vmem:[#allocation2] sm:$0x1]
        %3195 = vset.pattern.permute.xlu0 0
        %3196 = vperm.xlu0 %3195, %v3193
        %v3197 = vpop.permute.xlu0 %3196
        %v3199 = vperm.slane %v3197, 0
        %v3200 = vadd.f32 %v3191, %v3199
        %v3201 = vmax.f32 %v3200, 0.0
        %v3202 = vld [vmem:[#allocation8] sm:$0xff]
        %v3203 = vld [vmem:[#allocation8 + $0x8] sm:$0xff]
        %v3204 = vld [vmem:[#allocation8 + $0x10] sm:$0xff]
        %v3205 = vld [vmem:[#allocation8 + $0x18] sm:$0xff]
        %v3206 = vld [vmem:[#allocation8 + $0x20] sm:$0xff]
        %v3207 = vld [vmem:[#allocation8 + $0x28] sm:$0xff]
        %v3208 = vld [vmem:[#allocation8 + $0x30] sm:$0xff]
        %v3209 = vld [vmem:[#allocation8 + $0x38] sm:$0xff]
        %v3210 = vld [vmem:[#allocation8 + $0x40] sm:$0xff]
        %v3211 = vld [vmem:[#allocation8 + $0x48] sm:$0xff]
        %v3212 = vld [vmem:[#allocation8 + $0x50] sm:$0xff]
        %v3213 = vld [vmem:[#allocation8 + $0x58] sm:$0xff]
        %v3214 = vld [vmem:[#allocation8 + $0x60] sm:$0xff]
        %v3215 = vld [vmem:[#allocation8 + $0x68] sm:$0xff]
        %v3216 = vld [vmem:[#allocation8 + $0x70] sm:$0xff]
        %v3217 = vld [vmem:[#allocation8 + $0x78] sm:$0xff]
        %3218 = vmatpush.msra.mxu0 %v3217
        %3219 = vmatpush.msra.mxu0 %v3216
        %3220 = vmatpush.msra.mxu0 %v3215
        %3221 = vmatpush.msra.mxu0 %v3214
        %3222 = vmatpush.msra.mxu0 %v3213
        %3223 = vmatpush.msra.mxu0 %v3212
        %3224 = vmatpush.msra.mxu0 %v3211
        %3225 = vmatpush.msra.mxu0 %v3210
        %3226 = vmatpush.msra.mxu0 %v3209
        %3227 = vmatpush.msra.mxu0 %v3208
        %3228 = vmatpush.msra.mxu0 %v3207
        %3229 = vmatpush.msra.mxu0 %v3206
        %3230 = vmatpush.msra.mxu0 %v3205
        %3231 = vmatpush.msra.mxu0 %v3204
        %3232 = vmatpush.msra.mxu0 %v3203
        %3233 = vmatpush.msra.mxu0 %v3202
        %3234 = vmatmul.f32.gmra.mxu0 %v3201
        %v3235 = vpop.f32.mrf.mxu0
        %v3236 = vadd.f32 0.0, %v3235
        %3237 = vdwg.mxu0
        %v3238 = vld [vmem:[#allocation9] sm:$0xff]
        %v3239 = vld [vmem:[#allocation9 + $0x8] sm:$0xff]
        %v3240 = vld [vmem:[#allocation9 + $0x10] sm:$0xff]
        %v3241 = vld [vmem:[#allocation9 + $0x18] sm:$0xff]
        %v3242 = vld [vmem:[#allocation9 + $0x20] sm:$0xff]
        %v3243 = vld [vmem:[#allocation9 + $0x28] sm:$0xff]
        %v3244 = vld [vmem:[#allocation9 + $0x30] sm:$0xff]
        %v3245 = vld [vmem:[#allocation9 + $0x38] sm:$0xff]
        %v3246 = vld [vmem:[#allocation9 + $0x40] sm:$0xff]
        %v3247 = vld [vmem:[#allocation9 + $0x48] sm:$0xff]
        %v3248 = vld [vmem:[#allocation9 + $0x50] sm:$0xff]
        %v3249 = vld [vmem:[#allocation9 + $0x58] sm:$0xff]
        %v3250 = vld [vmem:[#allocation9 + $0x60] sm:$0xff]
        %v3251 = vld [vmem:[#allocation9 + $0x68] sm:$0xff]
        %v3252 = vld [vmem:[#allocation9 + $0x70] sm:$0xff]
        %v3253 = vld [vmem:[#allocation9 + $0x78] sm:$0xff]
        %v3254 = vld [vmem:[%s11] sm:$0x1]
        %3255 = vmatpush.msra.mxu0 %v3253
        %3256 = vmatpush.msra.mxu0 %v3252
        %3257 = vmatpush.msra.mxu0 %v3251
        %3258 = vmatpush.msra.mxu0 %v3250
        %3259 = vmatpush.msra.mxu0 %v3249
        %3260 = vmatpush.msra.mxu0 %v3248
        %3261 = vmatpush.msra.mxu0 %v3247
        %3262 = vmatpush.msra.mxu0 %v3246
        %3263 = vmatpush.msra.mxu0 %v3245
        %3264 = vmatpush.msra.mxu0 %v3244
        %3265 = vmatpush.msra.mxu0 %v3243
        %3266 = vmatpush.msra.mxu0 %v3242
        %3267 = vmatpush.msra.mxu0 %v3241
        %3268 = vmatpush.msra.mxu0 %v3240
        %3269 = vmatpush.msra.mxu0 %v3239
        %3270 = vmatpush.msra.mxu0 %v3238
        %3271 = vmatmul.f32.gmra.mxu0 %v3236
        %v3272 = vpop.f32.mrf.mxu0
        %v3273 = vadd.f32 %v3254, %v3272
        %3274 = vdwg.mxu0
        %v3275 = vmax.f32 %v3273, 0.0
        %v3276 = vld [vmem:[#allocation11] sm:$0xff]
        %v3277 = vld [vmem:[#allocation11 + $0x8] sm:$0xff]
        %v3278 = vld [vmem:[#allocation11 + $0x10] sm:$0xff]
        %v3279 = vld [vmem:[#allocation11 + $0x18] sm:$0xff]
        %v3280 = vld [vmem:[#allocation11 + $0x20] sm:$0xff]
        %v3281 = vld [vmem:[#allocation11 + $0x28] sm:$0xff]
        %v3282 = vld [vmem:[#allocation11 + $0x30] sm:$0xff]
        %v3283 = vld [vmem:[#allocation11 + $0x38] sm:$0xff]
        %v3284 = vld [vmem:[#allocation11 + $0x40] sm:$0xff]
        %v3285 = vld [vmem:[#allocation11 + $0x48] sm:$0xff]
        %v3286 = vld [vmem:[#allocation11 + $0x50] sm:$0xff]
        %v3287 = vld [vmem:[#allocation11 + $0x58] sm:$0xff]
        %v3288 = vld [vmem:[#allocation11 + $0x60] sm:$0xff]
        %v3289 = vld [vmem:[#allocation11 + $0x68] sm:$0xff]
        %v3290 = vld [vmem:[#allocation11 + $0x70] sm:$0xff]
        %v3291 = vld [vmem:[#allocation11 + $0x78] sm:$0xff]
        %v3292 = vld [vmem:[%s13] sm:$0x1]
        %3293 = vmatpush.msra.mxu0 %v3291
        %3294 = vmatpush.msra.mxu0 %v3290
        %3295 = vmatpush.msra.mxu0 %v3289
        %3296 = vmatpush.msra.mxu0 %v3288
        %3297 = vmatpush.msra.mxu0 %v3287
        %3298 = vmatpush.msra.mxu0 %v3286
        %3299 = vmatpush.msra.mxu0 %v3285
        %3300 = vmatpush.msra.mxu0 %v3284
        %3301 = vmatpush.msra.mxu0 %v3283
        %3302 = vmatpush.msra.mxu0 %v3282
        %3303 = vmatpush.msra.mxu0 %v3281
        %3304 = vmatpush.msra.mxu0 %v3280
        %3305 = vmatpush.msra.mxu0 %v3279
        %3306 = vmatpush.msra.mxu0 %v3278
        %3307 = vmatpush.msra.mxu0 %v3277
        %3308 = vmatpush.msra.mxu0 %v3276
        %3309 = vmatmul.f32.gmra.mxu0 %v3275
        %v3310 = vpop.f32.mrf.mxu0
        %v3311 = vadd.f32 %v3292, %v3310
        %3312 = vdwg.mxu0
        %v3313 = vld [vmem:[#allocation12] sm:$0xff]
        %v3314 = vld [vmem:[#allocation12 + $0x8] sm:$0xff]
        %v3315 = vld [vmem:[#allocation12 + $0x10] sm:$0xff]
        %v3316 = vld [vmem:[#allocation12 + $0x18] sm:$0xff]
        %v3317 = vld [vmem:[#allocation12 + $0x20] sm:$0xff]
        %v3318 = vld [vmem:[#allocation12 + $0x28] sm:$0xff]
        %v3319 = vld [vmem:[#allocation12 + $0x30] sm:$0xff]
        %v3320 = vld [vmem:[#allocation12 + $0x38] sm:$0xff]
        %v3321 = vld [vmem:[#allocation12 + $0x40] sm:$0xff]
        %v3322 = vld [vmem:[#allocation12 + $0x48] sm:$0xff]
        %v3323 = vld [vmem:[#allocation12 + $0x50] sm:$0xff]
        %v3324 = vld [vmem:[#allocation12 + $0x58] sm:$0xff]
        %v3325 = vld [vmem:[#allocation12 + $0x60] sm:$0xff]
        %v3326 = vld [vmem:[#allocation12 + $0x68] sm:$0xff]
        %v3327 = vld [vmem:[#allocation12 + $0x70] sm:$0xff]
        %v3328 = vld [vmem:[#allocation12 + $0x78] sm:$0xff]
        %v3329 = vld [vmem:[%s15] sm:$0x1]
        %3330 = vmatpush.msra.mxu0 %v3328
        %3331 = vmatpush.msra.mxu0 %v3327
        %3332 = vmatpush.msra.mxu0 %v3326
        %3333 = vmatpush.msra.mxu0 %v3325
        %3334 = vmatpush.msra.mxu0 %v3324
        %3335 = vmatpush.msra.mxu0 %v3323
        %3336 = vmatpush.msra.mxu0 %v3322
        %3337 = vmatpush.msra.mxu0 %v3321
        %3338 = vmatpush.msra.mxu0 %v3320
        %3339 = vmatpush.msra.mxu0 %v3319
        %3340 = vmatpush.msra.mxu0 %v3318
        %3341 = vmatpush.msra.mxu0 %v3317
        %3342 = vmatpush.msra.mxu0 %v3316
        %3343 = vmatpush.msra.mxu0 %v3315
        %3344 = vmatpush.msra.mxu0 %v3314
        %3345 = vmatpush.msra.mxu0 %v3313
        %3346 = vmatmul.f32.gmra.mxu0 %v3311
        %v3347 = vpop.f32.mrf.mxu0
        %v3348 = vadd.f32 %v3329, %v3347
        %3349 = vdwg.mxu0
        %3350 = vst [vmem:[%s613] sm:$0x1] %v3348
        %s3351 = sand.u32 %s385, 1
        %s3352 = scalar_lea.sflag [#allocation5], %s3351
        %s3353 = sand.u32 %s385, 1
        %s3354 = scalar_lea.vmem [#allocation14], %s3353
        // Predicated region
        $region109: #{tpu_custom_call.1} parent=83 // pred_check
          %p3355 = pneg %p395
        $region110: #{tpu_custom_call.1} parent=83 // pred_check_branch
          %3357 = sbr.rel (%p3355) target = $region112
        $region111: #{tpu_custom_call.1} parent=83 // pred_region
          %3359 = vsyncadd %s3352, 0
          %s3360 = scalar_lea.hbm %s16, %s36
          %s3362 = sshll.u32 %s3354, 4
          %s3363 = int_to_ptr.vmem [resolvable:$true] %s3362
          %s3364 = sshll.u32 %s3360, 4
          %s3365 = int_to_ptr.hbm [resolvable:$true] %s3364
          %3367 = dma.vmem_to_hbm [thread:$0]  %s3363, 16, %s3365, %s3352
        $region112: #{tpu_custom_call.1} parent=83 // pred_fallthru
          _
      $region84: #{tpu_custom_call.1} parent=5 // pred_fallthru
        _
      %p3368 = scmp.le.s32.totalorder 2, %s31
      // Predicated region
      $region113: #{tpu_custom_call.1} parent=5 // pred_check
        %p3369 = pneg %p3368
      $region114: #{tpu_custom_call.1} parent=5 // pred_check_branch
        %3371 = sbr.rel (%p3369) target = $region116
      $region115: #{tpu_custom_call.1} parent=5 // pred_region
        %s3372 = ssub.s32 %s31, 2
        // Predicated region
        $region117: #{tpu_custom_call.1} parent=115 // pred_check
          %p3373 = pneg %p401
        $region118: #{tpu_custom_call.1} parent=115 // pred_check_branch
          %3375 = sbr.rel (%p3373) target = $region120
        $region119: #{tpu_custom_call.1} parent=115 // pred_region
          %s3376 = sand.u32 %s386, 1
          %s3377 = scalar_lea.sflag [#allocation5], %s3376
          %s3378 = sand.u32 %s386, 1
          %s3379 = scalar_lea.vmem [#allocation14], %s3378
          %3381 = dma.done %s3377, 16
        $region120: #{tpu_custom_call.1} parent=115 // pred_fallthru
          _
      $region116: #{tpu_custom_call.1} parent=5 // pred_fallthru
        _
    $region6: #{tpu_custom_call.1} parent=1 // loop_footer
      %s35 = sadd.s32 1, %s31
    $region7: #{tpu_custom_call.1} parent=1 // loop_footer_branch
      %30 = sbr.rel target = $region3
    $region8: #{tpu_custom_call.1} parent=1 // loop_exit
      _
    %3382 = vsyncpa [#allocation4], 1
    %s3383 = scalar_lea.sflag [#allocation4], 1
    %3384 = vsyncpa %s3383, 1
    %3385 = vsyncpa [#allocation7], 1
    %3386 = vsyncpa [#allocation10], 1
    %3387 = vsyncpa [#allocation13], 1
    %3388 = vsyncpa [#allocation5], 1
    %s3389 = scalar_lea.sflag [#allocation5], 1
    %3390 = vsyncpa %s3389, 1

</llo_original>
